<compile_context>
chip_gen: v5e
topology: v5e:2x2
jax: 0.10.0
libtpu: 0.0.40
codegen_flags: <defaults>
</compile_context>

<pallas_src>
import functools

import jax
import jax.numpy as jnp
from jax import lax
from jax.experimental import pallas as pl
from jax.experimental.pallas import tpu as pltpu


# Set to jnp.bfloat16 on v5e/v6e/v7x for large-N MXU throughput (elementwise
# math stays f32 either way); kept f32 here to preserve reference numerics at
# toy shapes.
MXU_DTYPE = jnp.float32

_LANE = 128
_SUB = 8


def _round_up(x, m):
    return ((x + m - 1) // m) * m


def _dot(a, b):
    """a @ b on the MXU; operands cast to MXU_DTYPE, f32 accumulation."""
    return jnp.dot(a.astype(MXU_DTYPE), b.astype(MXU_DTYPE),
                   preferred_element_type=jnp.float32)


def _dot_t(a, b):
    """a @ b^T without materializing the transpose (contract last dims)."""
    return lax.dot_general(a.astype(MXU_DTYPE), b.astype(MXU_DTYPE),
                           (((1,), (1,)), ((), ())),
                           preferred_element_type=jnp.float32)


def _spec(shape):
    n = len(shape)
    return pl.BlockSpec(shape, lambda: (0,) * n)


# --------------------------- parameter packing --------------------------------

def _pack_params(params):
    """Pack all parameter arrays into two row-concatenated, tile-padded f32
    slabs so the whole parameter set moves HBM->VMEM in 2 DMAs instead of ~50.

    Slab 0: 128 lanes (all arrays with cols <= 128).
    Slab 1: 512 lanes (the 500-wide attention-MLP arrays).

    Returns ((slab0, slab1), layout) where `layout` mirrors the params dict
    structure with static (slab_id, row_offset, rows, cols) tuples at leaves.
    """
    blocks = ([], [])
    offs = [0, 0]
    widths = (_LANE, 4 * _LANE)

    def visit(obj):
        if isinstance(obj, dict):
            return {k: visit(obj[k]) for k in sorted(obj)}
        a = jnp.asarray(obj, jnp.float32)
        assert a.ndim == 2, a.shape
        rows, cols = a.shape
        sid = 0 if cols <= widths[0] else 1
        assert cols <= widths[sid], (cols,)
        prows = _round_up(rows, _SUB)
        blk = jnp.zeros((prows, widths[sid]), jnp.float32)
        blk = blk.at[:rows, :cols].set(a)
        blocks[sid].append(blk)
        entry = (sid, offs[sid], rows, cols)
        offs[sid] += prows
        return entry

    layout = visit(params)
    slab0 = jnp.concatenate(blocks[0], axis=0)
    slab1 = jnp.concatenate(blocks[1], axis=0)
    return (slab0, slab1), layout


# ----------------------------- fused kernel ----------------------------------

def _dtfu_kernel(x_ref, adj_ref, slab0_ref, slab1_ref, dense_ref, apred_ref,
                 *, layout, sigma, v):
    slabs = (slab0_ref, slab1_ref)

    def param(entry):
        sid, r0, rows, cols = entry
        return slabs[sid][r0:r0 + rows, 0:cols]

    ae, g = layout["ae"], layout["gnn"]

    x = x_ref[...]
    adj = adj_ref[...]
    n = x.shape[0]

    # Diagonal mask built ONCE, shared by all three normalize() calls.
    diag = (lax.broadcasted_iota(jnp.int32, (n, n), 0)
            == lax.broadcasted_iota(jnp.int32, (n, n), 1))

    # ---- building blocks --------------------------------------------------
    def linear(xv, w, b, act="none"):
        y = _dot(xv, w) + b
        if act == "relu":
            y = jnp.maximum(y, 0.0)
        return y

    def lin_ae(xv, name, act="none"):
        return linear(xv, param(ae[name + "_w"]), param(ae[name + "_b"]), act)

    def gnn(xv, w, a, active=True):
        out = _dot(a, _dot(xv, w))
        return jnp.maximum(out, 0.0) if active else out

    def norm_adj(h):
        """adj1 = sigmoid(h h^T) + I, then symmetric normalize.

        sigmoid(h h^T)+I is symmetric so d[i]*a[i,j]*d[j]; rowsum >= 1 thanks
        to the +I, so rsqrt needs no isinf guard.
        """
        sig = jax.nn.sigmoid(_dot_t(h, h))
        a = jnp.where(diag, sig + 1.0, sig)
        d = lax.rsqrt(jnp.sum(sig, axis=1, keepdims=True) + 1.0)   # (n, 1)
        return d * a * jnp.transpose(d)

    def fuse(xv, kv, name):
        """FusionLayer.  The (N, 2F) concat never materializes
        (y @ W1 == x @ W1x + k @ W1k), and the 2-way row softmax is analytic:
        softmax([a,b]/T) = [sigmoid((a-b)/T), 1 - sigmoid((a-b)/T)]."""
        fp = layout[name]
        h = jnp.maximum(_dot(xv, param(fp["w1x"])) + _dot(kv, param(fp["w1k"]))
                        + param(fp["b1"]), 0.0)
        h = jnp.maximum(_dot(h, param(fp["w2"])) + param(fp["b2"]), 0.0)
        s = jax.nn.sigmoid(_dot(h, param(fp["w3"])) + param(fp["b3"]))   # (N, 2)
        d = (s[:, 0:1] - s[:, 1:2]) * (1.0 / 10.0)                       # T = 10
        w0 = jnp.mean(jax.nn.sigmoid(d), axis=0, keepdims=True)          # (1, 1)
        return w0 * xv + (1.0 - w0) * kv

    def softmax_rows(a):
        m = jnp.max(a, axis=1, keepdims=True)
        e = jnp.exp(a - m)
        return e / jnp.sum(e, axis=1, keepdims=True)

    # ---- AE ----------------------------------------------------------------
    e1 = lin_ae(x,  "enc1", "relu")
    e2 = lin_ae(e1, "enc2", "relu")
    e3 = lin_ae(e2, "enc3", "relu")
    z  = lin_ae(e3, "z")
    d1 = lin_ae(z,  "dec1", "relu")
    d2 = lin_ae(d1, "dec2", "relu")
    d3 = lin_ae(d2, "dec3", "relu")
    x_bar = lin_ae(d3, "xbar")
    del e2, e3, d3  # unused downstream (gnn_3/4/8 and fuse2/3/7 are not called)

    # ---- GNN + fusion path --------------------------------------------------
    h = gnn(x, param(g["w1"]), adj)
    h = fuse(h, e1, "fuse1")
    adj_mix = (1.0 - sigma) * norm_adj(h) + sigma * adj
    h = gnn(h, param(g["w2"]), adj_mix)
    h = fuse(h, z, "fuse4")
    adj_mix = (1.0 - sigma) * norm_adj(h) + sigma * adj
    h1 = gnn(h, param(g["w5"]), adj_mix, active=False)
    predict = softmax_rows(h1)
    h = gnn(h1, param(g["w6"]), adj_mix)
    h = fuse(h, d1, "fuse5")
    h = gnn(h, param(g["w7"]), adj_mix)
    h = fuse(h, d2, "fuse6")
    h = gnn(h, param(g["w9"]), adj_mix)
    A_pred = norm_adj(h)

    # ---- student-t soft assignment ------------------------------------------
    mu = param(layout["cluster"])
    zz = jnp.sum(z * z, axis=1, keepdims=True)              # (N, 1)
    mm = jnp.sum(mu * mu, axis=1, keepdims=True)            # (K, 1)
    dist2 = jnp.maximum(zz + jnp.transpose(mm) - 2.0 * _dot_t(z, mu), 0.0)
    q = 1.0 / (1.0 + dist2 * (1.0 / v))
    expo = (v + 1.0) / 2.0
    if expo != 1.0:
        if expo > 0.0 and float(expo) == float(int(expo)):
            qp = q
            for _ in range(int(expo) - 1):
                qp = qp * q
            q = qp
        else:
            q = jnp.exp(expo * jnp.log(q))   # q in (0, 1], safe
    q = q / jnp.sum(q, axis=1, keepdims=True)

    # ---- packed lane-dense(ish) output slab + A_pred -------------------------
    dense_ref[...] = jnp.concatenate([x_bar, q, predict, z], axis=1)
    apred_ref[...] = A_pred


def dtfu_forward(x, adj, params, v=1.0, sigma=0.5):
    # NOTE: in a training loop the packing below would be done once and the
    # slabs reused across steps; it is recomputed here for a self-contained run.
    (slab0, slab1), layout = _pack_params(params)

    n, n_input = x.shape
    n_clusters, n_z = params["cluster"].shape
    dense_cols = n_input + 2 * n_clusters + n_z

    kernel = functools.partial(_dtfu_kernel, layout=layout,
                               sigma=float(sigma), v=float(v))

    out_shape = (
        jax.ShapeDtypeStruct((n, dense_cols), jnp.float32),   # [x_bar | q | predict | z]
        jax.ShapeDtypeStruct((n, n), jnp.float32),            # A_pred
    )
    in_specs = [_spec(x.shape), _spec(adj.shape),
                _spec(slab0.shape), _spec(slab1.shape)]
    out_specs = tuple(_spec(s.shape) for s in out_shape)

    dense, a_pred = pl.pallas_call(
        kernel,
        out_shape=out_shape,
        in_specs=in_specs,
        out_specs=out_specs,
        compiler_params=pltpu.CompilerParams(
            vmem_limit_bytes=32 * 1024 * 1024),
    )(x, adj, slab0, slab1)

    c0 = n_input
    c1 = c0 + n_clusters
    c2 = c1 + n_clusters
    x_bar = dense[:, :c0]
    q = dense[:, c0:c1]
    predict = dense[:, c1:c2]
    z = dense[:, c2:]
    return x_bar, q, predict, z, a_pred


# ----------------------------- param init ------------------------------------

def _glorot(key, fan_in, fan_out):
    scale = (2.0 / (fan_in + fan_out)) ** 0.5
    return scale * jax.random.normal(key, (fan_in, fan_out), dtype=jnp.float32)


def make_params(key, dims):
    (n_input, n_enc_1, n_enc_2, n_enc_3,
     n_dec_1, n_dec_2, n_dec_3, n_z, n_clusters) = dims

    # forward path applies gnn_9 (n_dec_3 -> n_input) to n_dec_2-wide features
    # (gnn_8 / fuse7 are skipped in the original forward) -> latent shape
    # constraint of the reference model, kept as-is.
    assert n_dec_2 == n_dec_3, "DTFU forward requires n_dec_2 == n_dec_3"

    keys = iter(jax.random.split(key, 64))

    def lin(fi, fo):
        return _glorot(next(keys), fi, fo), jnp.zeros((1, fo), jnp.float32)

    ae = {}
    ae["enc1_w"], ae["enc1_b"] = lin(n_input, n_enc_1)
    ae["enc2_w"], ae["enc2_b"] = lin(n_enc_1, n_enc_2)
    ae["enc3_w"], ae["enc3_b"] = lin(n_enc_2, n_enc_3)
    ae["z_w"],    ae["z_b"]    = lin(n_enc_3, n_z)
    ae["dec1_w"], ae["dec1_b"] = lin(n_z, n_dec_1)
    ae["dec2_w"], ae["dec2_b"] = lin(n_dec_1, n_dec_2)
    ae["dec3_w"], ae["dec3_b"] = lin(n_dec_2, n_dec_3)
    ae["xbar_w"], ae["xbar_b"] = lin(n_dec_3, n_input)

    gnn = {
        "w1": _glorot(next(keys), n_input, n_enc_1),
        "w2": _glorot(next(keys), n_enc_1, n_z),
        "w5": _glorot(next(keys), n_z, n_clusters),
        "w6": _glorot(next(keys), n_clusters, n_dec_1),
        "w7": _glorot(next(keys), n_dec_1, n_dec_2),
        "w9": _glorot(next(keys), n_dec_3, n_input),
    }

    def fuse_params(last_dim, n_num=2):
        # First Linear of the attention MLP is stored split so the (N, 2F)
        # concat never materializes: y @ W1 == x @ W1x + k @ W1k.
        w1 = _glorot(next(keys), n_num * last_dim, 500)
        b1 = jnp.zeros((1, 500), jnp.float32)
        w2, b2 = lin(500, 100)
        w3, b3 = lin(100, n_num)
        return {"w1x": w1[:last_dim], "w1k": w1[last_dim:], "b1": b1,
                "w2": w2, "b2": b2, "w3": w3, "b3": b3}

    params = {
        "ae": ae,
        "gnn": gnn,
        "fuse1": fuse_params(n_enc_1),
        "fuse4": fuse_params(n_z),
        "fuse5": fuse_params(n_dec_1),
        "fuse6": fuse_params(n_dec_2),
        "cluster": _glorot(next(keys), n_clusters, n_z),
    }
    return params


# ----------------------------- main -------------------------------------------

if __name__ == "__main__":
    # small, forward-consistent shapes (forward requires n_dec_2 == n_dec_3)
    N = 8
    n_input, n_enc_1, n_enc_2, n_enc_3 = 16, 32, 32, 16
    n_dec_1, n_dec_2, n_dec_3 = 16, 32, 32
    n_z, n_clusters = 8, 4
    dims = (n_input, n_enc_1, n_enc_2, n_enc_3,
            n_dec_1, n_dec_2, n_dec_3, n_z, n_clusters)

    root = jax.random.PRNGKey(0)
    k_par, k_x, k_adj = jax.random.split(root, 3)

    params = make_params(k_par, dims)

    x = jax.random.normal(k_x, (N, n_input), dtype=jnp.float32)

    # deterministic symmetric, degree-normalized adjacency
    A = (jax.random.uniform(k_adj, (N, N)) > 0.5).astype(jnp.float32)
    A = jnp.maximum(A, A.T) + jnp.eye(N, dtype=jnp.float32)
    deg = A.sum(axis=1)
    dinv = 1.0 / jnp.sqrt(deg)
    adj = dinv[:, None] * A * dinv[None, :]

    x_bar, q, predict, z, A_pred = dtfu_forward(x, adj, params, v=1.0)
    for out in (x_bar, q, predict, z, A_pred):
        jax.block_until_ready(out)

    assert x_bar.shape == (N, n_input)
    assert q.shape == (N, n_clusters)
    assert predict.shape == (N, n_clusters)
    assert z.shape == (N, n_z)
    assert A_pred.shape == (N, N)
    for out in (x_bar, q, predict, z, A_pred):
        assert bool(jnp.all(jnp.isfinite(out)))
    print("KERNEL_OK")
</pallas_src>

<mosaic_0001>
module attributes {stable_mosaic.version = 11 : i64} {
  func.func @_dtfu_kernel(%arg0: memref<8x16xf32, #tpu.memory_space<vmem>>, %arg1: memref<8x8xf32, #tpu.memory_space<vmem>>, %arg2: memref<2864x128xf32, #tpu.memory_space<vmem>>, %arg3: memref<208x512xf32, #tpu.memory_space<vmem>>, %arg4: memref<8x32xf32, #tpu.memory_space<vmem>>, %arg5: memref<8x8xf32, #tpu.memory_space<vmem>>) attributes {dimension_semantics = [], scalar_prefetch = 0 : i64, scratch_operands = 0 : i64, tpu.core_type = #tpu.core_type<tc>} {
    %c0 = arith.constant 0 : index
    %c0_0 = arith.constant 0 : index
    %0 = vector.load %arg0[%c0, %c0_0] : memref<8x16xf32, #tpu.memory_space<vmem>>, vector<8x16xf32>
    %c0_1 = arith.constant 0 : index
    %c0_2 = arith.constant 0 : index
    %1 = vector.load %arg1[%c0_1, %c0_2] : memref<8x8xf32, #tpu.memory_space<vmem>>, vector<8x8xf32>
    %2 = tpu.iota {dimensions = array<i32: 0>} : vector<8x8xi32>
    %3 = tpu.iota {dimensions = array<i32: 1>} : vector<8x8xi32>
    %4 = arith.cmpi eq, %2, %3 : vector<8x8xi32>
    %c88 = arith.constant 88 : index
    %c0_3 = arith.constant 0 : index
    %5 = vector.load %arg2[%c88, %c0_3] : memref<2864x128xf32, #tpu.memory_space<vmem>>, vector<16x32xf32>
    %c80 = arith.constant 80 : index
    %c0_4 = arith.constant 0 : index
    %6 = vector.load %arg2[%c80, %c0_4] : memref<2864x128xf32, #tpu.memory_space<vmem>>, vector<1x32xf32>
    %cst = arith.constant dense<0.000000e+00> : vector<8x32xf32>
    %7 = tpu.matmul %0, %5, %cst {dimension_numbers = #tpu.dot_dimension_numbers<[1], [0], [0], [1], [0, 0, 1, 1], [], []>} : vector<8x16xf32>, vector<16x32xf32>, vector<8x32xf32> -> vector<8x32xf32>
    %8 = vector.broadcast %6 : vector<1x32xf32> to vector<8x32xf32>
    %9 = arith.addf %7, %8 : vector<8x32xf32>
    %cst_5 = arith.constant 0.000000e+00 : f32
    %10 = vector.broadcast %cst_5 : f32 to vector<8x32xf32>
    %11 = arith.maximumf %9, %10 : vector<8x32xf32>
    %c112 = arith.constant 112 : index
    %c0_6 = arith.constant 0 : index
    %12 = vector.load %arg2[%c112, %c0_6] : memref<2864x128xf32, #tpu.memory_space<vmem>>, vector<32x32xf32>
    %c104 = arith.constant 104 : index
    %c0_7 = arith.constant 0 : index
    %13 = vector.load %arg2[%c104, %c0_7] : memref<2864x128xf32, #tpu.memory_space<vmem>>, vector<1x32xf32>
    %cst_8 = arith.constant dense<0.000000e+00> : vector<8x32xf32>
    %14 = tpu.matmul %11, %12, %cst_8 {dimension_numbers = #tpu.dot_dimension_numbers<[1], [0], [0], [1], [0, 0, 1, 1], [], []>} : vector<8x32xf32>, vector<32x32xf32>, vector<8x32xf32> -> vector<8x32xf32>
    %15 = vector.broadcast %13 : vector<1x32xf32> to vector<8x32xf32>
    %16 = arith.addf %14, %15 : vector<8x32xf32>
    %cst_9 = arith.constant 0.000000e+00 : f32
    %17 = vector.broadcast %cst_9 : f32 to vector<8x32xf32>
    %18 = arith.maximumf %16, %17 : vector<8x32xf32>
    %c152 = arith.constant 152 : index
    %c0_10 = arith.constant 0 : index
    %19 = vector.load %arg2[%c152, %c0_10] : memref<2864x128xf32, #tpu.memory_space<vmem>>, vector<32x16xf32>
    %c144 = arith.constant 144 : index
    %c0_11 = arith.constant 0 : index
    %20 = vector.load %arg2[%c144, %c0_11] : memref<2864x128xf32, #tpu.memory_space<vmem>>, vector<1x16xf32>
    %cst_12 = arith.constant dense<0.000000e+00> : vector<8x16xf32>
    %21 = tpu.matmul %18, %19, %cst_12 {dimension_numbers = #tpu.dot_dimension_numbers<[1], [0], [0], [1], [0, 0, 1, 1], [], []>} : vector<8x32xf32>, vector<32x16xf32>, vector<8x16xf32> -> vector<8x16xf32>
    %22 = vector.broadcast %20 : vector<1x16xf32> to vector<8x16xf32>
    %23 = arith.addf %21, %22 : vector<8x16xf32>
    %cst_13 = arith.constant 0.000000e+00 : f32
    %24 = vector.broadcast %cst_13 : f32 to vector<8x16xf32>
    %25 = arith.maximumf %23, %24 : vector<8x16xf32>
    %c232 = arith.constant 232 : index
    %c0_14 = arith.constant 0 : index
    %26 = vector.load %arg2[%c232, %c0_14] : memref<2864x128xf32, #tpu.memory_space<vmem>>, vector<16x8xf32>
    %c224 = arith.constant 224 : index
    %c0_15 = arith.constant 0 : index
    %27 = vector.load %arg2[%c224, %c0_15] : memref<2864x128xf32, #tpu.memory_space<vmem>>, vector<1x8xf32>
    %cst_16 = arith.constant dense<0.000000e+00> : vector<8x8xf32>
    %28 = tpu.matmul %25, %26, %cst_16 {dimension_numbers = #tpu.dot_dimension_numbers<[1], [0], [0], [1], [0, 0, 1, 1], [], []>} : vector<8x16xf32>, vector<16x8xf32>, vector<8x8xf32> -> vector<8x8xf32>
    %29 = vector.broadcast %27 : vector<1x8xf32> to vector<8x8xf32>
    %30 = arith.addf %28, %29 : vector<8x8xf32>
    %c8 = arith.constant 8 : index
    %c0_17 = arith.constant 0 : index
    %31 = vector.load %arg2[%c8, %c0_17] : memref<2864x128xf32, #tpu.memory_space<vmem>>, vector<8x16xf32>
    %c0_18 = arith.constant 0 : index
    %c0_19 = arith.constant 0 : index
    %32 = vector.load %arg2[%c0_18, %c0_19] : memref<2864x128xf32, #tpu.memory_space<vmem>>, vector<1x16xf32>
    %cst_20 = arith.constant dense<0.000000e+00> : vector<8x16xf32>
    %33 = tpu.matmul %30, %31, %cst_20 {dimension_numbers = #tpu.dot_dimension_numbers<[1], [0], [0], [1], [0, 0, 1, 1], [], []>} : vector<8x8xf32>, vector<8x16xf32>, vector<8x16xf32> -> vector<8x16xf32>
    %34 = vector.broadcast %32 : vector<1x16xf32> to vector<8x16xf32>
    %35 = arith.addf %33, %34 : vector<8x16xf32>
    %cst_21 = arith.constant 0.000000e+00 : f32
    %36 = vector.broadcast %cst_21 : f32 to vector<8x16xf32>
    %37 = arith.maximumf %35, %36 : vector<8x16xf32>
    %c24 = arith.constant 24 : index
    %c0_22 = arith.constant 0 : index
    %38 = vector.load %arg2[%c24, %c0_22] : memref<2864x128xf32, #tpu.memory_space<vmem>>, vector<16x32xf32>
    %c16 = arith.constant 16 : index
    %c0_23 = arith.constant 0 : index
    %39 = vector.load %arg2[%c16, %c0_23] : memref<2864x128xf32, #tpu.memory_space<vmem>>, vector<1x32xf32>
    %cst_24 = arith.constant dense<0.000000e+00> : vector<8x32xf32>
    %40 = tpu.matmul %37, %38, %cst_24 {dimension_numbers = #tpu.dot_dimension_numbers<[1], [0], [0], [1], [0, 0, 1, 1], [], []>} : vector<8x16xf32>, vector<16x32xf32>, vector<8x32xf32> -> vector<8x32xf32>
    %41 = vector.broadcast %39 : vector<1x32xf32> to vector<8x32xf32>
    %42 = arith.addf %40, %41 : vector<8x32xf32>
    %cst_25 = arith.constant 0.000000e+00 : f32
    %43 = vector.broadcast %cst_25 : f32 to vector<8x32xf32>
    %44 = arith.maximumf %42, %43 : vector<8x32xf32>
    %c48 = arith.constant 48 : index
    %c0_26 = arith.constant 0 : index
    %45 = vector.load %arg2[%c48, %c0_26] : memref<2864x128xf32, #tpu.memory_space<vmem>>, vector<32x32xf32>
    %c40 = arith.constant 40 : index
    %c0_27 = arith.constant 0 : index
    %46 = vector.load %arg2[%c40, %c0_27] : memref<2864x128xf32, #tpu.memory_space<vmem>>, vector<1x32xf32>
    %cst_28 = arith.constant dense<0.000000e+00> : vector<8x32xf32>
    %47 = tpu.matmul %44, %45, %cst_28 {dimension_numbers = #tpu.dot_dimension_numbers<[1], [0], [0], [1], [0, 0, 1, 1], [], []>} : vector<8x32xf32>, vector<32x32xf32>, vector<8x32xf32> -> vector<8x32xf32>
    %48 = vector.broadcast %46 : vector<1x32xf32> to vector<8x32xf32>
    %49 = arith.addf %47, %48 : vector<8x32xf32>
    %cst_29 = arith.constant 0.000000e+00 : f32
    %50 = vector.broadcast %cst_29 : f32 to vector<8x32xf32>
    %51 = arith.maximumf %49, %50 : vector<8x32xf32>
    %c192 = arith.constant 192 : index
    %c0_30 = arith.constant 0 : index
    %52 = vector.load %arg2[%c192, %c0_30] : memref<2864x128xf32, #tpu.memory_space<vmem>>, vector<32x16xf32>
    %c184 = arith.constant 184 : index
    %c0_31 = arith.constant 0 : index
    %53 = vector.load %arg2[%c184, %c0_31] : memref<2864x128xf32, #tpu.memory_space<vmem>>, vector<1x16xf32>
    %cst_32 = arith.constant dense<0.000000e+00> : vector<8x16xf32>
    %54 = tpu.matmul %51, %52, %cst_32 {dimension_numbers = #tpu.dot_dimension_numbers<[1], [0], [0], [1], [0, 0, 1, 1], [], []>} : vector<8x32xf32>, vector<32x16xf32>, vector<8x16xf32> -> vector<8x16xf32>
    %55 = vector.broadcast %53 : vector<1x16xf32> to vector<8x16xf32>
    %56 = arith.addf %54, %55 : vector<8x16xf32>
    %c2752 = arith.constant 2752 : index
    %c0_33 = arith.constant 0 : index
    %57 = vector.load %arg2[%c2752, %c0_33] : memref<2864x128xf32, #tpu.memory_space<vmem>>, vector<16x32xf32>
    %cst_34 = arith.constant dense<0.000000e+00> : vector<8x32xf32>
    %58 = tpu.matmul %0, %57, %cst_34 {dimension_numbers = #tpu.dot_dimension_numbers<[1], [0], [0], [1], [0, 0, 1, 1], [], []>} : vector<8x16xf32>, vector<16x32xf32>, vector<8x32xf32> -> vector<8x32xf32>
    %cst_35 = arith.constant dense<0.000000e+00> : vector<8x32xf32>
    %59 = tpu.matmul %1, %58, %cst_35 {dimension_numbers = #tpu.dot_dimension_numbers<[1], [0], [0], [1], [0, 0, 1, 1], [], []>} : vector<8x8xf32>, vector<8x32xf32>, vector<8x32xf32> -> vector<8x32xf32>
    %cst_36 = arith.constant 0.000000e+00 : f32
    %60 = vector.broadcast %cst_36 : f32 to vector<8x32xf32>
    %61 = arith.maximumf %59, %60 : vector<8x32xf32>
    %c40_37 = arith.constant 40 : index
    %c0_38 = arith.constant 0 : index
    %62 = vector.load %arg3[%c40_37, %c0_38] : memref<208x512xf32, #tpu.memory_space<vmem>>, vector<32x500xf32>
    %cst_39 = arith.constant dense<0.000000e+00> : vector<8x500xf32>
    %63 = tpu.matmul %61, %62, %cst_39 {dimension_numbers = #tpu.dot_dimension_numbers<[1], [0], [0], [1], [0, 0, 1, 1], [], []>} : vector<8x32xf32>, vector<32x500xf32>, vector<8x500xf32> -> vector<8x500xf32>
    %c8_40 = arith.constant 8 : index
    %c0_41 = arith.constant 0 : index
    %64 = vector.load %arg3[%c8_40, %c0_41] : memref<208x512xf32, #tpu.memory_space<vmem>>, vector<32x500xf32>
    %cst_42 = arith.constant dense<0.000000e+00> : vector<8x500xf32>
    %65 = tpu.matmul %11, %64, %cst_42 {dimension_numbers = #tpu.dot_dimension_numbers<[1], [0], [0], [1], [0, 0, 1, 1], [], []>} : vector<8x32xf32>, vector<32x500xf32>, vector<8x500xf32> -> vector<8x500xf32>
    %66 = arith.addf %63, %65 : vector<8x500xf32>
    %c0_43 = arith.constant 0 : index
    %c0_44 = arith.constant 0 : index
    %67 = vector.load %arg3[%c0_43, %c0_44] : memref<208x512xf32, #tpu.memory_space<vmem>>, vector<1x500xf32>
    %68 = vector.broadcast %67 : vector<1x500xf32> to vector<8x500xf32>
    %69 = arith.addf %66, %68 : vector<8x500xf32>
    %cst_45 = arith.constant 0.000000e+00 : f32
    %70 = vector.broadcast %cst_45 : f32 to vector<8x500xf32>
    %71 = arith.maximumf %69, %70 : vector<8x500xf32>
    %c272 = arith.constant 272 : index
    %c0_46 = arith.constant 0 : index
    %72 = vector.load %arg2[%c272, %c0_46] : memref<2864x128xf32, #tpu.memory_space<vmem>>, vector<500x100xf32>
    %cst_47 = arith.constant dense<0.000000e+00> : vector<8x100xf32>
    %73 = tpu.matmul %71, %72, %cst_47 {dimension_numbers = #tpu.dot_dimension_numbers<[1], [0], [0], [1], [0, 0, 1, 1], [], []>} : vector<8x500xf32>, vector<500x100xf32>, vector<8x100xf32> -> vector<8x100xf32>
    %c256 = arith.constant 256 : index
    %c0_48 = arith.constant 0 : index
    %74 = vector.load %arg2[%c256, %c0_48] : memref<2864x128xf32, #tpu.memory_space<vmem>>, vector<1x100xf32>
    %75 = vector.broadcast %74 : vector<1x100xf32> to vector<8x100xf32>
    %76 = arith.addf %73, %75 : vector<8x100xf32>
    %cst_49 = arith.constant 0.000000e+00 : f32
    %77 = vector.broadcast %cst_49 : f32 to vector<8x100xf32>
    %78 = arith.maximumf %76, %77 : vector<8x100xf32>
    %c776 = arith.constant 776 : index
    %c0_50 = arith.constant 0 : index
    %79 = vector.load %arg2[%c776, %c0_50] : memref<2864x128xf32, #tpu.memory_space<vmem>>, vector<100x2xf32>
    %cst_51 = arith.constant dense<0.000000e+00> : vector<8x2xf32>
    %80 = tpu.matmul %78, %79, %cst_51 {dimension_numbers = #tpu.dot_dimension_numbers<[1], [0], [0], [1], [0, 0, 1, 1], [], []>} : vector<8x100xf32>, vector<100x2xf32>, vector<8x2xf32> -> vector<8x2xf32>
    %c264 = arith.constant 264 : index
    %c0_52 = arith.constant 0 : index
    %81 = vector.load %arg2[%c264, %c0_52] : memref<2864x128xf32, #tpu.memory_space<vmem>>, vector<1x2xf32>
    %82 = vector.broadcast %81 : vector<1x2xf32> to vector<8x2xf32>
    %83 = arith.addf %80, %82 : vector<8x2xf32>
    %84 = arith.negf %83 : vector<8x2xf32>
    %85 = math.exp %84 : vector<8x2xf32>
    %cst_53 = arith.constant 1.000000e+00 : f32
    %86 = vector.broadcast %cst_53 : f32 to vector<8x2xf32>
    %87 = arith.addf %86, %85 : vector<8x2xf32>
    %88 = arith.divf %86, %87 : vector<8x2xf32>
    %89 = vector.extract_strided_slice %88 {offsets = [0, 0], sizes = [8, 1], strides = [1, 1]} : vector<8x2xf32> to vector<8x1xf32>
    %90 = vector.extract_strided_slice %88 {offsets = [0, 1], sizes = [8, 1], strides = [1, 1]} : vector<8x2xf32> to vector<8x1xf32>
    %91 = arith.subf %89, %90 : vector<8x1xf32>
    %cst_54 = arith.constant 1.000000e-01 : f32
    %92 = vector.broadcast %cst_54 : f32 to vector<8x1xf32>
    %93 = arith.mulf %91, %92 : vector<8x1xf32>
    %94 = arith.negf %93 : vector<8x1xf32>
    %95 = math.exp %94 : vector<8x1xf32>
    %cst_55 = arith.constant 1.000000e+00 : f32
    %96 = vector.broadcast %cst_55 : f32 to vector<8x1xf32>
    %97 = arith.addf %96, %95 : vector<8x1xf32>
    %98 = arith.divf %96, %97 : vector<8x1xf32>
    %cst_56 = arith.constant dense<0.000000e+00> : vector<1xf32>
    %99 = vector.multi_reduction <add>, %98, %cst_56 [0] : vector<8x1xf32> to vector<1xf32>
    %100 = vector.shape_cast %99 : vector<1xf32> to vector<1x1xf32>
    %cst_57 = arith.constant 8.000000e+00 : f32
    %101 = vector.broadcast %cst_57 : f32 to vector<1x1xf32>
    %102 = arith.divf %100, %101 : vector<1x1xf32>
    %103 = vector.broadcast %102 : vector<1x1xf32> to vector<8x32xf32>
    %104 = arith.mulf %103, %61 : vector<8x32xf32>
    %cst_58 = arith.constant 1.000000e+00 : f32
    %105 = vector.broadcast %cst_58 : f32 to vector<1x1xf32>
    %106 = arith.subf %105, %102 : vector<1x1xf32>
    %107 = vector.broadcast %106 : vector<1x1xf32> to vector<8x32xf32>
    %108 = arith.mulf %107, %11 : vector<8x32xf32>
    %109 = arith.addf %104, %108 : vector<8x32xf32>
    %cst_59 = arith.constant dense<0.000000e+00> : vector<8x8xf32>
    %110 = tpu.matmul %109, %109, %cst_59 {dimension_numbers = #tpu.dot_dimension_numbers<[1], [1], [0], [0], [0, 0, 1, 0], [], []>} : vector<8x32xf32>, vector<8x32xf32>, vector<8x8xf32> -> vector<8x8xf32>
    %111 = arith.negf %110 : vector<8x8xf32>
    %112 = math.exp %111 : vector<8x8xf32>
    %cst_60 = arith.constant 1.000000e+00 : f32
    %113 = vector.broadcast %cst_60 : f32 to vector<8x8xf32>
    %114 = arith.addf %113, %112 : vector<8x8xf32>
    %115 = arith.divf %113, %114 : vector<8x8xf32>
    %cst_61 = arith.constant 1.000000e+00 : f32
    %116 = vector.broadcast %cst_61 : f32 to vector<8x8xf32>
    %117 = arith.addf %115, %116 : vector<8x8xf32>
    %118 = arith.select %4, %117, %115 : vector<8x8xi1>, vector<8x8xf32>
    %cst_62 = arith.constant dense<0.000000e+00> : vector<8xf32>
    %119 = vector.multi_reduction <add>, %115, %cst_62 [1] : vector<8x8xf32> to vector<8xf32>
    %120 = vector.shape_cast %119 : vector<8xf32> to vector<8x1xf32>
    %cst_63 = arith.constant 1.000000e+00 : f32
    %121 = vector.broadcast %cst_63 : f32 to vector<8x1xf32>
    %122 = arith.addf %120, %121 : vector<8x1xf32>
    %123 = math.rsqrt %122 : vector<8x1xf32>
    %124 = vector.broadcast %123 : vector<8x1xf32> to vector<8x8xf32>
    %125 = arith.mulf %124, %118 : vector<8x8xf32>
    %126 = tpu.transpose %123, [1, 0] : vector<8x1xf32> -> vector<1x8xf32>
    %127 = vector.broadcast %126 : vector<1x8xf32> to vector<8x8xf32>
    %128 = arith.mulf %125, %127 : vector<8x8xf32>
    %cst_64 = arith.constant 5.000000e-01 : f32
    %129 = vector.broadcast %cst_64 : f32 to vector<8x8xf32>
    %130 = arith.mulf %129, %128 : vector<8x8xf32>
    %cst_65 = arith.constant 5.000000e-01 : f32
    %131 = vector.broadcast %cst_65 : f32 to vector<8x8xf32>
    %132 = arith.mulf %131, %1 : vector<8x8xf32>
    %133 = arith.addf %130, %132 : vector<8x8xf32>
    %c2768 = arith.constant 2768 : index
    %c0_66 = arith.constant 0 : index
    %134 = vector.load %arg2[%c2768, %c0_66] : memref<2864x128xf32, #tpu.memory_space<vmem>>, vector<32x8xf32>
    %cst_67 = arith.constant dense<0.000000e+00> : vector<8x8xf32>
    %135 = tpu.matmul %109, %134, %cst_67 {dimension_numbers = #tpu.dot_dimension_numbers<[1], [0], [0], [1], [0, 0, 1, 1], [], []>} : vector<8x32xf32>, vector<32x8xf32>, vector<8x8xf32> -> vector<8x8xf32>
    %cst_68 = arith.constant dense<0.000000e+00> : vector<8x8xf32>
    %136 = tpu.matmul %133, %135, %cst_68 {dimension_numbers = #tpu.dot_dimension_numbers<[1], [0], [0], [1], [0, 0, 1, 1], [], []>} : vector<8x8xf32>, vector<8x8xf32>, vector<8x8xf32> -> vector<8x8xf32>
    %cst_69 = arith.constant 0.000000e+00 : f32
    %137 = vector.broadcast %cst_69 : f32 to vector<8x8xf32>
    %138 = arith.maximumf %136, %137 : vector<8x8xf32>
    %c88_70 = arith.constant 88 : index
    %c0_71 = arith.constant 0 : index
    %139 = vector.load %arg3[%c88_70, %c0_71] : memref<208x512xf32, #tpu.memory_space<vmem>>, vector<8x500xf32>
    %cst_72 = arith.constant dense<0.000000e+00> : vector<8x500xf32>
    %140 = tpu.matmul %138, %139, %cst_72 {dimension_numbers = #tpu.dot_dimension_numbers<[1], [0], [0], [1], [0, 0, 1, 1], [], []>} : vector<8x8xf32>, vector<8x500xf32>, vector<8x500xf32> -> vector<8x500xf32>
    %c80_73 = arith.constant 80 : index
    %c0_74 = arith.constant 0 : index
    %141 = vector.load %arg3[%c80_73, %c0_74] : memref<208x512xf32, #tpu.memory_space<vmem>>, vector<8x500xf32>
    %cst_75 = arith.constant dense<0.000000e+00> : vector<8x500xf32>
    %142 = tpu.matmul %30, %141, %cst_75 {dimension_numbers = #tpu.dot_dimension_numbers<[1], [0], [0], [1], [0, 0, 1, 1], [], []>} : vector<8x8xf32>, vector<8x500xf32>, vector<8x500xf32> -> vector<8x500xf32>
    %143 = arith.addf %140, %142 : vector<8x500xf32>
    %c72 = arith.constant 72 : index
    %c0_76 = arith.constant 0 : index
    %144 = vector.load %arg3[%c72, %c0_76] : memref<208x512xf32, #tpu.memory_space<vmem>>, vector<1x500xf32>
    %145 = vector.broadcast %144 : vector<1x500xf32> to vector<8x500xf32>
    %146 = arith.addf %143, %145 : vector<8x500xf32>
    %cst_77 = arith.constant 0.000000e+00 : f32
    %147 = vector.broadcast %cst_77 : f32 to vector<8x500xf32>
    %148 = arith.maximumf %146, %147 : vector<8x500xf32>
    %c896 = arith.constant 896 : index
    %c0_78 = arith.constant 0 : index
    %149 = vector.load %arg2[%c896, %c0_78] : memref<2864x128xf32, #tpu.memory_space<vmem>>, vector<500x100xf32>
    %cst_79 = arith.constant dense<0.000000e+00> : vector<8x100xf32>
    %150 = tpu.matmul %148, %149, %cst_79 {dimension_numbers = #tpu.dot_dimension_numbers<[1], [0], [0], [1], [0, 0, 1, 1], [], []>} : vector<8x500xf32>, vector<500x100xf32>, vector<8x100xf32> -> vector<8x100xf32>
    %c880 = arith.constant 880 : index
    %c0_80 = arith.constant 0 : index
    %151 = vector.load %arg2[%c880, %c0_80] : memref<2864x128xf32, #tpu.memory_space<vmem>>, vector<1x100xf32>
    %152 = vector.broadcast %151 : vector<1x100xf32> to vector<8x100xf32>
    %153 = arith.addf %150, %152 : vector<8x100xf32>
    %cst_81 = arith.constant 0.000000e+00 : f32
    %154 = vector.broadcast %cst_81 : f32 to vector<8x100xf32>
    %155 = arith.maximumf %153, %154 : vector<8x100xf32>
    %c1400 = arith.constant 1400 : index
    %c0_82 = arith.constant 0 : index
    %156 = vector.load %arg2[%c1400, %c0_82] : memref<2864x128xf32, #tpu.memory_space<vmem>>, vector<100x2xf32>
    %cst_83 = arith.constant dense<0.000000e+00> : vector<8x2xf32>
    %157 = tpu.matmul %155, %156, %cst_83 {dimension_numbers = #tpu.dot_dimension_numbers<[1], [0], [0], [1], [0, 0, 1, 1], [], []>} : vector<8x100xf32>, vector<100x2xf32>, vector<8x2xf32> -> vector<8x2xf32>
    %c888 = arith.constant 888 : index
    %c0_84 = arith.constant 0 : index
    %158 = vector.load %arg2[%c888, %c0_84] : memref<2864x128xf32, #tpu.memory_space<vmem>>, vector<1x2xf32>
    %159 = vector.broadcast %158 : vector<1x2xf32> to vector<8x2xf32>
    %160 = arith.addf %157, %159 : vector<8x2xf32>
    %161 = arith.negf %160 : vector<8x2xf32>
    %162 = math.exp %161 : vector<8x2xf32>
    %cst_85 = arith.constant 1.000000e+00 : f32
    %163 = vector.broadcast %cst_85 : f32 to vector<8x2xf32>
    %164 = arith.addf %163, %162 : vector<8x2xf32>
    %165 = arith.divf %163, %164 : vector<8x2xf32>
    %166 = vector.extract_strided_slice %165 {offsets = [0, 0], sizes = [8, 1], strides = [1, 1]} : vector<8x2xf32> to vector<8x1xf32>
    %167 = vector.extract_strided_slice %165 {offsets = [0, 1], sizes = [8, 1], strides = [1, 1]} : vector<8x2xf32> to vector<8x1xf32>
    %168 = arith.subf %166, %167 : vector<8x1xf32>
    %cst_86 = arith.constant 1.000000e-01 : f32
    %169 = vector.broadcast %cst_86 : f32 to vector<8x1xf32>
    %170 = arith.mulf %168, %169 : vector<8x1xf32>
    %171 = arith.negf %170 : vector<8x1xf32>
    %172 = math.exp %171 : vector<8x1xf32>
    %cst_87 = arith.constant 1.000000e+00 : f32
    %173 = vector.broadcast %cst_87 : f32 to vector<8x1xf32>
    %174 = arith.addf %173, %172 : vector<8x1xf32>
    %175 = arith.divf %173, %174 : vector<8x1xf32>
    %cst_88 = arith.constant dense<0.000000e+00> : vector<1xf32>
    %176 = vector.multi_reduction <add>, %175, %cst_88 [0] : vector<8x1xf32> to vector<1xf32>
    %177 = vector.shape_cast %176 : vector<1xf32> to vector<1x1xf32>
    %cst_89 = arith.constant 8.000000e+00 : f32
    %178 = vector.broadcast %cst_89 : f32 to vector<1x1xf32>
    %179 = arith.divf %177, %178 : vector<1x1xf32>
    %180 = vector.broadcast %179 : vector<1x1xf32> to vector<8x8xf32>
    %181 = arith.mulf %180, %138 : vector<8x8xf32>
    %cst_90 = arith.constant 1.000000e+00 : f32
    %182 = vector.broadcast %cst_90 : f32 to vector<1x1xf32>
    %183 = arith.subf %182, %179 : vector<1x1xf32>
    %184 = vector.broadcast %183 : vector<1x1xf32> to vector<8x8xf32>
    %185 = arith.mulf %184, %30 : vector<8x8xf32>
    %186 = arith.addf %181, %185 : vector<8x8xf32>
    %cst_91 = arith.constant dense<0.000000e+00> : vector<8x8xf32>
    %187 = tpu.matmul %186, %186, %cst_91 {dimension_numbers = #tpu.dot_dimension_numbers<[1], [1], [0], [0], [0, 0, 1, 0], [], []>} : vector<8x8xf32>, vector<8x8xf32>, vector<8x8xf32> -> vector<8x8xf32>
    %188 = arith.negf %187 : vector<8x8xf32>
    %189 = math.exp %188 : vector<8x8xf32>
    %cst_92 = arith.constant 1.000000e+00 : f32
    %190 = vector.broadcast %cst_92 : f32 to vector<8x8xf32>
    %191 = arith.addf %190, %189 : vector<8x8xf32>
    %192 = arith.divf %190, %191 : vector<8x8xf32>
    %cst_93 = arith.constant 1.000000e+00 : f32
    %193 = vector.broadcast %cst_93 : f32 to vector<8x8xf32>
    %194 = arith.addf %192, %193 : vector<8x8xf32>
    %195 = arith.select %4, %194, %192 : vector<8x8xi1>, vector<8x8xf32>
    %cst_94 = arith.constant dense<0.000000e+00> : vector<8xf32>
    %196 = vector.multi_reduction <add>, %192, %cst_94 [1] : vector<8x8xf32> to vector<8xf32>
    %197 = vector.shape_cast %196 : vector<8xf32> to vector<8x1xf32>
    %cst_95 = arith.constant 1.000000e+00 : f32
    %198 = vector.broadcast %cst_95 : f32 to vector<8x1xf32>
    %199 = arith.addf %197, %198 : vector<8x1xf32>
    %200 = math.rsqrt %199 : vector<8x1xf32>
    %201 = vector.broadcast %200 : vector<8x1xf32> to vector<8x8xf32>
    %202 = arith.mulf %201, %195 : vector<8x8xf32>
    %203 = tpu.transpose %200, [1, 0] : vector<8x1xf32> -> vector<1x8xf32>
    %204 = vector.broadcast %203 : vector<1x8xf32> to vector<8x8xf32>
    %205 = arith.mulf %202, %204 : vector<8x8xf32>
    %cst_96 = arith.constant 5.000000e-01 : f32
    %206 = vector.broadcast %cst_96 : f32 to vector<8x8xf32>
    %207 = arith.mulf %206, %205 : vector<8x8xf32>
    %cst_97 = arith.constant 5.000000e-01 : f32
    %208 = vector.broadcast %cst_97 : f32 to vector<8x8xf32>
    %209 = arith.mulf %208, %1 : vector<8x8xf32>
    %210 = arith.addf %207, %209 : vector<8x8xf32>
    %c2800 = arith.constant 2800 : index
    %c0_98 = arith.constant 0 : index
    %211 = vector.load %arg2[%c2800, %c0_98] : memref<2864x128xf32, #tpu.memory_space<vmem>>, vector<8x4xf32>
    %cst_99 = arith.constant dense<0.000000e+00> : vector<8x4xf32>
    %212 = tpu.matmul %186, %211, %cst_99 {dimension_numbers = #tpu.dot_dimension_numbers<[1], [0], [0], [1], [0, 0, 1, 1], [], []>} : vector<8x8xf32>, vector<8x4xf32>, vector<8x4xf32> -> vector<8x4xf32>
    %cst_100 = arith.constant dense<0.000000e+00> : vector<8x4xf32>
    %213 = tpu.matmul %210, %212, %cst_100 {dimension_numbers = #tpu.dot_dimension_numbers<[1], [0], [0], [1], [0, 0, 1, 1], [], []>} : vector<8x8xf32>, vector<8x4xf32>, vector<8x4xf32> -> vector<8x4xf32>
    %cst_101 = arith.constant dense<0xFF800000> : vector<8xf32>
    %214 = vector.multi_reduction <maximumf>, %213, %cst_101 [1] : vector<8x4xf32> to vector<8xf32>
    %215 = vector.shape_cast %214 : vector<8xf32> to vector<8x1xf32>
    %216 = vector.broadcast %215 : vector<8x1xf32> to vector<8x4xf32>
    %217 = arith.subf %213, %216 : vector<8x4xf32>
    %218 = math.exp %217 : vector<8x4xf32>
    %cst_102 = arith.constant dense<0.000000e+00> : vector<8xf32>
    %219 = vector.multi_reduction <add>, %218, %cst_102 [1] : vector<8x4xf32> to vector<8xf32>
    %220 = vector.shape_cast %219 : vector<8xf32> to vector<8x1xf32>
    %221 = vector.broadcast %220 : vector<8x1xf32> to vector<8x4xf32>
    %222 = arith.divf %218, %221 : vector<8x4xf32>
    %c2808 = arith.constant 2808 : index
    %c0_103 = arith.constant 0 : index
    %223 = vector.load %arg2[%c2808, %c0_103] : memref<2864x128xf32, #tpu.memory_space<vmem>>, vector<4x16xf32>
    %cst_104 = arith.constant dense<0.000000e+00> : vector<8x16xf32>
    %224 = tpu.matmul %213, %223, %cst_104 {dimension_numbers = #tpu.dot_dimension_numbers<[1], [0], [0], [1], [0, 0, 1, 1], [], []>} : vector<8x4xf32>, vector<4x16xf32>, vector<8x16xf32> -> vector<8x16xf32>
    %cst_105 = arith.constant dense<0.000000e+00> : vector<8x16xf32>
    %225 = tpu.matmul %210, %224, %cst_105 {dimension_numbers = #tpu.dot_dimension_numbers<[1], [0], [0], [1], [0, 0, 1, 1], [], []>} : vector<8x8xf32>, vector<8x16xf32>, vector<8x16xf32> -> vector<8x16xf32>
    %cst_106 = arith.constant 0.000000e+00 : f32
    %226 = vector.broadcast %cst_106 : f32 to vector<8x16xf32>
    %227 = arith.maximumf %225, %226 : vector<8x16xf32>
    %c120 = arith.constant 120 : index
    %c0_107 = arith.constant 0 : index
    %228 = vector.load %arg3[%c120, %c0_107] : memref<208x512xf32, #tpu.memory_space<vmem>>, vector<16x500xf32>
    %cst_108 = arith.constant dense<0.000000e+00> : vector<8x500xf32>
    %229 = tpu.matmul %227, %228, %cst_108 {dimension_numbers = #tpu.dot_dimension_numbers<[1], [0], [0], [1], [0, 0, 1, 1], [], []>} : vector<8x16xf32>, vector<16x500xf32>, vector<8x500xf32> -> vector<8x500xf32>
    %c104_109 = arith.constant 104 : index
    %c0_110 = arith.constant 0 : index
    %230 = vector.load %arg3[%c104_109, %c0_110] : memref<208x512xf32, #tpu.memory_space<vmem>>, vector<16x500xf32>
    %cst_111 = arith.constant dense<0.000000e+00> : vector<8x500xf32>
    %231 = tpu.matmul %37, %230, %cst_111 {dimension_numbers = #tpu.dot_dimension_numbers<[1], [0], [0], [1], [0, 0, 1, 1], [], []>} : vector<8x16xf32>, vector<16x500xf32>, vector<8x500xf32> -> vector<8x500xf32>
    %232 = arith.addf %229, %231 : vector<8x500xf32>
    %c96 = arith.constant 96 : index
    %c0_112 = arith.constant 0 : index
    %233 = vector.load %arg3[%c96, %c0_112] : memref<208x512xf32, #tpu.memory_space<vmem>>, vector<1x500xf32>
    %234 = vector.broadcast %233 : vector<1x500xf32> to vector<8x500xf32>
    %235 = arith.addf %232, %234 : vector<8x500xf32>
    %cst_113 = arith.constant 0.000000e+00 : f32
    %236 = vector.broadcast %cst_113 : f32 to vector<8x500xf32>
    %237 = arith.maximumf %235, %236 : vector<8x500xf32>
    %c1520 = arith.constant 1520 : index
    %c0_114 = arith.constant 0 : index
    %238 = vector.load %arg2[%c1520, %c0_114] : memref<2864x128xf32, #tpu.memory_space<vmem>>, vector<500x100xf32>
    %cst_115 = arith.constant dense<0.000000e+00> : vector<8x100xf32>
    %239 = tpu.matmul %237, %238, %cst_115 {dimension_numbers = #tpu.dot_dimension_numbers<[1], [0], [0], [1], [0, 0, 1, 1], [], []>} : vector<8x500xf32>, vector<500x100xf32>, vector<8x100xf32> -> vector<8x100xf32>
    %c1504 = arith.constant 1504 : index
    %c0_116 = arith.constant 0 : index
    %240 = vector.load %arg2[%c1504, %c0_116] : memref<2864x128xf32, #tpu.memory_space<vmem>>, vector<1x100xf32>
    %241 = vector.broadcast %240 : vector<1x100xf32> to vector<8x100xf32>
    %242 = arith.addf %239, %241 : vector<8x100xf32>
    %cst_117 = arith.constant 0.000000e+00 : f32
    %243 = vector.broadcast %cst_117 : f32 to vector<8x100xf32>
    %244 = arith.maximumf %242, %243 : vector<8x100xf32>
    %c2024 = arith.constant 2024 : index
    %c0_118 = arith.constant 0 : index
    %245 = vector.load %arg2[%c2024, %c0_118] : memref<2864x128xf32, #tpu.memory_space<vmem>>, vector<100x2xf32>
    %cst_119 = arith.constant dense<0.000000e+00> : vector<8x2xf32>
    %246 = tpu.matmul %244, %245, %cst_119 {dimension_numbers = #tpu.dot_dimension_numbers<[1], [0], [0], [1], [0, 0, 1, 1], [], []>} : vector<8x100xf32>, vector<100x2xf32>, vector<8x2xf32> -> vector<8x2xf32>
    %c1512 = arith.constant 1512 : index
    %c0_120 = arith.constant 0 : index
    %247 = vector.load %arg2[%c1512, %c0_120] : memref<2864x128xf32, #tpu.memory_space<vmem>>, vector<1x2xf32>
    %248 = vector.broadcast %247 : vector<1x2xf32> to vector<8x2xf32>
    %249 = arith.addf %246, %248 : vector<8x2xf32>
    %250 = arith.negf %249 : vector<8x2xf32>
    %251 = math.exp %250 : vector<8x2xf32>
    %cst_121 = arith.constant 1.000000e+00 : f32
    %252 = vector.broadcast %cst_121 : f32 to vector<8x2xf32>
    %253 = arith.addf %252, %251 : vector<8x2xf32>
    %254 = arith.divf %252, %253 : vector<8x2xf32>
    %255 = vector.extract_strided_slice %254 {offsets = [0, 0], sizes = [8, 1], strides = [1, 1]} : vector<8x2xf32> to vector<8x1xf32>
    %256 = vector.extract_strided_slice %254 {offsets = [0, 1], sizes = [8, 1], strides = [1, 1]} : vector<8x2xf32> to vector<8x1xf32>
    %257 = arith.subf %255, %256 : vector<8x1xf32>
    %cst_122 = arith.constant 1.000000e-01 : f32
    %258 = vector.broadcast %cst_122 : f32 to vector<8x1xf32>
    %259 = arith.mulf %257, %258 : vector<8x1xf32>
    %260 = arith.negf %259 : vector<8x1xf32>
    %261 = math.exp %260 : vector<8x1xf32>
    %cst_123 = arith.constant 1.000000e+00 : f32
    %262 = vector.broadcast %cst_123 : f32 to vector<8x1xf32>
    %263 = arith.addf %262, %261 : vector<8x1xf32>
    %264 = arith.divf %262, %263 : vector<8x1xf32>
    %cst_124 = arith.constant dense<0.000000e+00> : vector<1xf32>
    %265 = vector.multi_reduction <add>, %264, %cst_124 [0] : vector<8x1xf32> to vector<1xf32>
    %266 = vector.shape_cast %265 : vector<1xf32> to vector<1x1xf32>
    %cst_125 = arith.constant 8.000000e+00 : f32
    %267 = vector.broadcast %cst_125 : f32 to vector<1x1xf32>
    %268 = arith.divf %266, %267 : vector<1x1xf32>
    %269 = vector.broadcast %268 : vector<1x1xf32> to vector<8x16xf32>
    %270 = arith.mulf %269, %227 : vector<8x16xf32>
    %cst_126 = arith.constant 1.000000e+00 : f32
    %271 = vector.broadcast %cst_126 : f32 to vector<1x1xf32>
    %272 = arith.subf %271, %268 : vector<1x1xf32>
    %273 = vector.broadcast %272 : vector<1x1xf32> to vector<8x16xf32>
    %274 = arith.mulf %273, %37 : vector<8x16xf32>
    %275 = arith.addf %270, %274 : vector<8x16xf32>
    %c2816 = arith.constant 2816 : index
    %c0_127 = arith.constant 0 : index
    %276 = vector.load %arg2[%c2816, %c0_127] : memref<2864x128xf32, #tpu.memory_space<vmem>>, vector<16x32xf32>
    %cst_128 = arith.constant dense<0.000000e+00> : vector<8x32xf32>
    %277 = tpu.matmul %275, %276, %cst_128 {dimension_numbers = #tpu.dot_dimension_numbers<[1], [0], [0], [1], [0, 0, 1, 1], [], []>} : vector<8x16xf32>, vector<16x32xf32>, vector<8x32xf32> -> vector<8x32xf32>
    %cst_129 = arith.constant dense<0.000000e+00> : vector<8x32xf32>
    %278 = tpu.matmul %210, %277, %cst_129 {dimension_numbers = #tpu.dot_dimension_numbers<[1], [0], [0], [1], [0, 0, 1, 1], [], []>} : vector<8x8xf32>, vector<8x32xf32>, vector<8x32xf32> -> vector<8x32xf32>
    %cst_130 = arith.constant 0.000000e+00 : f32
    %279 = vector.broadcast %cst_130 : f32 to vector<8x32xf32>
    %280 = arith.maximumf %278, %279 : vector<8x32xf32>
    %c176 = arith.constant 176 : index
    %c0_131 = arith.constant 0 : index
    %281 = vector.load %arg3[%c176, %c0_131] : memref<208x512xf32, #tpu.memory_space<vmem>>, vector<32x500xf32>
    %cst_132 = arith.constant dense<0.000000e+00> : vector<8x500xf32>
    %282 = tpu.matmul %280, %281, %cst_132 {dimension_numbers = #tpu.dot_dimension_numbers<[1], [0], [0], [1], [0, 0, 1, 1], [], []>} : vector<8x32xf32>, vector<32x500xf32>, vector<8x500xf32> -> vector<8x500xf32>
    %c144_133 = arith.constant 144 : index
    %c0_134 = arith.constant 0 : index
    %283 = vector.load %arg3[%c144_133, %c0_134] : memref<208x512xf32, #tpu.memory_space<vmem>>, vector<32x500xf32>
    %cst_135 = arith.constant dense<0.000000e+00> : vector<8x500xf32>
    %284 = tpu.matmul %44, %283, %cst_135 {dimension_numbers = #tpu.dot_dimension_numbers<[1], [0], [0], [1], [0, 0, 1, 1], [], []>} : vector<8x32xf32>, vector<32x500xf32>, vector<8x500xf32> -> vector<8x500xf32>
    %285 = arith.addf %282, %284 : vector<8x500xf32>
    %c136 = arith.constant 136 : index
    %c0_136 = arith.constant 0 : index
    %286 = vector.load %arg3[%c136, %c0_136] : memref<208x512xf32, #tpu.memory_space<vmem>>, vector<1x500xf32>
    %287 = vector.broadcast %286 : vector<1x500xf32> to vector<8x500xf32>
    %288 = arith.addf %285, %287 : vector<8x500xf32>
    %cst_137 = arith.constant 0.000000e+00 : f32
    %289 = vector.broadcast %cst_137 : f32 to vector<8x500xf32>
    %290 = arith.maximumf %288, %289 : vector<8x500xf32>
    %c2144 = arith.constant 2144 : index
    %c0_138 = arith.constant 0 : index
    %291 = vector.load %arg2[%c2144, %c0_138] : memref<2864x128xf32, #tpu.memory_space<vmem>>, vector<500x100xf32>
    %cst_139 = arith.constant dense<0.000000e+00> : vector<8x100xf32>
    %292 = tpu.matmul %290, %291, %cst_139 {dimension_numbers = #tpu.dot_dimension_numbers<[1], [0], [0], [1], [0, 0, 1, 1], [], []>} : vector<8x500xf32>, vector<500x100xf32>, vector<8x100xf32> -> vector<8x100xf32>
    %c2128 = arith.constant 2128 : index
    %c0_140 = arith.constant 0 : index
    %293 = vector.load %arg2[%c2128, %c0_140] : memref<2864x128xf32, #tpu.memory_space<vmem>>, vector<1x100xf32>
    %294 = vector.broadcast %293 : vector<1x100xf32> to vector<8x100xf32>
    %295 = arith.addf %292, %294 : vector<8x100xf32>
    %cst_141 = arith.constant 0.000000e+00 : f32
    %296 = vector.broadcast %cst_141 : f32 to vector<8x100xf32>
    %297 = arith.maximumf %295, %296 : vector<8x100xf32>
    %c2648 = arith.constant 2648 : index
    %c0_142 = arith.constant 0 : index
    %298 = vector.load %arg2[%c2648, %c0_142] : memref<2864x128xf32, #tpu.memory_space<vmem>>, vector<100x2xf32>
    %cst_143 = arith.constant dense<0.000000e+00> : vector<8x2xf32>
    %299 = tpu.matmul %297, %298, %cst_143 {dimension_numbers = #tpu.dot_dimension_numbers<[1], [0], [0], [1], [0, 0, 1, 1], [], []>} : vector<8x100xf32>, vector<100x2xf32>, vector<8x2xf32> -> vector<8x2xf32>
    %c2136 = arith.constant 2136 : index
    %c0_144 = arith.constant 0 : index
    %300 = vector.load %arg2[%c2136, %c0_144] : memref<2864x128xf32, #tpu.memory_space<vmem>>, vector<1x2xf32>
    %301 = vector.broadcast %300 : vector<1x2xf32> to vector<8x2xf32>
    %302 = arith.addf %299, %301 : vector<8x2xf32>
    %303 = arith.negf %302 : vector<8x2xf32>
    %304 = math.exp %303 : vector<8x2xf32>
    %cst_145 = arith.constant 1.000000e+00 : f32
    %305 = vector.broadcast %cst_145 : f32 to vector<8x2xf32>
    %306 = arith.addf %305, %304 : vector<8x2xf32>
    %307 = arith.divf %305, %306 : vector<8x2xf32>
    %308 = vector.extract_strided_slice %307 {offsets = [0, 0], sizes = [8, 1], strides = [1, 1]} : vector<8x2xf32> to vector<8x1xf32>
    %309 = vector.extract_strided_slice %307 {offsets = [0, 1], sizes = [8, 1], strides = [1, 1]} : vector<8x2xf32> to vector<8x1xf32>
    %310 = arith.subf %308, %309 : vector<8x1xf32>
    %cst_146 = arith.constant 1.000000e-01 : f32
    %311 = vector.broadcast %cst_146 : f32 to vector<8x1xf32>
    %312 = arith.mulf %310, %311 : vector<8x1xf32>
    %313 = arith.negf %312 : vector<8x1xf32>
    %314 = math.exp %313 : vector<8x1xf32>
    %cst_147 = arith.constant 1.000000e+00 : f32
    %315 = vector.broadcast %cst_147 : f32 to vector<8x1xf32>
    %316 = arith.addf %315, %314 : vector<8x1xf32>
    %317 = arith.divf %315, %316 : vector<8x1xf32>
    %cst_148 = arith.constant dense<0.000000e+00> : vector<1xf32>
    %318 = vector.multi_reduction <add>, %317, %cst_148 [0] : vector<8x1xf32> to vector<1xf32>
    %319 = vector.shape_cast %318 : vector<1xf32> to vector<1x1xf32>
    %cst_149 = arith.constant 8.000000e+00 : f32
    %320 = vector.broadcast %cst_149 : f32 to vector<1x1xf32>
    %321 = arith.divf %319, %320 : vector<1x1xf32>
    %322 = vector.broadcast %321 : vector<1x1xf32> to vector<8x32xf32>
    %323 = arith.mulf %322, %280 : vector<8x32xf32>
    %cst_150 = arith.constant 1.000000e+00 : f32
    %324 = vector.broadcast %cst_150 : f32 to vector<1x1xf32>
    %325 = arith.subf %324, %321 : vector<1x1xf32>
    %326 = vector.broadcast %325 : vector<1x1xf32> to vector<8x32xf32>
    %327 = arith.mulf %326, %44 : vector<8x32xf32>
    %328 = arith.addf %323, %327 : vector<8x32xf32>
    %c2832 = arith.constant 2832 : index
    %c0_151 = arith.constant 0 : index
    %329 = vector.load %arg2[%c2832, %c0_151] : memref<2864x128xf32, #tpu.memory_space<vmem>>, vector<32x16xf32>
    %cst_152 = arith.constant dense<0.000000e+00> : vector<8x16xf32>
    %330 = tpu.matmul %328, %329, %cst_152 {dimension_numbers = #tpu.dot_dimension_numbers<[1], [0], [0], [1], [0, 0, 1, 1], [], []>} : vector<8x32xf32>, vector<32x16xf32>, vector<8x16xf32> -> vector<8x16xf32>
    %cst_153 = arith.constant dense<0.000000e+00> : vector<8x16xf32>
    %331 = tpu.matmul %210, %330, %cst_153 {dimension_numbers = #tpu.dot_dimension_numbers<[1], [0], [0], [1], [0, 0, 1, 1], [], []>} : vector<8x8xf32>, vector<8x16xf32>, vector<8x16xf32> -> vector<8x16xf32>
    %cst_154 = arith.constant 0.000000e+00 : f32
    %332 = vector.broadcast %cst_154 : f32 to vector<8x16xf32>
    %333 = arith.maximumf %331, %332 : vector<8x16xf32>
    %cst_155 = arith.constant dense<0.000000e+00> : vector<8x8xf32>
    %334 = tpu.matmul %333, %333, %cst_155 {dimension_numbers = #tpu.dot_dimension_numbers<[1], [1], [0], [0], [0, 0, 1, 0], [], []>} : vector<8x16xf32>, vector<8x16xf32>, vector<8x8xf32> -> vector<8x8xf32>
    %335 = arith.negf %334 : vector<8x8xf32>
    %336 = math.exp %335 : vector<8x8xf32>
    %cst_156 = arith.constant 1.000000e+00 : f32
    %337 = vector.broadcast %cst_156 : f32 to vector<8x8xf32>
    %338 = arith.addf %337, %336 : vector<8x8xf32>
    %339 = arith.divf %337, %338 : vector<8x8xf32>
    %cst_157 = arith.constant 1.000000e+00 : f32
    %340 = vector.broadcast %cst_157 : f32 to vector<8x8xf32>
    %341 = arith.addf %339, %340 : vector<8x8xf32>
    %342 = arith.select %4, %341, %339 : vector<8x8xi1>, vector<8x8xf32>
    %cst_158 = arith.constant dense<0.000000e+00> : vector<8xf32>
    %343 = vector.multi_reduction <add>, %339, %cst_158 [1] : vector<8x8xf32> to vector<8xf32>
    %344 = vector.shape_cast %343 : vector<8xf32> to vector<8x1xf32>
    %cst_159 = arith.constant 1.000000e+00 : f32
    %345 = vector.broadcast %cst_159 : f32 to vector<8x1xf32>
    %346 = arith.addf %344, %345 : vector<8x1xf32>
    %347 = math.rsqrt %346 : vector<8x1xf32>
    %348 = vector.broadcast %347 : vector<8x1xf32> to vector<8x8xf32>
    %349 = arith.mulf %348, %342 : vector<8x8xf32>
    %350 = tpu.transpose %347, [1, 0] : vector<8x1xf32> -> vector<1x8xf32>
    %351 = vector.broadcast %350 : vector<1x8xf32> to vector<8x8xf32>
    %352 = arith.mulf %349, %351 : vector<8x8xf32>
    %c248 = arith.constant 248 : index
    %c0_160 = arith.constant 0 : index
    %353 = vector.load %arg2[%c248, %c0_160] : memref<2864x128xf32, #tpu.memory_space<vmem>>, vector<4x8xf32>
    %354 = arith.mulf %30, %30 : vector<8x8xf32>
    %cst_161 = arith.constant dense<0.000000e+00> : vector<8xf32>
    %355 = vector.multi_reduction <add>, %354, %cst_161 [1] : vector<8x8xf32> to vector<8xf32>
    %356 = vector.shape_cast %355 : vector<8xf32> to vector<8x1xf32>
    %357 = arith.mulf %353, %353 : vector<4x8xf32>
    %cst_162 = arith.constant dense<0.000000e+00> : vector<4xf32>
    %358 = vector.multi_reduction <add>, %357, %cst_162 [1] : vector<4x8xf32> to vector<4xf32>
    %359 = vector.shape_cast %358 : vector<4xf32> to vector<4x1xf32>
    %360 = tpu.transpose %359, [1, 0] : vector<4x1xf32> -> vector<1x4xf32>
    %361 = vector.broadcast %356 : vector<8x1xf32> to vector<8x4xf32>
    %362 = vector.broadcast %360 : vector<1x4xf32> to vector<8x4xf32>
    %363 = arith.addf %361, %362 : vector<8x4xf32>
    %cst_163 = arith.constant dense<0.000000e+00> : vector<8x4xf32>
    %364 = tpu.matmul %30, %353, %cst_163 {dimension_numbers = #tpu.dot_dimension_numbers<[1], [1], [0], [0], [0, 0, 1, 0], [], []>} : vector<8x8xf32>, vector<4x8xf32>, vector<8x4xf32> -> vector<8x4xf32>
    %cst_164 = arith.constant 2.000000e+00 : f32
    %365 = vector.broadcast %cst_164 : f32 to vector<8x4xf32>
    %366 = arith.mulf %365, %364 : vector<8x4xf32>
    %367 = arith.subf %363, %366 : vector<8x4xf32>
    %cst_165 = arith.constant 0.000000e+00 : f32
    %368 = vector.broadcast %cst_165 : f32 to vector<8x4xf32>
    %369 = arith.maximumf %367, %368 : vector<8x4xf32>
    %cst_166 = arith.constant 1.000000e+00 : f32
    %370 = vector.broadcast %cst_166 : f32 to vector<8x4xf32>
    %371 = arith.mulf %369, %370 : vector<8x4xf32>
    %cst_167 = arith.constant 1.000000e+00 : f32
    %372 = vector.broadcast %cst_167 : f32 to vector<8x4xf32>
    %373 = arith.addf %372, %371 : vector<8x4xf32>
    %cst_168 = arith.constant 1.000000e+00 : f32
    %374 = vector.broadcast %cst_168 : f32 to vector<8x4xf32>
    %375 = arith.divf %374, %373 : vector<8x4xf32>
    %cst_169 = arith.constant dense<0.000000e+00> : vector<8xf32>
    %376 = vector.multi_reduction <add>, %375, %cst_169 [1] : vector<8x4xf32> to vector<8xf32>
    %377 = vector.shape_cast %376 : vector<8xf32> to vector<8x1xf32>
    %378 = vector.broadcast %377 : vector<8x1xf32> to vector<8x4xf32>
    %379 = arith.divf %375, %378 : vector<8x4xf32>
    %380 = tpu.concatenate %56, %379, %222, %30 in 1 : vector<8x16xf32>, vector<8x4xf32>, vector<8x4xf32>, vector<8x8xf32> -> vector<8x32xf32>
    %c0_170 = arith.constant 0 : index
    %c0_171 = arith.constant 0 : index
    %381 = vector.load %arg4[%c0_170, %c0_171] : memref<8x32xf32, #tpu.memory_space<vmem>>, vector<8x32xf32>
    tpu.vector_store %arg4[%c0_170, %c0_171], %380 {strides = array<i32>} : memref<8x32xf32, #tpu.memory_space<vmem>>, vector<8x32xf32>,
    %c0_172 = arith.constant 0 : index
    %c0_173 = arith.constant 0 : index
    %382 = vector.load %arg5[%c0_172, %c0_173] : memref<8x8xf32, #tpu.memory_space<vmem>>, vector<8x8xf32>
    tpu.vector_store %arg5[%c0_172, %c0_173], %352 {strides = array<i32>} : memref<8x8xf32, #tpu.memory_space<vmem>>, vector<8x8xf32>,
    return
  }
}

</mosaic_0001>

<llo_original>
// kernel: tpu_custom_call.1
$region0: #{tpu_custom_call.1}
  #allocation0 [shape = 'u32[]', space=smem, size = 0x4, offset = 0x4, fixed_abs, tag = 'smem constant byte address 0x4 - core index']
  #allocation1 [shape = 'u32[72,128]{1,0:T(1,128)}', space=vmem, size = 0x9000, scoped, tag = 'internal scratch']
  %s0 = inlined_call_operand.hbm [shape: f32[8,16], index: 0, kind: input, shape index: {}]
  %s1 = inlined_call_operand.hbm [shape: f32[8,8], index: 1, kind: input, shape index: {}]
  %s2 = inlined_call_operand.hbm [shape: f32[2864,128], index: 2, kind: input, shape index: {}]
  %s3 = inlined_call_operand.hbm [shape: f32[208,512], index: 3, kind: input, shape index: {}]
  %s4 = inlined_call_operand.hbm [shape: f32[8,32], index: 4, kind: output, shape index: {0}]
  %s5 = inlined_call_operand.hbm [shape: f32[8,8], index: 5, kind: output, shape index: {1}]
  %6 = xla_tuple %s4, %s5
  %s7 = sld [smem:[#allocation0]]
  $region50: #{tpu_custom_call.1} parent=0
    _
  %s9 = ssub.s32 1, %s7
  %s10 = scalar_select 0, %s9, %s7
  $region1: #{tpu_custom_call.1} parent=0
    #allocation2 [shape = 'u8[4096]{0}', space=vmem, size = 0x1000, scoped, tag = 'input window, operand 0, single buffered']
    #allocation3 [shape = 's32[1]{0}', space=sflag, size = 0x4, scoped, tag = 'scoped memory for tpu_custom_call.1']
    #allocation4 [shape = 's32[1]{0}', space=sflag, size = 0x4, scoped, tag = 'scoped memory for tpu_custom_call.1']
    #allocation5 [shape = 'u8[4096]{0}', space=vmem, size = 0x1000, scoped, tag = 'input window, operand 1, single buffered']
    #allocation6 [shape = 's32[1]{0}', space=sflag, size = 0x4, scoped, tag = 'scoped memory for tpu_custom_call.1']
    #allocation7 [shape = 'u8[1466368]{0}', space=vmem, size = 0x166000, scoped, tag = 'input window, operand 2, single buffered']
    #allocation8 [shape = 'u8[425984]{0}', space=vmem, size = 0x68000, scoped, tag = 'input window, operand 3, single buffered']
    #allocation9 [shape = 's32[1]{0}', space=sflag, size = 0x4, scoped, tag = 'scoped memory for tpu_custom_call.1']
    #allocation10 [shape = 'u8[4096]{0}', space=vmem, size = 0x1000, scoped, tag = 'output window, operand 0, single buffered']
    #allocation11 [shape = 'u8[4096]{0}', space=vmem, size = 0x1000, scoped, tag = 'output window, operand 1, single buffered']
    #allocation12 [shape = 's32[1]{0}', space=sflag, size = 0x4, scoped, tag = 'scoped memory for tpu_custom_call.1']
    %11 = vsyncpa [#allocation3], 0
    %12 = vsyncpa [#allocation6], 0
    %13 = vsyncpa [#allocation9], 0
    %14 = vsyncpa [#allocation4], 0
    %15 = vsyncpa [#allocation12], 0
    // Predicated region
    $region2: #{tpu_custom_call.1} parent=1 // pred_check
      _
    $region3: #{tpu_custom_call.1} parent=1 // pred_check_branch
      %17 = sbr.rel (0) target = $region5
    $region4: #{tpu_custom_call.1} parent=1 // pred_region
      %19 = vsyncadd [#allocation3], 0
      %s21 = sshll.u32 %s0, 4
      %s22 = int_to_ptr.hbm [resolvable:$true] %s21
      %s23 = sshll.u32 [#allocation2], 4
      %s24 = int_to_ptr.vmem [resolvable:$true] %s23
      %26 = dma.hbm_to_vmem [thread:$0]  %s22, 128, %s24, [#allocation3]
    $region5: #{tpu_custom_call.1} parent=1 // pred_fallthru
      _
    // Predicated region
    $region6: #{tpu_custom_call.1} parent=1 // pred_check
      _
    $region7: #{tpu_custom_call.1} parent=1 // pred_check_branch
      %28 = sbr.rel (0) target = $region9
    $region8: #{tpu_custom_call.1} parent=1 // pred_region
      %30 = vsyncadd [#allocation6], 0
      %s32 = sshll.u32 %s1, 4
      %s33 = int_to_ptr.hbm [resolvable:$true] %s32
      %s34 = sshll.u32 [#allocation5], 4
      %s35 = int_to_ptr.vmem [resolvable:$true] %s34
      %37 = dma.hbm_to_vmem [thread:$0]  %s33, 128, %s35, [#allocation6]
    $region9: #{tpu_custom_call.1} parent=1 // pred_fallthru
      _
    // Predicated region
    $region10: #{tpu_custom_call.1} parent=1 // pred_check
      _
    $region11: #{tpu_custom_call.1} parent=1 // pred_check_branch
      %39 = sbr.rel (0) target = $region13
    $region12: #{tpu_custom_call.1} parent=1 // pred_region
      %41 = vsyncadd [#allocation6], 0
      %s42 = sshll.u32 %s2, 4
      %s43 = int_to_ptr.hbm [resolvable:$true] %s42
      %s44 = sshll.u32 [#allocation7], 4
      %s45 = int_to_ptr.vmem [resolvable:$true] %s44
      %50 = dma.hbm_to_vmem [thread:$0]  %s43, 45824, %s45, [#allocation6], 128, 128, 8
    $region13: #{tpu_custom_call.1} parent=1 // pred_fallthru
      _
    // Predicated region
    $region14: #{tpu_custom_call.1} parent=1 // pred_check
      _
    $region15: #{tpu_custom_call.1} parent=1 // pred_check_branch
      %52 = sbr.rel (0) target = $region17
    $region16: #{tpu_custom_call.1} parent=1 // pred_region
      %54 = vsyncadd [#allocation9], 0
      %s55 = sshll.u32 %s3, 4
      %s56 = int_to_ptr.hbm [resolvable:$true] %s55
      %s57 = sshll.u32 [#allocation8], 4
      %s58 = int_to_ptr.vmem [resolvable:$true] %s57
      %63 = dma.hbm_to_vmem [thread:$0]  %s56, 13312, %s58, [#allocation9], 512, 512, 32
    $region17: #{tpu_custom_call.1} parent=1 // pred_fallthru
      _
    // Predicated region
    $region18: #{tpu_custom_call.1} parent=1 // pred_check
      _
    $region19: #{tpu_custom_call.1} parent=1 // pred_check_branch
      %65 = sbr.rel (0) target = $region21
    $region20: #{tpu_custom_call.1} parent=1 // pred_region
      %67 = dma.done [#allocation3], 128
    $region21: #{tpu_custom_call.1} parent=1 // pred_fallthru
      _
    // Predicated region
    $region22: #{tpu_custom_call.1} parent=1 // pred_check
      _
    $region23: #{tpu_custom_call.1} parent=1 // pred_check_branch
      %69 = sbr.rel (0) target = $region25
    $region24: #{tpu_custom_call.1} parent=1 // pred_region
      %71 = dma.done [#allocation6], 128
    $region25: #{tpu_custom_call.1} parent=1 // pred_fallthru
      _
    // Predicated region
    $region26: #{tpu_custom_call.1} parent=1 // pred_check
      _
    $region27: #{tpu_custom_call.1} parent=1 // pred_check_branch
      %73 = sbr.rel (0) target = $region29
    $region28: #{tpu_custom_call.1} parent=1 // pred_region
      %75 = dma.done [#allocation6], 45824
    $region29: #{tpu_custom_call.1} parent=1 // pred_fallthru
      _
    // Predicated region
    $region30: #{tpu_custom_call.1} parent=1 // pred_check
      _
    $region31: #{tpu_custom_call.1} parent=1 // pred_check_branch
      %77 = sbr.rel (0) target = $region33
    $region32: #{tpu_custom_call.1} parent=1 // pred_region
      %79 = dma.done [#allocation9], 13312
    $region33: #{tpu_custom_call.1} parent=1 // pred_fallthru
      _
    %v80 = vld [vmem:[#allocation2] sm:$0xff]
    %v81 = vld [vmem:[#allocation5] sm:$0xff]
    %v82 = vlaneseq
    %v83 = vshrl.u32 %v82, 7
    %v84 = vlaneseq
    %v85 = vand.u32 %v84, 127
    %vm86 = vcmp.eq.s32.totalorder %v83, %v85
    %v87 = vld [vmem:[#allocation7 + $0x58] sm:$0xff]
    %v88 = vld [vmem:[#allocation7 + $0x60] sm:$0xff]
    %v89 = vld [vmem:[#allocation7 + $0x50] sm:$0x1]
    %v90 = vperm.slane %v89, 0
    %vm91 = vcmask 130048
    %v93 = vsel %vm91, %v80, 0
    %95 = vmatpush.msra.mxu0 0.0
    %96 = vmatpush.msra.mxu0 0.0
    %97 = vmatpush.msra.mxu0 0.0
    %98 = vmatpush.msra.mxu0 0.0
    %99 = vmatpush.msra.mxu0 0.0
    %100 = vmatpush.msra.mxu0 0.0
    %101 = vmatpush.msra.mxu0 0.0
    %102 = vmatpush.msra.mxu0 0.0
    %103 = vmatpush.msra.mxu0 0.0
    %104 = vmatpush.msra.mxu0 0.0
    %105 = vmatpush.msra.mxu0 0.0
    %106 = vmatpush.msra.mxu0 0.0
    %107 = vmatpush.msra.mxu0 0.0
    %108 = vmatpush.msra.mxu0 0.0
    %109 = vmatpush.msra.mxu0 %v88
    %110 = vmatpush.msra.mxu0 %v87
    %111 = vmatmul.f32.gmra.mxu0 %v93
    %v112 = vpop.f32.mrf.mxu0
    %v113 = vadd.f32 %v90, %v112
    %114 = vdwg.mxu0
    %v115 = vmax.f32 %v113, 0.0
    %v116 = vld [vmem:[#allocation7 + $0x70] sm:$0xff]
    %v117 = vld [vmem:[#allocation7 + $0x78] sm:$0xff]
    %v118 = vld [vmem:[#allocation7 + $0x80] sm:$0xff]
    %v119 = vld [vmem:[#allocation7 + $0x88] sm:$0xff]
    %v120 = vld [vmem:[#allocation7 + $0x68] sm:$0x1]
    %v121 = vperm.slane %v120, 0
    %vm122 = vcmask 261120
    %v124 = vsel %vm122, %v115, 0
    %126 = vmatpush.msra.mxu0 0.0
    %127 = vmatpush.msra.mxu0 0.0
    %128 = vmatpush.msra.mxu0 0.0
    %129 = vmatpush.msra.mxu0 0.0
    %130 = vmatpush.msra.mxu0 0.0
    %131 = vmatpush.msra.mxu0 0.0
    %132 = vmatpush.msra.mxu0 0.0
    %133 = vmatpush.msra.mxu0 0.0
    %134 = vmatpush.msra.mxu0 0.0
    %135 = vmatpush.msra.mxu0 0.0
    %136 = vmatpush.msra.mxu0 0.0
    %137 = vmatpush.msra.mxu0 0.0
    %138 = vmatpush.msra.mxu0 %v119
    %139 = vmatpush.msra.mxu0 %v118
    %140 = vmatpush.msra.mxu0 %v117
    %141 = vmatpush.msra.mxu0 %v116
    %142 = vmatmul.f32.gmra.mxu0 %v124
    %v143 = vpop.f32.mrf.mxu0
    %v144 = vadd.f32 %v121, %v143
    %145 = vdwg.mxu0
    %v146 = vmax.f32 %v144, 0.0
    %v147 = vld [vmem:[#allocation7 + $0x98] sm:$0xff]
    %v148 = vld [vmem:[#allocation7 + $0xa0] sm:$0xff]
    %v149 = vld [vmem:[#allocation7 + $0xa8] sm:$0xff]
    %v150 = vld [vmem:[#allocation7 + $0xb0] sm:$0xff]
    %v151 = vld [vmem:[#allocation7 + $0x90] sm:$0x1]
    %v152 = vperm.slane %v151, 0
    %v154 = vsel %vm122, %v146, 0
    %156 = vmatpush.msra.mxu0 0.0
    %157 = vmatpush.msra.mxu0 0.0
    %158 = vmatpush.msra.mxu0 0.0
    %159 = vmatpush.msra.mxu0 0.0
    %160 = vmatpush.msra.mxu0 0.0
    %161 = vmatpush.msra.mxu0 0.0
    %162 = vmatpush.msra.mxu0 0.0
    %163 = vmatpush.msra.mxu0 0.0
    %164 = vmatpush.msra.mxu0 0.0
    %165 = vmatpush.msra.mxu0 0.0
    %166 = vmatpush.msra.mxu0 0.0
    %167 = vmatpush.msra.mxu0 0.0
    %168 = vmatpush.msra.mxu0 %v150
    %169 = vmatpush.msra.mxu0 %v149
    %170 = vmatpush.msra.mxu0 %v148
    %171 = vmatpush.msra.mxu0 %v147
    %172 = vmatmul.f32.gmra.mxu0 %v154
    %v173 = vpop.f32.mrf.mxu0
    %v174 = vadd.f32 %v152, %v173
    %175 = vdwg.mxu0
    %v176 = vmax.f32 %v174, 0.0
    %v177 = vld [vmem:[#allocation7 + $0xe8] sm:$0xff]
    %v178 = vld [vmem:[#allocation7 + $0xf0] sm:$0xff]
    %v179 = vld [vmem:[#allocation7 + $0xe0] sm:$0x1]
    %v180 = vperm.slane %v179, 0
    %v182 = vsel %vm91, %v176, 0
    %184 = vmatpush.msra.mxu0 0.0
    %185 = vmatpush.msra.mxu0 0.0
    %186 = vmatpush.msra.mxu0 0.0
    %187 = vmatpush.msra.mxu0 0.0
    %188 = vmatpush.msra.mxu0 0.0
    %189 = vmatpush.msra.mxu0 0.0
    %190 = vmatpush.msra.mxu0 0.0
    %191 = vmatpush.msra.mxu0 0.0
    %192 = vmatpush.msra.mxu0 0.0
    %193 = vmatpush.msra.mxu0 0.0
    %194 = vmatpush.msra.mxu0 0.0
    %195 = vmatpush.msra.mxu0 0.0
    %196 = vmatpush.msra.mxu0 0.0
    %197 = vmatpush.msra.mxu0 0.0
    %198 = vmatpush.msra.mxu0 %v178
    %199 = vmatpush.msra.mxu0 %v177
    %200 = vmatmul.f32.gmra.mxu0 %v182
    %v201 = vpop.f32.mrf.mxu0
    %v202 = vadd.f32 %v180, %v201
    %203 = vdwg.mxu0
    %v204 = vld [vmem:[#allocation7 + $0x8] sm:$0xff]
    %v205 = vld [vmem:[#allocation7] sm:$0x1]
    %v206 = vperm.slane %v205, 0
    %vm207 = vcmask 64512
    %v209 = vsel %vm207, %v202, 0
    %211 = vmatpush.msra.mxu0 0.0
    %212 = vmatpush.msra.mxu0 0.0
    %213 = vmatpush.msra.mxu0 0.0
    %214 = vmatpush.msra.mxu0 0.0
    %215 = vmatpush.msra.mxu0 0.0
    %216 = vmatpush.msra.mxu0 0.0
    %217 = vmatpush.msra.mxu0 0.0
    %218 = vmatpush.msra.mxu0 0.0
    %219 = vmatpush.msra.mxu0 0.0
    %220 = vmatpush.msra.mxu0 0.0
    %221 = vmatpush.msra.mxu0 0.0
    %222 = vmatpush.msra.mxu0 0.0
    %223 = vmatpush.msra.mxu0 0.0
    %224 = vmatpush.msra.mxu0 0.0
    %225 = vmatpush.msra.mxu0 0.0
    %226 = vmatpush.msra.mxu0 %v204
    %227 = vmatmul.f32.gmra.mxu0 %v209
    %v228 = vpop.f32.mrf.mxu0
    %v229 = vadd.f32 %v206, %v228
    %230 = vdwg.mxu0
    %v231 = vmax.f32 %v229, 0.0
    %v232 = vld [vmem:[#allocation7 + $0x18] sm:$0xff]
    %v233 = vld [vmem:[#allocation7 + $0x20] sm:$0xff]
    %v234 = vld [vmem:[#allocation7 + $0x10] sm:$0x1]
    %v235 = vperm.slane %v234, 0
    %v237 = vsel %vm91, %v231, 0
    %239 = vmatpush.msra.mxu0 0.0
    %240 = vmatpush.msra.mxu0 0.0
    %241 = vmatpush.msra.mxu0 0.0
    %242 = vmatpush.msra.mxu0 0.0
    %243 = vmatpush.msra.mxu0 0.0
    %244 = vmatpush.msra.mxu0 0.0
    %245 = vmatpush.msra.mxu0 0.0
    %246 = vmatpush.msra.mxu0 0.0
    %247 = vmatpush.msra.mxu0 0.0
    %248 = vmatpush.msra.mxu0 0.0
    %249 = vmatpush.msra.mxu0 0.0
    %250 = vmatpush.msra.mxu0 0.0
    %251 = vmatpush.msra.mxu0 0.0
    %252 = vmatpush.msra.mxu0 0.0
    %253 = vmatpush.msra.mxu0 %v233
    %254 = vmatpush.msra.mxu0 %v232
    %255 = vmatmul.f32.gmra.mxu0 %v237
    %v256 = vpop.f32.mrf.mxu0
    %v257 = vadd.f32 %v235, %v256
    %258 = vdwg.mxu0
    %v259 = vmax.f32 %v257, 0.0
    %v260 = vld [vmem:[#allocation7 + $0x30] sm:$0xff]
    %v261 = vld [vmem:[#allocation7 + $0x38] sm:$0xff]
    %v262 = vld [vmem:[#allocation7 + $0x40] sm:$0xff]
    %v263 = vld [vmem:[#allocation7 + $0x48] sm:$0xff]
    %v264 = vld [vmem:[#allocation7 + $0x28] sm:$0x1]
    %v265 = vperm.slane %v264, 0
    %v267 = vsel %vm122, %v259, 0
    %269 = vmatpush.msra.mxu0 0.0
    %270 = vmatpush.msra.mxu0 0.0
    %271 = vmatpush.msra.mxu0 0.0
    %272 = vmatpush.msra.mxu0 0.0
    %273 = vmatpush.msra.mxu0 0.0
    %274 = vmatpush.msra.mxu0 0.0
    %275 = vmatpush.msra.mxu0 0.0
    %276 = vmatpush.msra.mxu0 0.0
    %277 = vmatpush.msra.mxu0 0.0
    %278 = vmatpush.msra.mxu0 0.0
    %279 = vmatpush.msra.mxu0 0.0
    %280 = vmatpush.msra.mxu0 0.0
    %281 = vmatpush.msra.mxu0 %v263
    %282 = vmatpush.msra.mxu0 %v262
    %283 = vmatpush.msra.mxu0 %v261
    %284 = vmatpush.msra.mxu0 %v260
    %285 = vmatmul.f32.gmra.mxu0 %v267
    %v286 = vpop.f32.mrf.mxu0
    %v287 = vadd.f32 %v265, %v286
    %288 = vdwg.mxu0
    %v289 = vmax.f32 %v287, 0.0
    %v290 = vld [vmem:[#allocation7 + $0xc0] sm:$0xff]
    %v291 = vld [vmem:[#allocation7 + $0xc8] sm:$0xff]
    %v292 = vld [vmem:[#allocation7 + $0xd0] sm:$0xff]
    %v293 = vld [vmem:[#allocation7 + $0xd8] sm:$0xff]
    %v294 = vld [vmem:[#allocation7 + $0xb8] sm:$0x1]
    %v295 = vperm.slane %v294, 0
    %v297 = vsel %vm122, %v289, 0
    %299 = vmatpush.msra.mxu0 0.0
    %300 = vmatpush.msra.mxu0 0.0
    %301 = vmatpush.msra.mxu0 0.0
    %302 = vmatpush.msra.mxu0 0.0
    %303 = vmatpush.msra.mxu0 0.0
    %304 = vmatpush.msra.mxu0 0.0
    %305 = vmatpush.msra.mxu0 0.0
    %306 = vmatpush.msra.mxu0 0.0
    %307 = vmatpush.msra.mxu0 0.0
    %308 = vmatpush.msra.mxu0 0.0
    %309 = vmatpush.msra.mxu0 0.0
    %310 = vmatpush.msra.mxu0 0.0
    %311 = vmatpush.msra.mxu0 %v293
    %312 = vmatpush.msra.mxu0 %v292
    %313 = vmatpush.msra.mxu0 %v291
    %314 = vmatpush.msra.mxu0 %v290
    %315 = vmatmul.f32.gmra.mxu0 %v297
    %v316 = vpop.f32.mrf.mxu0
    %v317 = vadd.f32 %v295, %v316
    %318 = vdwg.mxu0
    %v319 = vld [vmem:[#allocation7 + $0xac0] sm:$0xff]
    %v320 = vld [vmem:[#allocation7 + $0xac8] sm:$0xff]
    %321 = vmatpush.msra.mxu0 0.0
    %322 = vmatpush.msra.mxu0 0.0
    %323 = vmatpush.msra.mxu0 0.0
    %324 = vmatpush.msra.mxu0 0.0
    %325 = vmatpush.msra.mxu0 0.0
    %326 = vmatpush.msra.mxu0 0.0
    %327 = vmatpush.msra.mxu0 0.0
    %328 = vmatpush.msra.mxu0 0.0
    %329 = vmatpush.msra.mxu0 0.0
    %330 = vmatpush.msra.mxu0 0.0
    %331 = vmatpush.msra.mxu0 0.0
    %332 = vmatpush.msra.mxu0 0.0
    %333 = vmatpush.msra.mxu0 0.0
    %334 = vmatpush.msra.mxu0 0.0
    %335 = vmatpush.msra.mxu0 %v320
    %336 = vmatpush.msra.mxu0 %v319
    %337 = vmatmul.f32.gmra.mxu0 %v93
    %v338 = vpop.f32.mrf.mxu0
    %v339 = vadd.f32 0.0, %v338
    %340 = vdwg.mxu0
    %v342 = vsel %vm207, %v81, 0
    %344 = vmatpush.msra.mxu0 0.0
    %345 = vmatpush.msra.mxu0 0.0
    %346 = vmatpush.msra.mxu0 0.0
    %347 = vmatpush.msra.mxu0 0.0
    %348 = vmatpush.msra.mxu0 0.0
    %349 = vmatpush.msra.mxu0 0.0
    %350 = vmatpush.msra.mxu0 0.0
    %351 = vmatpush.msra.mxu0 0.0
    %352 = vmatpush.msra.mxu0 0.0
    %353 = vmatpush.msra.mxu0 0.0
    %354 = vmatpush.msra.mxu0 0.0
    %355 = vmatpush.msra.mxu0 0.0
    %356 = vmatpush.msra.mxu0 0.0
    %357 = vmatpush.msra.mxu0 0.0
    %358 = vmatpush.msra.mxu0 0.0
    %359 = vmatpush.msra.mxu0 %v339
    %360 = vmatmul.f32.gmra.mxu0 %v342
    %v361 = vpop.f32.mrf.mxu0
    %v362 = vadd.f32 0.0, %v361
    %363 = vdwg.mxu0
    %v364 = vmax.f32 %v362, 0.0
    %v365 = vld [vmem:[#allocation8 + $0xa0] sm:$0xff]
    %v366 = vld [vmem:[#allocation8 + $0xa8] sm:$0xff]
    %v367 = vld [vmem:[#allocation8 + $0xb0] sm:$0xff]
    %v368 = vld [vmem:[#allocation8 + $0xb8] sm:$0xff]
    %v369 = vld [vmem:[#allocation8 + $0xc0] sm:$0xff]
    %v370 = vld [vmem:[#allocation8 + $0xc8] sm:$0xff]
    %v371 = vld [vmem:[#allocation8 + $0xd0] sm:$0xff]
    %v372 = vld [vmem:[#allocation8 + $0xd8] sm:$0xff]
    %v373 = vld [vmem:[#allocation8 + $0xe0] sm:$0xff]
    %v374 = vld [vmem:[#allocation8 + $0xe8] sm:$0xff]
    %v375 = vld [vmem:[#allocation8 + $0xf0] sm:$0xff]
    %v376 = vld [vmem:[#allocation8 + $0xf8] sm:$0xff]
    %v377 = vld [vmem:[#allocation8 + $0x100] sm:$0xff]
    %v378 = vld [vmem:[#allocation8 + $0x108] sm:$0xff]
    %v379 = vld [vmem:[#allocation8 + $0x110] sm:$0xff]
    %v380 = vld [vmem:[#allocation8 + $0x118] sm:$0xff]
    %v381 = vld [vmem:[#allocation8 + $0x20] sm:$0xff]
    %v382 = vld [vmem:[#allocation8 + $0x28] sm:$0xff]
    %v383 = vld [vmem:[#allocation8 + $0x30] sm:$0xff]
    %v384 = vld [vmem:[#allocation8 + $0x38] sm:$0xff]
    %v385 = vld [vmem:[#allocation8 + $0x40] sm:$0xff]
    %v386 = vld [vmem:[#allocation8 + $0x48] sm:$0xff]
    %v387 = vld [vmem:[#allocation8 + $0x50] sm:$0xff]
    %v388 = vld [vmem:[#allocation8 + $0x58] sm:$0xff]
    %v389 = vld [vmem:[#allocation8 + $0x60] sm:$0xff]
    %v390 = vld [vmem:[#allocation8 + $0x68] sm:$0xff]
    %v391 = vld [vmem:[#allocation8 + $0x70] sm:$0xff]
    %v392 = vld [vmem:[#allocation8 + $0x78] sm:$0xff]
    %v393 = vld [vmem:[#allocation8 + $0x80] sm:$0xff]
    %v394 = vld [vmem:[#allocation8 + $0x88] sm:$0xff]
    %v395 = vld [vmem:[#allocation8 + $0x90] sm:$0xff]
    %v396 = vld [vmem:[#allocation8 + $0x98] sm:$0xff]
    %397 = vmatpush.msra.mxu0 0.0
    %398 = vmatpush.msra.mxu0 0.0
    %399 = vmatpush.msra.mxu0 0.0
    %400 = vmatpush.msra.mxu0 0.0
    %401 = vmatpush.msra.mxu0 0.0
    %402 = vmatpush.msra.mxu0 0.0
    %403 = vmatpush.msra.mxu0 0.0
    %404 = vmatpush.msra.mxu0 0.0
    %405 = vmatpush.msra.mxu0 0.0
    %406 = vmatpush.msra.mxu0 0.0
    %407 = vmatpush.msra.mxu0 0.0
    %408 = vmatpush.msra.mxu0 0.0
    %409 = vmatpush.msra.mxu0 %v393
    %410 = vmatpush.msra.mxu0 %v389
    %411 = vmatpush.msra.mxu0 %v385
    %412 = vmatpush.msra.mxu0 %v381
    %413 = vmatmul.f32.gmra.mxu0 %v124
    %v414 = vpop.f32.mrf.mxu0
    %v415 = vadd.f32 0.0, %v414
    %416 = vdwg.mxu0
    %417 = vmatpush.msra.mxu0 0.0
    %418 = vmatpush.msra.mxu0 0.0
    %419 = vmatpush.msra.mxu0 0.0
    %420 = vmatpush.msra.mxu0 0.0
    %421 = vmatpush.msra.mxu0 0.0
    %422 = vmatpush.msra.mxu0 0.0
    %423 = vmatpush.msra.mxu0 0.0
    %424 = vmatpush.msra.mxu0 0.0
    %425 = vmatpush.msra.mxu0 0.0
    %426 = vmatpush.msra.mxu0 0.0
    %427 = vmatpush.msra.mxu0 0.0
    %428 = vmatpush.msra.mxu0 0.0
    %429 = vmatpush.msra.mxu0 %v394
    %430 = vmatpush.msra.mxu0 %v390
    %431 = vmatpush.msra.mxu0 %v386
    %432 = vmatpush.msra.mxu0 %v382
    %433 = vmatmul.f32.gmra.mxu0 %v124
    %v434 = vpop.f32.mrf.mxu0
    %v435 = vadd.f32 0.0, %v434
    %436 = vdwg.mxu0
    %437 = vmatpush.msra.mxu0 0.0
    %438 = vmatpush.msra.mxu0 0.0
    %439 = vmatpush.msra.mxu0 0.0
    %440 = vmatpush.msra.mxu0 0.0
    %441 = vmatpush.msra.mxu0 0.0
    %442 = vmatpush.msra.mxu0 0.0
    %443 = vmatpush.msra.mxu0 0.0
    %444 = vmatpush.msra.mxu0 0.0
    %445 = vmatpush.msra.mxu0 0.0
    %446 = vmatpush.msra.mxu0 0.0
    %447 = vmatpush.msra.mxu0 0.0
    %448 = vmatpush.msra.mxu0 0.0
    %449 = vmatpush.msra.mxu0 %v395
    %450 = vmatpush.msra.mxu0 %v391
    %451 = vmatpush.msra.mxu0 %v387
    %452 = vmatpush.msra.mxu0 %v383
    %453 = vmatmul.f32.gmra.mxu0 %v124
    %v454 = vpop.f32.mrf.mxu0
    %v455 = vadd.f32 0.0, %v454
    %456 = vdwg.mxu0
    %457 = vmatpush.msra.mxu0 0.0
    %458 = vmatpush.msra.mxu0 0.0
    %459 = vmatpush.msra.mxu0 0.0
    %460 = vmatpush.msra.mxu0 0.0
    %461 = vmatpush.msra.mxu0 0.0
    %462 = vmatpush.msra.mxu0 0.0
    %463 = vmatpush.msra.mxu0 0.0
    %464 = vmatpush.msra.mxu0 0.0
    %465 = vmatpush.msra.mxu0 0.0
    %466 = vmatpush.msra.mxu0 0.0
    %467 = vmatpush.msra.mxu0 0.0
    %468 = vmatpush.msra.mxu0 0.0
    %469 = vmatpush.msra.mxu0 %v396
    %470 = vmatpush.msra.mxu0 %v392
    %471 = vmatpush.msra.mxu0 %v388
    %472 = vmatpush.msra.mxu0 %v384
    %473 = vmatmul.f32.gmra.mxu0 %v124
    %v474 = vpop.f32.mrf.mxu0
    %v475 = vadd.f32 0.0, %v474
    %476 = vdwg.mxu0
    %v478 = vsel %vm122, %v364, 0
    %480 = vmatpush.msra.mxu0 0.0
    %481 = vmatpush.msra.mxu0 0.0
    %482 = vmatpush.msra.mxu0 0.0
    %483 = vmatpush.msra.mxu0 0.0
    %484 = vmatpush.msra.mxu0 0.0
    %485 = vmatpush.msra.mxu0 0.0
    %486 = vmatpush.msra.mxu0 0.0
    %487 = vmatpush.msra.mxu0 0.0
    %488 = vmatpush.msra.mxu0 0.0
    %489 = vmatpush.msra.mxu0 0.0
    %490 = vmatpush.msra.mxu0 0.0
    %491 = vmatpush.msra.mxu0 0.0
    %492 = vmatpush.msra.mxu0 %v377
    %493 = vmatpush.msra.mxu0 %v373
    %494 = vmatpush.msra.mxu0 %v369
    %495 = vmatpush.msra.mxu0 %v365
    %496 = vmatmul.f32.gmra.mxu0 %v478
    %v497 = vpop.f32.mrf.mxu0
    %v498 = vadd.f32 %v415, %v497
    %499 = vdwg.mxu0
    %500 = vmatpush.msra.mxu0 0.0
    %501 = vmatpush.msra.mxu0 0.0
    %502 = vmatpush.msra.mxu0 0.0
    %503 = vmatpush.msra.mxu0 0.0
    %504 = vmatpush.msra.mxu0 0.0
    %505 = vmatpush.msra.mxu0 0.0
    %506 = vmatpush.msra.mxu0 0.0
    %507 = vmatpush.msra.mxu0 0.0
    %508 = vmatpush.msra.mxu0 0.0
    %509 = vmatpush.msra.mxu0 0.0
    %510 = vmatpush.msra.mxu0 0.0
    %511 = vmatpush.msra.mxu0 0.0
    %512 = vmatpush.msra.mxu0 %v378
    %513 = vmatpush.msra.mxu0 %v374
    %514 = vmatpush.msra.mxu0 %v370
    %515 = vmatpush.msra.mxu0 %v366
    %516 = vmatmul.f32.gmra.mxu0 %v478
    %v517 = vpop.f32.mrf.mxu0
    %v518 = vadd.f32 %v435, %v517
    %519 = vdwg.mxu0
    %520 = vmatpush.msra.mxu0 0.0
    %521 = vmatpush.msra.mxu0 0.0
    %522 = vmatpush.msra.mxu0 0.0
    %523 = vmatpush.msra.mxu0 0.0
    %524 = vmatpush.msra.mxu0 0.0
    %525 = vmatpush.msra.mxu0 0.0
    %526 = vmatpush.msra.mxu0 0.0
    %527 = vmatpush.msra.mxu0 0.0
    %528 = vmatpush.msra.mxu0 0.0
    %529 = vmatpush.msra.mxu0 0.0
    %530 = vmatpush.msra.mxu0 0.0
    %531 = vmatpush.msra.mxu0 0.0
    %532 = vmatpush.msra.mxu0 %v379
    %533 = vmatpush.msra.mxu0 %v375
    %534 = vmatpush.msra.mxu0 %v371
    %535 = vmatpush.msra.mxu0 %v367
    %536 = vmatmul.f32.gmra.mxu0 %v478
    %v537 = vpop.f32.mrf.mxu0
    %v538 = vadd.f32 %v455, %v537
    %539 = vdwg.mxu0
    %540 = vmatpush.msra.mxu0 0.0
    %541 = vmatpush.msra.mxu0 0.0
    %542 = vmatpush.msra.mxu0 0.0
    %543 = vmatpush.msra.mxu0 0.0
    %544 = vmatpush.msra.mxu0 0.0
    %545 = vmatpush.msra.mxu0 0.0
    %546 = vmatpush.msra.mxu0 0.0
    %547 = vmatpush.msra.mxu0 0.0
    %548 = vmatpush.msra.mxu0 0.0
    %549 = vmatpush.msra.mxu0 0.0
    %550 = vmatpush.msra.mxu0 0.0
    %551 = vmatpush.msra.mxu0 0.0
    %552 = vmatpush.msra.mxu0 %v380
    %553 = vmatpush.msra.mxu0 %v376
    %554 = vmatpush.msra.mxu0 %v372
    %555 = vmatpush.msra.mxu0 %v368
    %556 = vmatmul.f32.gmra.mxu0 %v478
    %v557 = vpop.f32.mrf.mxu0
    %v558 = vadd.f32 %v475, %v557
    %559 = vdwg.mxu0
    %v560 = vld [vmem:[#allocation8] ss:$8 sm:$0xf]
    %v562 = vperm.slane %v560, 0
    %v563 = vperm.slane %v560, 1
    %v564 = vperm.slane %v560, 2
    %v565 = vperm.slane %v560, 3
    %v570 = vadd.f32 %v498, %v562
    %v571 = vadd.f32 %v518, %v563
    %v572 = vadd.f32 %v538, %v564
    %v573 = vadd.f32 %v558, %v565
    %v574 = vmax.f32 %v570, 0.0
    %v575 = vmax.f32 %v571, 0.0
    %v576 = vmax.f32 %v572, 0.0
    %v577 = vmax.f32 %v573, 0.0
    %v578 = vld [vmem:[#allocation7 + $0x110] sm:$0xff]
    %v579 = vld [vmem:[#allocation7 + $0x118] sm:$0xff]
    %v580 = vld [vmem:[#allocation7 + $0x120] sm:$0xff]
    %v581 = vld [vmem:[#allocation7 + $0x128] sm:$0xff]
    %v582 = vld [vmem:[#allocation7 + $0x130] sm:$0xff]
    %v583 = vld [vmem:[#allocation7 + $0x138] sm:$0xff]
    %v584 = vld [vmem:[#allocation7 + $0x140] sm:$0xff]
    %v585 = vld [vmem:[#allocation7 + $0x148] sm:$0xff]
    %v586 = vld [vmem:[#allocation7 + $0x150] sm:$0xff]
    %v587 = vld [vmem:[#allocation7 + $0x158] sm:$0xff]
    %v588 = vld [vmem:[#allocation7 + $0x160] sm:$0xff]
    %v589 = vld [vmem:[#allocation7 + $0x168] sm:$0xff]
    %v590 = vld [vmem:[#allocation7 + $0x170] sm:$0xff]
    %v591 = vld [vmem:[#allocation7 + $0x178] sm:$0xff]
    %v592 = vld [vmem:[#allocation7 + $0x180] sm:$0xff]
    %v593 = vld [vmem:[#allocation7 + $0x188] sm:$0xff]
    %v594 = vld [vmem:[#allocation7 + $0x190] sm:$0xff]
    %v595 = vld [vmem:[#allocation7 + $0x198] sm:$0xff]
    %v596 = vld [vmem:[#allocation7 + $0x1a0] sm:$0xff]
    %v597 = vld [vmem:[#allocation7 + $0x1a8] sm:$0xff]
    %v598 = vld [vmem:[#allocation7 + $0x1b0] sm:$0xff]
    %v599 = vld [vmem:[#allocation7 + $0x1b8] sm:$0xff]
    %v600 = vld [vmem:[#allocation7 + $0x1c0] sm:$0xff]
    %v601 = vld [vmem:[#allocation7 + $0x1c8] sm:$0xff]
    %v602 = vld [vmem:[#allocation7 + $0x1d0] sm:$0xff]
    %v603 = vld [vmem:[#allocation7 + $0x1d8] sm:$0xff]
    %v604 = vld [vmem:[#allocation7 + $0x1e0] sm:$0xff]
    %v605 = vld [vmem:[#allocation7 + $0x1e8] sm:$0xff]
    %v606 = vld [vmem:[#allocation7 + $0x1f0] sm:$0xff]
    %v607 = vld [vmem:[#allocation7 + $0x1f8] sm:$0xff]
    %v608 = vld [vmem:[#allocation7 + $0x200] sm:$0xff]
    %v609 = vld [vmem:[#allocation7 + $0x208] sm:$0xff]
    %v610 = vld [vmem:[#allocation7 + $0x210] sm:$0xff]
    %v611 = vld [vmem:[#allocation7 + $0x218] sm:$0xff]
    %v612 = vld [vmem:[#allocation7 + $0x220] sm:$0xff]
    %v613 = vld [vmem:[#allocation7 + $0x228] sm:$0xff]
    %v614 = vld [vmem:[#allocation7 + $0x230] sm:$0xff]
    %v615 = vld [vmem:[#allocation7 + $0x238] sm:$0xff]
    %v616 = vld [vmem:[#allocation7 + $0x240] sm:$0xff]
    %v617 = vld [vmem:[#allocation7 + $0x248] sm:$0xff]
    %v618 = vld [vmem:[#allocation7 + $0x250] sm:$0xff]
    %v619 = vld [vmem:[#allocation7 + $0x258] sm:$0xff]
    %v620 = vld [vmem:[#allocation7 + $0x260] sm:$0xff]
    %v621 = vld [vmem:[#allocation7 + $0x268] sm:$0xff]
    %v622 = vld [vmem:[#allocation7 + $0x270] sm:$0xff]
    %v623 = vld [vmem:[#allocation7 + $0x278] sm:$0xff]
    %v624 = vld [vmem:[#allocation7 + $0x280] sm:$0xff]
    %v625 = vld [vmem:[#allocation7 + $0x288] sm:$0xff]
    %v626 = vld [vmem:[#allocation7 + $0x290] sm:$0xff]
    %v627 = vld [vmem:[#allocation7 + $0x298] sm:$0xff]
    %v628 = vld [vmem:[#allocation7 + $0x2a0] sm:$0xff]
    %v629 = vld [vmem:[#allocation7 + $0x2a8] sm:$0xff]
    %v630 = vld [vmem:[#allocation7 + $0x2b0] sm:$0xff]
    %v631 = vld [vmem:[#allocation7 + $0x2b8] sm:$0xff]
    %v632 = vld [vmem:[#allocation7 + $0x2c0] sm:$0xff]
    %v633 = vld [vmem:[#allocation7 + $0x2c8] sm:$0xff]
    %v634 = vld [vmem:[#allocation7 + $0x2d0] sm:$0xff]
    %v635 = vld [vmem:[#allocation7 + $0x2d8] sm:$0xff]
    %v636 = vld [vmem:[#allocation7 + $0x2e0] sm:$0xff]
    %v637 = vld [vmem:[#allocation7 + $0x2e8] sm:$0xff]
    %v638 = vld [vmem:[#allocation7 + $0x2f0] sm:$0xff]
    %v639 = vld [vmem:[#allocation7 + $0x2f8] sm:$0xff]
    %v640 = vld [vmem:[#allocation7 + $0x300] sm:$0xf]
    %v641 = vld [vmem:[#allocation7 + $0x100] sm:$0x1]
    %v642 = vperm.slane %v641, 0
    %vm643 = vcmask 949248
    %v645 = vsel %vm643, %v577, 0
    %vm647 = vcmask 1043456
    %v649 = vsel %vm647, %v640, 0
    %651 = vmatpush.msra.mxu0 %v593
    %652 = vmatpush.msra.mxu0 %v592
    %653 = vmatpush.msra.mxu0 %v591
    %654 = vmatpush.msra.mxu0 %v590
    %655 = vmatpush.msra.mxu0 %v589
    %656 = vmatpush.msra.mxu0 %v588
    %657 = vmatpush.msra.mxu0 %v587
    %658 = vmatpush.msra.mxu0 %v586
    %659 = vmatpush.msra.mxu0 %v585
    %660 = vmatpush.msra.mxu0 %v584
    %661 = vmatpush.msra.mxu0 %v583
    %662 = vmatpush.msra.mxu0 %v582
    %663 = vmatpush.msra.mxu0 %v581
    %664 = vmatpush.msra.mxu0 %v580
    %665 = vmatpush.msra.mxu0 %v579
    %666 = vmatpush.msra.mxu0 %v578
    %667 = vmatmul.f32.gmra.mxu0 %v574
    %v668 = vpop.f32.mrf.mxu0
    %v669 = vadd.f32 %v642, %v668
    %670 = vdwg.mxu0
    %671 = vmatpush.msra.mxu0 %v609
    %672 = vmatpush.msra.mxu0 %v608
    %673 = vmatpush.msra.mxu0 %v607
    %674 = vmatpush.msra.mxu0 %v606
    %675 = vmatpush.msra.mxu0 %v605
    %676 = vmatpush.msra.mxu0 %v604
    %677 = vmatpush.msra.mxu0 %v603
    %678 = vmatpush.msra.mxu0 %v602
    %679 = vmatpush.msra.mxu0 %v601
    %680 = vmatpush.msra.mxu0 %v600
    %681 = vmatpush.msra.mxu0 %v599
    %682 = vmatpush.msra.mxu0 %v598
    %683 = vmatpush.msra.mxu0 %v597
    %684 = vmatpush.msra.mxu0 %v596
    %685 = vmatpush.msra.mxu0 %v595
    %686 = vmatpush.msra.mxu0 %v594
    %687 = vmatmul.f32.gmra.mxu0 %v575
    %v688 = vpop.f32.mrf.mxu0
    %v689 = vadd.f32 %v669, %v688
    %690 = vdwg.mxu0
    %691 = vmatpush.msra.mxu0 %v625
    %692 = vmatpush.msra.mxu0 %v624
    %693 = vmatpush.msra.mxu0 %v623
    %694 = vmatpush.msra.mxu0 %v622
    %695 = vmatpush.msra.mxu0 %v621
    %696 = vmatpush.msra.mxu0 %v620
    %697 = vmatpush.msra.mxu0 %v619
    %698 = vmatpush.msra.mxu0 %v618
    %699 = vmatpush.msra.mxu0 %v617
    %700 = vmatpush.msra.mxu0 %v616
    %701 = vmatpush.msra.mxu0 %v615
    %702 = vmatpush.msra.mxu0 %v614
    %703 = vmatpush.msra.mxu0 %v613
    %704 = vmatpush.msra.mxu0 %v612
    %705 = vmatpush.msra.mxu0 %v611
    %706 = vmatpush.msra.mxu0 %v610
    %707 = vmatmul.f32.gmra.mxu0 %v576
    %v708 = vpop.f32.mrf.mxu0
    %v709 = vadd.f32 %v689, %v708
    %710 = vdwg.mxu0
    %711 = vmatpush.msra.mxu0 0.0
    %712 = vmatpush.msra.mxu0 %v649
    %713 = vmatpush.msra.mxu0 %v639
    %714 = vmatpush.msra.mxu0 %v638
    %715 = vmatpush.msra.mxu0 %v637
    %716 = vmatpush.msra.mxu0 %v636
    %717 = vmatpush.msra.mxu0 %v635
    %718 = vmatpush.msra.mxu0 %v634
    %719 = vmatpush.msra.mxu0 %v633
    %720 = vmatpush.msra.mxu0 %v632
    %721 = vmatpush.msra.mxu0 %v631
    %722 = vmatpush.msra.mxu0 %v630
    %723 = vmatpush.msra.mxu0 %v629
    %724 = vmatpush.msra.mxu0 %v628
    %725 = vmatpush.msra.mxu0 %v627
    %726 = vmatpush.msra.mxu0 %v626
    %727 = vmatmul.f32.gmra.mxu0 %v645
    %v728 = vpop.f32.mrf.mxu0
    %v729 = vadd.f32 %v709, %v728
    %730 = vdwg.mxu0
    %v731 = vmax.f32 %v729, 0.0
    %v732 = vld [vmem:[#allocation7 + $0x308] sm:$0xff]
    %v733 = vld [vmem:[#allocation7 + $0x310] sm:$0xff]
    %v734 = vld [vmem:[#allocation7 + $0x318] sm:$0xff]
    %v735 = vld [vmem:[#allocation7 + $0x320] sm:$0xff]
    %v736 = vld [vmem:[#allocation7 + $0x328] sm:$0xff]
    %v737 = vld [vmem:[#allocation7 + $0x330] sm:$0xff]
    %v738 = vld [vmem:[#allocation7 + $0x338] sm:$0xff]
    %v739 = vld [vmem:[#allocation7 + $0x340] sm:$0xff]
    %v740 = vld [vmem:[#allocation7 + $0x348] sm:$0xff]
    %v741 = vld [vmem:[#allocation7 + $0x350] sm:$0xff]
    %v742 = vld [vmem:[#allocation7 + $0x358] sm:$0xff]
    %v743 = vld [vmem:[#allocation7 + $0x360] sm:$0xff]
    %v744 = vld [vmem:[#allocation7 + $0x368] sm:$0xf]
    %v745 = vld [vmem:[#allocation7 + $0x108] sm:$0x1]
    %v746 = vperm.slane %v745, 0
    %vm747 = vcmask 818176
    %v749 = vsel %vm747, %v731, 0
    %v752 = vsel %vm647, %v744, 0
    %754 = vmatpush.msra.mxu0 0.0
    %755 = vmatpush.msra.mxu0 0.0
    %756 = vmatpush.msra.mxu0 0.0
    %757 = vmatpush.msra.mxu0 %v752
    %758 = vmatpush.msra.mxu0 %v743
    %759 = vmatpush.msra.mxu0 %v742
    %760 = vmatpush.msra.mxu0 %v741
    %761 = vmatpush.msra.mxu0 %v740
    %762 = vmatpush.msra.mxu0 %v739
    %763 = vmatpush.msra.mxu0 %v738
    %764 = vmatpush.msra.mxu0 %v737
    %765 = vmatpush.msra.mxu0 %v736
    %766 = vmatpush.msra.mxu0 %v735
    %767 = vmatpush.msra.mxu0 %v734
    %768 = vmatpush.msra.mxu0 %v733
    %769 = vmatpush.msra.mxu0 %v732
    %770 = vmatmul.f32.gmra.mxu0 %v749
    %v771 = vpop.f32.mrf.mxu0
    %v772 = vadd.f32 %v746, %v771
    %773 = vdwg.mxu0
    %v774 = vxor.u32 %v772, 2147483648
    %v775 = vmul.f32 %v774, 1.442695
    %v776 = vpow.pop %v775
    %v777 = vadd.f32 %v776, 1.0
    %v778 = vrcp.pop %v777
    %v779 = vmul.f32 %v777, %v778
    %v780 = vsub.f32 1.0, %v779
    %v781 = vmul.f32 %v778, %v780
    %v782 = vadd.f32 %v778, %v781
    %vm783 = vweird.f32 %v777
    %vm784 = vweird.f32 %v778
    %vm785 = vmor %vm783, %vm784
    %v786 = vsel %vm785, %v778, %v782
    %v787 = vand.u32 2147483647, %v777
    %vm788 = vcmp.eq.f32.partialorder %v787, 8.507059e+37
    %v789 = vand.u32 %v777, 2147483648
    %v790 = vor.u32 1.1754944e-38, %v789
    %v791 = vsel %vm788, %v790, %v786
    %v792 = vmul.f32 1.0, %v791
    %794 = vrot.lane.b32.xlu0 %v792, 127
    %v795 = vpop.permute.xlu0 %794
    %v797 = vsub.f32 %v792, %v795
    %v798 = vmul.f32 %v797, 0.1
    %v799 = vxor.u32 %v798, 2147483648
    %v800 = vmul.f32 %v799, 1.442695
    %v801 = vpow.pop %v800
    %v802 = vadd.f32 %v801, 1.0
    %v803 = vrcp.pop %v802
    %v804 = vmul.f32 %v802, %v803
    %v805 = vsub.f32 1.0, %v804
    %v806 = vmul.f32 %v803, %v805
    %v807 = vadd.f32 %v803, %v806
    %vm808 = vweird.f32 %v802
    %vm809 = vweird.f32 %v803
    %vm810 = vmor %vm808, %vm809
    %v811 = vsel %vm810, %v803, %v807
    %v812 = vand.u32 2147483647, %v802
    %vm813 = vcmp.eq.f32.partialorder %v812, 8.507059e+37
    %v814 = vand.u32 %v802, 2147483648
    %v815 = vor.u32 1.1754944e-38, %v814
    %v816 = vsel %vm813, %v815, %v811
    %v817 = vmul.f32 1.0, %v816
    %vm818 = vcmask 7168
    %v819 = vsel %vm818, %v817, 0.0
    %v820 = vrot.slane %v819, 4
    %v821 = vadd.f32 %v819, %v820
    %v822 = vrot.slane %v821, 2
    %v823 = vadd.f32 %v821, %v822
    %v824 = vrot.slane %v823, 1
    %v825 = vadd.f32 %v823, %v824
    %v826 = vrcp.pop 8.0
    %v827 = vmul.f32 8.0, %v826
    %v828 = vsub.f32 1.0, %v827
    %v829 = vmul.f32 %v826, %v828
    %v830 = vadd.f32 %v826, %v829
    %vm831 = vweird.f32 %v826
    %v832 = vsel %vm831, %v826, %v830
    %v833 = vmul.f32 %v825, %v832
    %835 = vset.pattern.permute.xlu0 0
    %836 = vperm.xlu0 %835, %v833
    %v837 = vpop.permute.xlu0 %836
    %v839 = vmul.f32 %v837, %v364
    %v840 = vsub.f32 1.0, %v833
    %842 = vset.pattern.permute.xlu0 0
    %843 = vperm.xlu0 %842, %v840
    %v844 = vpop.permute.xlu0 %843
    %v846 = vmul.f32 %v844, %v115
    %v847 = vadd.f32 %v839, %v846
    %v849 = vsel %vm122, %v847, 0
    %851 = vmatpush.xpose.msra.mxu0 0.0
    %852 = vmatpush.xpose.msra.mxu0 0.0
    %853 = vmatpush.xpose.msra.mxu0 0.0
    %854 = vmatpush.xpose.msra.mxu0 0.0
    %855 = vmatpush.xpose.msra.mxu0 0.0
    %856 = vmatpush.xpose.msra.mxu0 0.0
    %857 = vmatpush.xpose.msra.mxu0 0.0
    %858 = vmatpush.xpose.msra.mxu0 0.0
    %859 = vmatpush.xpose.msra.mxu0 0.0
    %860 = vmatpush.xpose.msra.mxu0 0.0
    %861 = vmatpush.xpose.msra.mxu0 0.0
    %862 = vmatpush.xpose.msra.mxu0 0.0
    %863 = vmatpush.xpose.msra.mxu0 0.0
    %864 = vmatpush.xpose.msra.mxu0 0.0
    %865 = vmatpush.xpose.msra.mxu0 0.0
    %866 = vmatpush.xpose.msra.mxu0 %v849
    %867 = vmatmul.f32.gmra.mxu0 %v849
    %v868 = vpop.f32.mrf.mxu0
    %v869 = vadd.f32 0.0, %v868
    %870 = vdwg.mxu0
    %v871 = vxor.u32 %v869, 2147483648
    %v872 = vmul.f32 %v871, 1.442695
    %v873 = vpow.pop %v872
    %v874 = vadd.f32 %v873, 1.0
    %v875 = vrcp.pop %v874
    %v876 = vmul.f32 %v874, %v875
    %v877 = vsub.f32 1.0, %v876
    %v878 = vmul.f32 %v875, %v877
    %v879 = vadd.f32 %v875, %v878
    %vm880 = vweird.f32 %v874
    %vm881 = vweird.f32 %v875
    %vm882 = vmor %vm880, %vm881
    %v883 = vsel %vm882, %v875, %v879
    %v884 = vand.u32 2147483647, %v874
    %vm885 = vcmp.eq.f32.partialorder %v884, 8.507059e+37
    %v886 = vand.u32 %v874, 2147483648
    %v887 = vor.u32 1.1754944e-38, %v886
    %v888 = vsel %vm885, %v887, %v883
    %v889 = vmul.f32 1.0, %v888
    %v890 = vadd.f32 %v889, 1.0
    %v891 = vsel %vm86, %v890, %v889
    %v892 = vsel %vm207, %v889, 0.0
    %893 = vadd.xlane.f32.xlu0 %v892
    %v894 = vpop.xlane.xlu0 %893
    %v895 = vadd.f32 %v894, 1.0
    %v896 = vrsqrt.pop %v895
    %v897 = vmul.f32 %v896, %v895
    %v898 = vmul.f32 %v897, %v896
    %v899 = vmul.f32 0.5, %v898
    %v900 = vsub.f32 1.5, %v899
    %v901 = vmul.f32 %v896, %v900
    %vm902 = vweird.f32 %v895
    %vm903 = vweird.f32 %v896
    %vm904 = vmor %vm902, %vm903
    %v905 = vsel %vm904, %v896, %v901
    %v906 = vmul.f32 %v905, %v891
    %907 = vxpose.xlu0.b32.start [1/16] %v905, 128
    %908 = vxpose.xlu0.b32.cont [2/16] 0.0, 128
    %909 = vxpose.xlu0.b32.cont [3/16] 0.0, 128
    %910 = vxpose.xlu0.b32.cont [4/16] 0.0, 128
    %911 = vxpose.xlu0.b32.cont [5/16] 0.0, 128
    %912 = vxpose.xlu0.b32.cont [6/16] 0.0, 128
    %913 = vxpose.xlu0.b32.cont [7/16] 0.0, 128
    %914 = vxpose.xlu0.b32.cont [8/16] 0.0, 128
    %915 = vxpose.xlu0.b32.cont [9/16] 0.0, 128
    %916 = vxpose.xlu0.b32.cont [10/16] 0.0, 128
    %917 = vxpose.xlu0.b32.cont [11/16] 0.0, 128
    %918 = vxpose.xlu0.b32.cont [12/16] 0.0, 128
    %919 = vxpose.xlu0.b32.cont [13/16] 0.0, 128
    %920 = vxpose.xlu0.b32.cont [14/16] 0.0, 128
    %921 = vxpose.xlu0.b32.cont [15/16] 0.0, 128
    %922 = vxpose.xlu0.b32.end [16/16] 0.0, 128
    %v923 = vpop.trf.xlu0
    %v924 = vpop.trf.xlu0
    %v925 = vpop.trf.xlu0
    %v926 = vpop.trf.xlu0
    %v927 = vpop.trf.xlu0
    %v928 = vpop.trf.xlu0
    %v929 = vpop.trf.xlu0
    %v930 = vpop.trf.xlu0
    %v931 = vpop.trf.xlu0
    %v932 = vpop.trf.xlu0
    %v933 = vpop.trf.xlu0
    %v934 = vpop.trf.xlu0
    %v935 = vpop.trf.xlu0
    %v936 = vpop.trf.xlu0
    %v937 = vpop.trf.xlu0
    %v938 = vpop.trf.xlu0
    %v939 = vperm.slane %v923, 0
    %v940 = vmul.f32 %v906, %v939
    %v941 = vmul.f32 %v940, 0.5
    %v942 = vmul.f32 %v81, 0.5
    %v943 = vadd.f32 %v941, %v942
    %v944 = vld [vmem:[#allocation7 + $0xad0] sm:$0xff]
    %v945 = vld [vmem:[#allocation7 + $0xad8] sm:$0xff]
    %v946 = vld [vmem:[#allocation7 + $0xae0] sm:$0xff]
    %v947 = vld [vmem:[#allocation7 + $0xae8] sm:$0xff]
    %948 = vmatpush.msra.mxu0 0.0
    %949 = vmatpush.msra.mxu0 0.0
    %950 = vmatpush.msra.mxu0 0.0
    %951 = vmatpush.msra.mxu0 0.0
    %952 = vmatpush.msra.mxu0 0.0
    %953 = vmatpush.msra.mxu0 0.0
    %954 = vmatpush.msra.mxu0 0.0
    %955 = vmatpush.msra.mxu0 0.0
    %956 = vmatpush.msra.mxu0 0.0
    %957 = vmatpush.msra.mxu0 0.0
    %958 = vmatpush.msra.mxu0 0.0
    %959 = vmatpush.msra.mxu0 0.0
    %960 = vmatpush.msra.mxu0 %v947
    %961 = vmatpush.msra.mxu0 %v946
    %962 = vmatpush.msra.mxu0 %v945
    %963 = vmatpush.msra.mxu0 %v944
    %964 = vmatmul.f32.gmra.mxu0 %v849
    %v965 = vpop.f32.mrf.mxu0
    %v966 = vadd.f32 0.0, %v965
    %967 = vdwg.mxu0
    %v969 = vsel %vm207, %v943, 0
    %971 = vmatpush.msra.mxu0 0.0
    %972 = vmatpush.msra.mxu0 0.0
    %973 = vmatpush.msra.mxu0 0.0
    %974 = vmatpush.msra.mxu0 0.0
    %975 = vmatpush.msra.mxu0 0.0
    %976 = vmatpush.msra.mxu0 0.0
    %977 = vmatpush.msra.mxu0 0.0
    %978 = vmatpush.msra.mxu0 0.0
    %979 = vmatpush.msra.mxu0 0.0
    %980 = vmatpush.msra.mxu0 0.0
    %981 = vmatpush.msra.mxu0 0.0
    %982 = vmatpush.msra.mxu0 0.0
    %983 = vmatpush.msra.mxu0 0.0
    %984 = vmatpush.msra.mxu0 0.0
    %985 = vmatpush.msra.mxu0 0.0
    %986 = vmatpush.msra.mxu0 %v966
    %987 = vmatmul.f32.gmra.mxu0 %v969
    %v988 = vpop.f32.mrf.mxu0
    %v989 = vadd.f32 0.0, %v988
    %990 = vdwg.mxu0
    %v991 = vmax.f32 %v989, 0.0
    %v992 = vld [vmem:[#allocation8 + $0x160] sm:$0xff]
    %v993 = vld [vmem:[#allocation8 + $0x168] sm:$0xff]
    %v994 = vld [vmem:[#allocation8 + $0x170] sm:$0xff]
    %v995 = vld [vmem:[#allocation8 + $0x178] sm:$0xff]
    %v996 = vld [vmem:[#allocation8 + $0x140] sm:$0xff]
    %v997 = vld [vmem:[#allocation8 + $0x148] sm:$0xff]
    %v998 = vld [vmem:[#allocation8 + $0x150] sm:$0xff]
    %v999 = vld [vmem:[#allocation8 + $0x158] sm:$0xff]
    %1000 = vmatpush.msra.mxu0 0.0
    %1001 = vmatpush.msra.mxu0 0.0
    %1002 = vmatpush.msra.mxu0 0.0
    %1003 = vmatpush.msra.mxu0 0.0
    %1004 = vmatpush.msra.mxu0 0.0
    %1005 = vmatpush.msra.mxu0 0.0
    %1006 = vmatpush.msra.mxu0 0.0
    %1007 = vmatpush.msra.mxu0 0.0
    %1008 = vmatpush.msra.mxu0 0.0
    %1009 = vmatpush.msra.mxu0 0.0
    %1010 = vmatpush.msra.mxu0 0.0
    %1011 = vmatpush.msra.mxu0 0.0
    %1012 = vmatpush.msra.mxu0 0.0
    %1013 = vmatpush.msra.mxu0 0.0
    %1014 = vmatpush.msra.mxu0 0.0
    %1015 = vmatpush.msra.mxu0 %v996
    %1016 = vmatmul.f32.gmra.mxu0 %v209
    %v1017 = vpop.f32.mrf.mxu0
    %v1018 = vadd.f32 0.0, %v1017
    %1019 = vdwg.mxu0
    %1020 = vmatpush.msra.mxu0 0.0
    %1021 = vmatpush.msra.mxu0 0.0
    %1022 = vmatpush.msra.mxu0 0.0
    %1023 = vmatpush.msra.mxu0 0.0
    %1024 = vmatpush.msra.mxu0 0.0
    %1025 = vmatpush.msra.mxu0 0.0
    %1026 = vmatpush.msra.mxu0 0.0
    %1027 = vmatpush.msra.mxu0 0.0
    %1028 = vmatpush.msra.mxu0 0.0
    %1029 = vmatpush.msra.mxu0 0.0
    %1030 = vmatpush.msra.mxu0 0.0
    %1031 = vmatpush.msra.mxu0 0.0
    %1032 = vmatpush.msra.mxu0 0.0
    %1033 = vmatpush.msra.mxu0 0.0
    %1034 = vmatpush.msra.mxu0 0.0
    %1035 = vmatpush.msra.mxu0 %v997
    %1036 = vmatmul.f32.gmra.mxu0 %v209
    %v1037 = vpop.f32.mrf.mxu0
    %v1038 = vadd.f32 0.0, %v1037
    %1039 = vdwg.mxu0
    %1040 = vmatpush.msra.mxu0 0.0
    %1041 = vmatpush.msra.mxu0 0.0
    %1042 = vmatpush.msra.mxu0 0.0
    %1043 = vmatpush.msra.mxu0 0.0
    %1044 = vmatpush.msra.mxu0 0.0
    %1045 = vmatpush.msra.mxu0 0.0
    %1046 = vmatpush.msra.mxu0 0.0
    %1047 = vmatpush.msra.mxu0 0.0
    %1048 = vmatpush.msra.mxu0 0.0
    %1049 = vmatpush.msra.mxu0 0.0
    %1050 = vmatpush.msra.mxu0 0.0
    %1051 = vmatpush.msra.mxu0 0.0
    %1052 = vmatpush.msra.mxu0 0.0
    %1053 = vmatpush.msra.mxu0 0.0
    %1054 = vmatpush.msra.mxu0 0.0
    %1055 = vmatpush.msra.mxu0 %v998
    %1056 = vmatmul.f32.gmra.mxu0 %v209
    %v1057 = vpop.f32.mrf.mxu0
    %v1058 = vadd.f32 0.0, %v1057
    %1059 = vdwg.mxu0
    %1060 = vmatpush.msra.mxu0 0.0
    %1061 = vmatpush.msra.mxu0 0.0
    %1062 = vmatpush.msra.mxu0 0.0
    %1063 = vmatpush.msra.mxu0 0.0
    %1064 = vmatpush.msra.mxu0 0.0
    %1065 = vmatpush.msra.mxu0 0.0
    %1066 = vmatpush.msra.mxu0 0.0
    %1067 = vmatpush.msra.mxu0 0.0
    %1068 = vmatpush.msra.mxu0 0.0
    %1069 = vmatpush.msra.mxu0 0.0
    %1070 = vmatpush.msra.mxu0 0.0
    %1071 = vmatpush.msra.mxu0 0.0
    %1072 = vmatpush.msra.mxu0 0.0
    %1073 = vmatpush.msra.mxu0 0.0
    %1074 = vmatpush.msra.mxu0 0.0
    %1075 = vmatpush.msra.mxu0 %v999
    %1076 = vmatmul.f32.gmra.mxu0 %v209
    %v1077 = vpop.f32.mrf.mxu0
    %v1078 = vadd.f32 0.0, %v1077
    %1079 = vdwg.mxu0
    %v1081 = vsel %vm207, %v991, 0
    %1083 = vmatpush.msra.mxu0 0.0
    %1084 = vmatpush.msra.mxu0 0.0
    %1085 = vmatpush.msra.mxu0 0.0
    %1086 = vmatpush.msra.mxu0 0.0
    %1087 = vmatpush.msra.mxu0 0.0
    %1088 = vmatpush.msra.mxu0 0.0
    %1089 = vmatpush.msra.mxu0 0.0
    %1090 = vmatpush.msra.mxu0 0.0
    %1091 = vmatpush.msra.mxu0 0.0
    %1092 = vmatpush.msra.mxu0 0.0
    %1093 = vmatpush.msra.mxu0 0.0
    %1094 = vmatpush.msra.mxu0 0.0
    %1095 = vmatpush.msra.mxu0 0.0
    %1096 = vmatpush.msra.mxu0 0.0
    %1097 = vmatpush.msra.mxu0 0.0
    %1098 = vmatpush.msra.mxu0 %v992
    %1099 = vmatmul.f32.gmra.mxu0 %v1081
    %v1100 = vpop.f32.mrf.mxu0
    %v1101 = vadd.f32 %v1018, %v1100
    %1102 = vdwg.mxu0
    %1103 = vmatpush.msra.mxu0 0.0
    %1104 = vmatpush.msra.mxu0 0.0
    %1105 = vmatpush.msra.mxu0 0.0
    %1106 = vmatpush.msra.mxu0 0.0
    %1107 = vmatpush.msra.mxu0 0.0
    %1108 = vmatpush.msra.mxu0 0.0
    %1109 = vmatpush.msra.mxu0 0.0
    %1110 = vmatpush.msra.mxu0 0.0
    %1111 = vmatpush.msra.mxu0 0.0
    %1112 = vmatpush.msra.mxu0 0.0
    %1113 = vmatpush.msra.mxu0 0.0
    %1114 = vmatpush.msra.mxu0 0.0
    %1115 = vmatpush.msra.mxu0 0.0
    %1116 = vmatpush.msra.mxu0 0.0
    %1117 = vmatpush.msra.mxu0 0.0
    %1118 = vmatpush.msra.mxu0 %v993
    %1119 = vmatmul.f32.gmra.mxu0 %v1081
    %v1120 = vpop.f32.mrf.mxu0
    %v1121 = vadd.f32 %v1038, %v1120
    %1122 = vdwg.mxu0
    %1123 = vmatpush.msra.mxu0 0.0
    %1124 = vmatpush.msra.mxu0 0.0
    %1125 = vmatpush.msra.mxu0 0.0
    %1126 = vmatpush.msra.mxu0 0.0
    %1127 = vmatpush.msra.mxu0 0.0
    %1128 = vmatpush.msra.mxu0 0.0
    %1129 = vmatpush.msra.mxu0 0.0
    %1130 = vmatpush.msra.mxu0 0.0
    %1131 = vmatpush.msra.mxu0 0.0
    %1132 = vmatpush.msra.mxu0 0.0
    %1133 = vmatpush.msra.mxu0 0.0
    %1134 = vmatpush.msra.mxu0 0.0
    %1135 = vmatpush.msra.mxu0 0.0
    %1136 = vmatpush.msra.mxu0 0.0
    %1137 = vmatpush.msra.mxu0 0.0
    %1138 = vmatpush.msra.mxu0 %v994
    %1139 = vmatmul.f32.gmra.mxu0 %v1081
    %v1140 = vpop.f32.mrf.mxu0
    %v1141 = vadd.f32 %v1058, %v1140
    %1142 = vdwg.mxu0
    %1143 = vmatpush.msra.mxu0 0.0
    %1144 = vmatpush.msra.mxu0 0.0
    %1145 = vmatpush.msra.mxu0 0.0
    %1146 = vmatpush.msra.mxu0 0.0
    %1147 = vmatpush.msra.mxu0 0.0
    %1148 = vmatpush.msra.mxu0 0.0
    %1149 = vmatpush.msra.mxu0 0.0
    %1150 = vmatpush.msra.mxu0 0.0
    %1151 = vmatpush.msra.mxu0 0.0
    %1152 = vmatpush.msra.mxu0 0.0
    %1153 = vmatpush.msra.mxu0 0.0
    %1154 = vmatpush.msra.mxu0 0.0
    %1155 = vmatpush.msra.mxu0 0.0
    %1156 = vmatpush.msra.mxu0 0.0
    %1157 = vmatpush.msra.mxu0 0.0
    %1158 = vmatpush.msra.mxu0 %v995
    %1159 = vmatmul.f32.gmra.mxu0 %v1081
    %v1160 = vpop.f32.mrf.mxu0
    %v1161 = vadd.f32 %v1078, %v1160
    %1162 = vdwg.mxu0
    %s1163 = scalar_lea.vmem [#allocation8], 288
    %v1164 = vld [vmem:[%s1163] ss:$8 sm:$0xf]
    %v1166 = vperm.slane %v1164, 0
    %v1167 = vperm.slane %v1164, 1
    %v1168 = vperm.slane %v1164, 2
    %v1169 = vperm.slane %v1164, 3
    %v1174 = vadd.f32 %v1101, %v1166
    %v1175 = vadd.f32 %v1121, %v1167
    %v1176 = vadd.f32 %v1141, %v1168
    %v1177 = vadd.f32 %v1161, %v1169
    %v1178 = vmax.f32 %v1174, 0.0
    %v1179 = vmax.f32 %v1175, 0.0
    %v1180 = vmax.f32 %v1176, 0.0
    %v1181 = vmax.f32 %v1177, 0.0
    %v1182 = vld [vmem:[#allocation7 + $0x380] sm:$0xff]
    %v1183 = vld [vmem:[#allocation7 + $0x388] sm:$0xff]
    %v1184 = vld [vmem:[#allocation7 + $0x390] sm:$0xff]
    %v1185 = vld [vmem:[#allocation7 + $0x398] sm:$0xff]
    %v1186 = vld [vmem:[#allocation7 + $0x3a0] sm:$0xff]
    %v1187 = vld [vmem:[#allocation7 + $0x3a8] sm:$0xff]
    %v1188 = vld [vmem:[#allocation7 + $0x3b0] sm:$0xff]
    %v1189 = vld [vmem:[#allocation7 + $0x3b8] sm:$0xff]
    %v1190 = vld [vmem:[#allocation7 + $0x3c0] sm:$0xff]
    %v1191 = vld [vmem:[#allocation7 + $0x3c8] sm:$0xff]
    %v1192 = vld [vmem:[#allocation7 + $0x3d0] sm:$0xff]
    %v1193 = vld [vmem:[#allocation7 + $0x3d8] sm:$0xff]
    %v1194 = vld [vmem:[#allocation7 + $0x3e0] sm:$0xff]
    %v1195 = vld [vmem:[#allocation7 + $0x3e8] sm:$0xff]
    %v1196 = vld [vmem:[#allocation7 + $0x3f0] sm:$0xff]
    %v1197 = vld [vmem:[#allocation7 + $0x3f8] sm:$0xff]
    %v1198 = vld [vmem:[#allocation7 + $0x400] sm:$0xff]
    %v1199 = vld [vmem:[#allocation7 + $0x408] sm:$0xff]
    %v1200 = vld [vmem:[#allocation7 + $0x410] sm:$0xff]
    %v1201 = vld [vmem:[#allocation7 + $0x418] sm:$0xff]
    %v1202 = vld [vmem:[#allocation7 + $0x420] sm:$0xff]
    %v1203 = vld [vmem:[#allocation7 + $0x428] sm:$0xff]
    %v1204 = vld [vmem:[#allocation7 + $0x430] sm:$0xff]
    %v1205 = vld [vmem:[#allocation7 + $0x438] sm:$0xff]
    %v1206 = vld [vmem:[#allocation7 + $0x440] sm:$0xff]
    %v1207 = vld [vmem:[#allocation7 + $0x448] sm:$0xff]
    %v1208 = vld [vmem:[#allocation7 + $0x450] sm:$0xff]
    %v1209 = vld [vmem:[#allocation7 + $0x458] sm:$0xff]
    %v1210 = vld [vmem:[#allocation7 + $0x460] sm:$0xff]
    %v1211 = vld [vmem:[#allocation7 + $0x468] sm:$0xff]
    %v1212 = vld [vmem:[#allocation7 + $0x470] sm:$0xff]
    %v1213 = vld [vmem:[#allocation7 + $0x478] sm:$0xff]
    %v1214 = vld [vmem:[#allocation7 + $0x480] sm:$0xff]
    %v1215 = vld [vmem:[#allocation7 + $0x488] sm:$0xff]
    %v1216 = vld [vmem:[#allocation7 + $0x490] sm:$0xff]
    %v1217 = vld [vmem:[#allocation7 + $0x498] sm:$0xff]
    %v1218 = vld [vmem:[#allocation7 + $0x4a0] sm:$0xff]
    %v1219 = vld [vmem:[#allocation7 + $0x4a8] sm:$0xff]
    %v1220 = vld [vmem:[#allocation7 + $0x4b0] sm:$0xff]
    %v1221 = vld [vmem:[#allocation7 + $0x4b8] sm:$0xff]
    %v1222 = vld [vmem:[#allocation7 + $0x4c0] sm:$0xff]
    %v1223 = vld [vmem:[#allocation7 + $0x4c8] sm:$0xff]
    %v1224 = vld [vmem:[#allocation7 + $0x4d0] sm:$0xff]
    %v1225 = vld [vmem:[#allocation7 + $0x4d8] sm:$0xff]
    %v1226 = vld [vmem:[#allocation7 + $0x4e0] sm:$0xff]
    %v1227 = vld [vmem:[#allocation7 + $0x4e8] sm:$0xff]
    %v1228 = vld [vmem:[#allocation7 + $0x4f0] sm:$0xff]
    %v1229 = vld [vmem:[#allocation7 + $0x4f8] sm:$0xff]
    %v1230 = vld [vmem:[#allocation7 + $0x500] sm:$0xff]
    %v1231 = vld [vmem:[#allocation7 + $0x508] sm:$0xff]
    %v1232 = vld [vmem:[#allocation7 + $0x510] sm:$0xff]
    %v1233 = vld [vmem:[#allocation7 + $0x518] sm:$0xff]
    %v1234 = vld [vmem:[#allocation7 + $0x520] sm:$0xff]
    %v1235 = vld [vmem:[#allocation7 + $0x528] sm:$0xff]
    %v1236 = vld [vmem:[#allocation7 + $0x530] sm:$0xff]
    %v1237 = vld [vmem:[#allocation7 + $0x538] sm:$0xff]
    %v1238 = vld [vmem:[#allocation7 + $0x540] sm:$0xff]
    %v1239 = vld [vmem:[#allocation7 + $0x548] sm:$0xff]
    %v1240 = vld [vmem:[#allocation7 + $0x550] sm:$0xff]
    %v1241 = vld [vmem:[#allocation7 + $0x558] sm:$0xff]
    %v1242 = vld [vmem:[#allocation7 + $0x560] sm:$0xff]
    %v1243 = vld [vmem:[#allocation7 + $0x568] sm:$0xff]
    %v1244 = vld [vmem:[#allocation7 + $0x570] sm:$0xf]
    %v1245 = vld [vmem:[#allocation7 + $0x370] sm:$0x1]
    %v1246 = vperm.slane %v1245, 0
    %v1248 = vsel %vm643, %v1181, 0
    %v1251 = vsel %vm647, %v1244, 0
    %1253 = vmatpush.msra.mxu0 %v1197
    %1254 = vmatpush.msra.mxu0 %v1196
    %1255 = vmatpush.msra.mxu0 %v1195
    %1256 = vmatpush.msra.mxu0 %v1194
    %1257 = vmatpush.msra.mxu0 %v1193
    %1258 = vmatpush.msra.mxu0 %v1192
    %1259 = vmatpush.msra.mxu0 %v1191
    %1260 = vmatpush.msra.mxu0 %v1190
    %1261 = vmatpush.msra.mxu0 %v1189
    %1262 = vmatpush.msra.mxu0 %v1188
    %1263 = vmatpush.msra.mxu0 %v1187
    %1264 = vmatpush.msra.mxu0 %v1186
    %1265 = vmatpush.msra.mxu0 %v1185
    %1266 = vmatpush.msra.mxu0 %v1184
    %1267 = vmatpush.msra.mxu0 %v1183
    %1268 = vmatpush.msra.mxu0 %v1182
    %1269 = vmatmul.f32.gmra.mxu0 %v1178
    %v1270 = vpop.f32.mrf.mxu0
    %v1271 = vadd.f32 %v1246, %v1270
    %1272 = vdwg.mxu0
    %1273 = vmatpush.msra.mxu0 %v1213
    %1274 = vmatpush.msra.mxu0 %v1212
    %1275 = vmatpush.msra.mxu0 %v1211
    %1276 = vmatpush.msra.mxu0 %v1210
    %1277 = vmatpush.msra.mxu0 %v1209
    %1278 = vmatpush.msra.mxu0 %v1208
    %1279 = vmatpush.msra.mxu0 %v1207
    %1280 = vmatpush.msra.mxu0 %v1206
    %1281 = vmatpush.msra.mxu0 %v1205
    %1282 = vmatpush.msra.mxu0 %v1204
    %1283 = vmatpush.msra.mxu0 %v1203
    %1284 = vmatpush.msra.mxu0 %v1202
    %1285 = vmatpush.msra.mxu0 %v1201
    %1286 = vmatpush.msra.mxu0 %v1200
    %1287 = vmatpush.msra.mxu0 %v1199
    %1288 = vmatpush.msra.mxu0 %v1198
    %1289 = vmatmul.f32.gmra.mxu0 %v1179
    %v1290 = vpop.f32.mrf.mxu0
    %v1291 = vadd.f32 %v1271, %v1290
    %1292 = vdwg.mxu0
    %1293 = vmatpush.msra.mxu0 %v1229
    %1294 = vmatpush.msra.mxu0 %v1228
    %1295 = vmatpush.msra.mxu0 %v1227
    %1296 = vmatpush.msra.mxu0 %v1226
    %1297 = vmatpush.msra.mxu0 %v1225
    %1298 = vmatpush.msra.mxu0 %v1224
    %1299 = vmatpush.msra.mxu0 %v1223
    %1300 = vmatpush.msra.mxu0 %v1222
    %1301 = vmatpush.msra.mxu0 %v1221
    %1302 = vmatpush.msra.mxu0 %v1220
    %1303 = vmatpush.msra.mxu0 %v1219
    %1304 = vmatpush.msra.mxu0 %v1218
    %1305 = vmatpush.msra.mxu0 %v1217
    %1306 = vmatpush.msra.mxu0 %v1216
    %1307 = vmatpush.msra.mxu0 %v1215
    %1308 = vmatpush.msra.mxu0 %v1214
    %1309 = vmatmul.f32.gmra.mxu0 %v1180
    %v1310 = vpop.f32.mrf.mxu0
    %v1311 = vadd.f32 %v1291, %v1310
    %1312 = vdwg.mxu0
    %1313 = vmatpush.msra.mxu0 0.0
    %1314 = vmatpush.msra.mxu0 %v1251
    %1315 = vmatpush.msra.mxu0 %v1243
    %1316 = vmatpush.msra.mxu0 %v1242
    %1317 = vmatpush.msra.mxu0 %v1241
    %1318 = vmatpush.msra.mxu0 %v1240
    %1319 = vmatpush.msra.mxu0 %v1239
    %1320 = vmatpush.msra.mxu0 %v1238
    %1321 = vmatpush.msra.mxu0 %v1237
    %1322 = vmatpush.msra.mxu0 %v1236
    %1323 = vmatpush.msra.mxu0 %v1235
    %1324 = vmatpush.msra.mxu0 %v1234
    %1325 = vmatpush.msra.mxu0 %v1233
    %1326 = vmatpush.msra.mxu0 %v1232
    %1327 = vmatpush.msra.mxu0 %v1231
    %1328 = vmatpush.msra.mxu0 %v1230
    %1329 = vmatmul.f32.gmra.mxu0 %v1248
    %v1330 = vpop.f32.mrf.mxu0
    %v1331 = vadd.f32 %v1311, %v1330
    %1332 = vdwg.mxu0
    %v1333 = vmax.f32 %v1331, 0.0
    %v1334 = vld [vmem:[#allocation7 + $0x578] sm:$0xff]
    %v1335 = vld [vmem:[#allocation7 + $0x580] sm:$0xff]
    %v1336 = vld [vmem:[#allocation7 + $0x588] sm:$0xff]
    %v1337 = vld [vmem:[#allocation7 + $0x590] sm:$0xff]
    %v1338 = vld [vmem:[#allocation7 + $0x598] sm:$0xff]
    %v1339 = vld [vmem:[#allocation7 + $0x5a0] sm:$0xff]
    %v1340 = vld [vmem:[#allocation7 + $0x5a8] sm:$0xff]
    %v1341 = vld [vmem:[#allocation7 + $0x5b0] sm:$0xff]
    %v1342 = vld [vmem:[#allocation7 + $0x5b8] sm:$0xff]
    %v1343 = vld [vmem:[#allocation7 + $0x5c0] sm:$0xff]
    %v1344 = vld [vmem:[#allocation7 + $0x5c8] sm:$0xff]
    %v1345 = vld [vmem:[#allocation7 + $0x5d0] sm:$0xff]
    %v1346 = vld [vmem:[#allocation7 + $0x5d8] sm:$0xf]
    %v1347 = vld [vmem:[#allocation7 + $0x378] sm:$0x1]
    %v1348 = vperm.slane %v1347, 0
    %v1350 = vsel %vm747, %v1333, 0
    %v1353 = vsel %vm647, %v1346, 0
    %1355 = vmatpush.msra.mxu0 0.0
    %1356 = vmatpush.msra.mxu0 0.0
    %1357 = vmatpush.msra.mxu0 0.0
    %1358 = vmatpush.msra.mxu0 %v1353
    %1359 = vmatpush.msra.mxu0 %v1345
    %1360 = vmatpush.msra.mxu0 %v1344
    %1361 = vmatpush.msra.mxu0 %v1343
    %1362 = vmatpush.msra.mxu0 %v1342
    %1363 = vmatpush.msra.mxu0 %v1341
    %1364 = vmatpush.msra.mxu0 %v1340
    %1365 = vmatpush.msra.mxu0 %v1339
    %1366 = vmatpush.msra.mxu0 %v1338
    %1367 = vmatpush.msra.mxu0 %v1337
    %1368 = vmatpush.msra.mxu0 %v1336
    %1369 = vmatpush.msra.mxu0 %v1335
    %1370 = vmatpush.msra.mxu0 %v1334
    %1371 = vmatmul.f32.gmra.mxu0 %v1350
    %v1372 = vpop.f32.mrf.mxu0
    %v1373 = vadd.f32 %v1348, %v1372
    %1374 = vdwg.mxu0
    %v1375 = vxor.u32 %v1373, 2147483648
    %v1376 = vmul.f32 %v1375, 1.442695
    %v1377 = vpow.pop %v1376
    %v1378 = vadd.f32 %v1377, 1.0
    %v1379 = vrcp.pop %v1378
    %v1380 = vmul.f32 %v1378, %v1379
    %v1381 = vsub.f32 1.0, %v1380
    %v1382 = vmul.f32 %v1379, %v1381
    %v1383 = vadd.f32 %v1379, %v1382
    %vm1384 = vweird.f32 %v1378
    %vm1385 = vweird.f32 %v1379
    %vm1386 = vmor %vm1384, %vm1385
    %v1387 = vsel %vm1386, %v1379, %v1383
    %v1388 = vand.u32 2147483647, %v1378
    %vm1389 = vcmp.eq.f32.partialorder %v1388, 8.507059e+37
    %v1390 = vand.u32 %v1378, 2147483648
    %v1391 = vor.u32 1.1754944e-38, %v1390
    %v1392 = vsel %vm1389, %v1391, %v1387
    %v1393 = vmul.f32 1.0, %v1392
    %1395 = vrot.lane.b32.xlu0 %v1393, 127
    %v1396 = vpop.permute.xlu0 %1395
    %v1398 = vsub.f32 %v1393, %v1396
    %v1399 = vmul.f32 %v1398, 0.1
    %v1400 = vxor.u32 %v1399, 2147483648
    %v1401 = vmul.f32 %v1400, 1.442695
    %v1402 = vpow.pop %v1401
    %v1403 = vadd.f32 %v1402, 1.0
    %v1404 = vrcp.pop %v1403
    %v1405 = vmul.f32 %v1403, %v1404
    %v1406 = vsub.f32 1.0, %v1405
    %v1407 = vmul.f32 %v1404, %v1406
    %v1408 = vadd.f32 %v1404, %v1407
    %vm1409 = vweird.f32 %v1403
    %vm1410 = vweird.f32 %v1404
    %vm1411 = vmor %vm1409, %vm1410
    %v1412 = vsel %vm1411, %v1404, %v1408
    %v1413 = vand.u32 2147483647, %v1403
    %vm1414 = vcmp.eq.f32.partialorder %v1413, 8.507059e+37
    %v1415 = vand.u32 %v1403, 2147483648
    %v1416 = vor.u32 1.1754944e-38, %v1415
    %v1417 = vsel %vm1414, %v1416, %v1412
    %v1418 = vmul.f32 1.0, %v1417
    %v1419 = vsel %vm818, %v1418, 0.0
    %v1420 = vrot.slane %v1419, 4
    %v1421 = vadd.f32 %v1419, %v1420
    %v1422 = vrot.slane %v1421, 2
    %v1423 = vadd.f32 %v1421, %v1422
    %v1424 = vrot.slane %v1423, 1
    %v1425 = vadd.f32 %v1423, %v1424
    %v1426 = vmul.f32 %v1425, %v832
    %1428 = vset.pattern.permute.xlu0 0
    %1429 = vperm.xlu0 %1428, %v1426
    %v1430 = vpop.permute.xlu0 %1429
    %v1432 = vmul.f32 %v1430, %v991
    %v1433 = vsub.f32 1.0, %v1426
    %1435 = vset.pattern.permute.xlu0 0
    %1436 = vperm.xlu0 %1435, %v1433
    %v1437 = vpop.permute.xlu0 %1436
    %v1439 = vmul.f32 %v1437, %v202
    %v1440 = vadd.f32 %v1432, %v1439
    %v1442 = vsel %vm207, %v1440, 0
    %1444 = vmatpush.xpose.msra.mxu0 0.0
    %1445 = vmatpush.xpose.msra.mxu0 0.0
    %1446 = vmatpush.xpose.msra.mxu0 0.0
    %1447 = vmatpush.xpose.msra.mxu0 0.0
    %1448 = vmatpush.xpose.msra.mxu0 0.0
    %1449 = vmatpush.xpose.msra.mxu0 0.0
    %1450 = vmatpush.xpose.msra.mxu0 0.0
    %1451 = vmatpush.xpose.msra.mxu0 0.0
    %1452 = vmatpush.xpose.msra.mxu0 0.0
    %1453 = vmatpush.xpose.msra.mxu0 0.0
    %1454 = vmatpush.xpose.msra.mxu0 0.0
    %1455 = vmatpush.xpose.msra.mxu0 0.0
    %1456 = vmatpush.xpose.msra.mxu0 0.0
    %1457 = vmatpush.xpose.msra.mxu0 0.0
    %1458 = vmatpush.xpose.msra.mxu0 0.0
    %1459 = vmatpush.xpose.msra.mxu0 %v1442
    %1460 = vmatmul.f32.gmra.mxu0 %v1442
    %v1461 = vpop.f32.mrf.mxu0
    %v1462 = vadd.f32 0.0, %v1461
    %1463 = vdwg.mxu0
    %v1464 = vxor.u32 %v1462, 2147483648
    %v1465 = vmul.f32 %v1464, 1.442695
    %v1466 = vpow.pop %v1465
    %v1467 = vadd.f32 %v1466, 1.0
    %v1468 = vrcp.pop %v1467
    %v1469 = vmul.f32 %v1467, %v1468
    %v1470 = vsub.f32 1.0, %v1469
    %v1471 = vmul.f32 %v1468, %v1470
    %v1472 = vadd.f32 %v1468, %v1471
    %vm1473 = vweird.f32 %v1467
    %vm1474 = vweird.f32 %v1468
    %vm1475 = vmor %vm1473, %vm1474
    %v1476 = vsel %vm1475, %v1468, %v1472
    %v1477 = vand.u32 2147483647, %v1467
    %vm1478 = vcmp.eq.f32.partialorder %v1477, 8.507059e+37
    %v1479 = vand.u32 %v1467, 2147483648
    %v1480 = vor.u32 1.1754944e-38, %v1479
    %v1481 = vsel %vm1478, %v1480, %v1476
    %v1482 = vmul.f32 1.0, %v1481
    %v1483 = vadd.f32 %v1482, 1.0
    %v1484 = vsel %vm86, %v1483, %v1482
    %v1485 = vsel %vm207, %v1482, 0.0
    %1486 = vadd.xlane.f32.xlu0 %v1485
    %v1487 = vpop.xlane.xlu0 %1486
    %v1488 = vadd.f32 %v1487, 1.0
    %v1489 = vrsqrt.pop %v1488
    %v1490 = vmul.f32 %v1489, %v1488
    %v1491 = vmul.f32 %v1490, %v1489
    %v1492 = vmul.f32 0.5, %v1491
    %v1493 = vsub.f32 1.5, %v1492
    %v1494 = vmul.f32 %v1489, %v1493
    %vm1495 = vweird.f32 %v1488
    %vm1496 = vweird.f32 %v1489
    %vm1497 = vmor %vm1495, %vm1496
    %v1498 = vsel %vm1497, %v1489, %v1494
    %v1499 = vmul.f32 %v1498, %v1484
    %1500 = vxpose.xlu0.b32.start [1/16] %v1498, 128
    %1501 = vxpose.xlu0.b32.cont [2/16] 0.0, 128
    %1502 = vxpose.xlu0.b32.cont [3/16] 0.0, 128
    %1503 = vxpose.xlu0.b32.cont [4/16] 0.0, 128
    %1504 = vxpose.xlu0.b32.cont [5/16] 0.0, 128
    %1505 = vxpose.xlu0.b32.cont [6/16] 0.0, 128
    %1506 = vxpose.xlu0.b32.cont [7/16] 0.0, 128
    %1507 = vxpose.xlu0.b32.cont [8/16] 0.0, 128
    %1508 = vxpose.xlu0.b32.cont [9/16] 0.0, 128
    %1509 = vxpose.xlu0.b32.cont [10/16] 0.0, 128
    %1510 = vxpose.xlu0.b32.cont [11/16] 0.0, 128
    %1511 = vxpose.xlu0.b32.cont [12/16] 0.0, 128
    %1512 = vxpose.xlu0.b32.cont [13/16] 0.0, 128
    %1513 = vxpose.xlu0.b32.cont [14/16] 0.0, 128
    %1514 = vxpose.xlu0.b32.cont [15/16] 0.0, 128
    %1515 = vxpose.xlu0.b32.end [16/16] 0.0, 128
    %v1516 = vpop.trf.xlu0
    %v1517 = vpop.trf.xlu0
    %v1518 = vpop.trf.xlu0
    %v1519 = vpop.trf.xlu0
    %v1520 = vpop.trf.xlu0
    %v1521 = vpop.trf.xlu0
    %v1522 = vpop.trf.xlu0
    %v1523 = vpop.trf.xlu0
    %v1524 = vpop.trf.xlu0
    %v1525 = vpop.trf.xlu0
    %v1526 = vpop.trf.xlu0
    %v1527 = vpop.trf.xlu0
    %v1528 = vpop.trf.xlu0
    %v1529 = vpop.trf.xlu0
    %v1530 = vpop.trf.xlu0
    %v1531 = vpop.trf.xlu0
    %v1532 = vperm.slane %v1516, 0
    %v1533 = vmul.f32 %v1499, %v1532
    %v1534 = vmul.f32 %v1533, 0.5
    %v1535 = vadd.f32 %v1534, %v942
    %v1536 = vld [vmem:[#allocation7 + $0xaf0] sm:$0xff]
    %1537 = vmatpush.msra.mxu0 0.0
    %1538 = vmatpush.msra.mxu0 0.0
    %1539 = vmatpush.msra.mxu0 0.0
    %1540 = vmatpush.msra.mxu0 0.0
    %1541 = vmatpush.msra.mxu0 0.0
    %1542 = vmatpush.msra.mxu0 0.0
    %1543 = vmatpush.msra.mxu0 0.0
    %1544 = vmatpush.msra.mxu0 0.0
    %1545 = vmatpush.msra.mxu0 0.0
    %1546 = vmatpush.msra.mxu0 0.0
    %1547 = vmatpush.msra.mxu0 0.0
    %1548 = vmatpush.msra.mxu0 0.0
    %1549 = vmatpush.msra.mxu0 0.0
    %1550 = vmatpush.msra.mxu0 0.0
    %1551 = vmatpush.msra.mxu0 0.0
    %1552 = vmatpush.msra.mxu0 %v1536
    %1553 = vmatmul.f32.gmra.mxu0 %v1442
    %v1554 = vpop.f32.mrf.mxu0
    %v1555 = vadd.f32 0.0, %v1554
    %1556 = vdwg.mxu0
    %v1558 = vsel %vm207, %v1535, 0
    %1560 = vmatpush.msra.mxu0 0.0
    %1561 = vmatpush.msra.mxu0 0.0
    %1562 = vmatpush.msra.mxu0 0.0
    %1563 = vmatpush.msra.mxu0 0.0
    %1564 = vmatpush.msra.mxu0 0.0
    %1565 = vmatpush.msra.mxu0 0.0
    %1566 = vmatpush.msra.mxu0 0.0
    %1567 = vmatpush.msra.mxu0 0.0
    %1568 = vmatpush.msra.mxu0 0.0
    %1569 = vmatpush.msra.mxu0 0.0
    %1570 = vmatpush.msra.mxu0 0.0
    %1571 = vmatpush.msra.mxu0 0.0
    %1572 = vmatpush.msra.mxu0 0.0
    %1573 = vmatpush.msra.mxu0 0.0
    %1574 = vmatpush.msra.mxu0 0.0
    %1575 = vmatpush.msra.mxu0 %v1555
    %1576 = vmatmul.f32.gmra.mxu0 %v1558
    %v1577 = vpop.f32.mrf.mxu0
    %v1578 = vadd.f32 0.0, %v1577
    %1579 = vdwg.mxu0
    %vm1580 = vcmask 31744
    %v1581 = vsel %vm1580, %v1578, -inf
    %1582 = vmax.xlane.f32.xlu0 %v1581
    %v1583 = vpop.xlane.xlu0 %1582
    %v1584 = vsub.f32 %v1578, %v1583
    %v1585 = vmul.f32 %v1584, 1.442695
    %v1586 = vpow.pop %v1585
    %v1587 = vsel %vm1580, %v1586, 0.0
    %1588 = vadd.xlane.f32.xlu0 %v1587
    %v1589 = vpop.xlane.xlu0 %1588
    %v1590 = vrcp.pop %v1589
    %v1591 = vmul.f32 %v1589, %v1590
    %v1592 = vsub.f32 1.0, %v1591
    %v1593 = vmul.f32 %v1590, %v1592
    %v1594 = vadd.f32 %v1590, %v1593
    %vm1595 = vweird.f32 %v1589
    %vm1596 = vweird.f32 %v1590
    %vm1597 = vmor %vm1595, %vm1596
    %v1598 = vsel %vm1597, %v1590, %v1594
    %v1599 = vand.u32 2147483647, %v1589
    %vm1600 = vcmp.eq.f32.partialorder %v1599, 8.507059e+37
    %v1601 = vand.u32 %v1589, 2147483648
    %v1602 = vor.u32 1.1754944e-38, %v1601
    %v1603 = vsel %vm1600, %v1602, %v1598
    %v1604 = vmul.f32 %v1586, %v1603
    %v1605 = vld [vmem:[#allocation7 + $0xaf8] sm:$0xf]
    %v1607 = vsel %vm1580, %v1578, 0
    %v1610 = vsel %vm647, %v1605, 0
    %1612 = vmatpush.msra.mxu0 0.0
    %1613 = vmatpush.msra.mxu0 0.0
    %1614 = vmatpush.msra.mxu0 0.0
    %1615 = vmatpush.msra.mxu0 0.0
    %1616 = vmatpush.msra.mxu0 0.0
    %1617 = vmatpush.msra.mxu0 0.0
    %1618 = vmatpush.msra.mxu0 0.0
    %1619 = vmatpush.msra.mxu0 0.0
    %1620 = vmatpush.msra.mxu0 0.0
    %1621 = vmatpush.msra.mxu0 0.0
    %1622 = vmatpush.msra.mxu0 0.0
    %1623 = vmatpush.msra.mxu0 0.0
    %1624 = vmatpush.msra.mxu0 0.0
    %1625 = vmatpush.msra.mxu0 0.0
    %1626 = vmatpush.msra.mxu0 0.0
    %1627 = vmatpush.msra.mxu0 %v1610
    %1628 = vmatmul.f32.gmra.mxu0 %v1607
    %v1629 = vpop.f32.mrf.mxu0
    %v1630 = vadd.f32 0.0, %v1629
    %1631 = vdwg.mxu0
    %1632 = vmatpush.msra.mxu0 0.0
    %1633 = vmatpush.msra.mxu0 0.0
    %1634 = vmatpush.msra.mxu0 0.0
    %1635 = vmatpush.msra.mxu0 0.0
    %1636 = vmatpush.msra.mxu0 0.0
    %1637 = vmatpush.msra.mxu0 0.0
    %1638 = vmatpush.msra.mxu0 0.0
    %1639 = vmatpush.msra.mxu0 0.0
    %1640 = vmatpush.msra.mxu0 0.0
    %1641 = vmatpush.msra.mxu0 0.0
    %1642 = vmatpush.msra.mxu0 0.0
    %1643 = vmatpush.msra.mxu0 0.0
    %1644 = vmatpush.msra.mxu0 0.0
    %1645 = vmatpush.msra.mxu0 0.0
    %1646 = vmatpush.msra.mxu0 0.0
    %1647 = vmatpush.msra.mxu0 %v1630
    %1648 = vmatmul.f32.gmra.mxu0 %v1558
    %v1649 = vpop.f32.mrf.mxu0
    %v1650 = vadd.f32 0.0, %v1649
    %1651 = vdwg.mxu0
    %v1652 = vmax.f32 %v1650, 0.0
    %v1653 = vld [vmem:[#allocation8 + $0x1e0] sm:$0xff]
    %v1654 = vld [vmem:[#allocation8 + $0x1e8] sm:$0xff]
    %v1655 = vld [vmem:[#allocation8 + $0x1f0] sm:$0xff]
    %v1656 = vld [vmem:[#allocation8 + $0x1f8] sm:$0xff]
    %v1657 = vld [vmem:[#allocation8 + $0x200] sm:$0xff]
    %v1658 = vld [vmem:[#allocation8 + $0x208] sm:$0xff]
    %v1659 = vld [vmem:[#allocation8 + $0x210] sm:$0xff]
    %v1660 = vld [vmem:[#allocation8 + $0x218] sm:$0xff]
    %v1661 = vld [vmem:[#allocation8 + $0x1a0] sm:$0xff]
    %v1662 = vld [vmem:[#allocation8 + $0x1a8] sm:$0xff]
    %v1663 = vld [vmem:[#allocation8 + $0x1b0] sm:$0xff]
    %v1664 = vld [vmem:[#allocation8 + $0x1b8] sm:$0xff]
    %v1665 = vld [vmem:[#allocation8 + $0x1c0] sm:$0xff]
    %v1666 = vld [vmem:[#allocation8 + $0x1c8] sm:$0xff]
    %v1667 = vld [vmem:[#allocation8 + $0x1d0] sm:$0xff]
    %v1668 = vld [vmem:[#allocation8 + $0x1d8] sm:$0xff]
    %1669 = vmatpush.msra.mxu0 0.0
    %1670 = vmatpush.msra.mxu0 0.0
    %1671 = vmatpush.msra.mxu0 0.0
    %1672 = vmatpush.msra.mxu0 0.0
    %1673 = vmatpush.msra.mxu0 0.0
    %1674 = vmatpush.msra.mxu0 0.0
    %1675 = vmatpush.msra.mxu0 0.0
    %1676 = vmatpush.msra.mxu0 0.0
    %1677 = vmatpush.msra.mxu0 0.0
    %1678 = vmatpush.msra.mxu0 0.0
    %1679 = vmatpush.msra.mxu0 0.0
    %1680 = vmatpush.msra.mxu0 0.0
    %1681 = vmatpush.msra.mxu0 0.0
    %1682 = vmatpush.msra.mxu0 0.0
    %1683 = vmatpush.msra.mxu0 %v1665
    %1684 = vmatpush.msra.mxu0 %v1661
    %1685 = vmatmul.f32.gmra.mxu0 %v237
    %v1686 = vpop.f32.mrf.mxu0
    %v1687 = vadd.f32 0.0, %v1686
    %1688 = vdwg.mxu0
    %1689 = vmatpush.msra.mxu0 0.0
    %1690 = vmatpush.msra.mxu0 0.0
    %1691 = vmatpush.msra.mxu0 0.0
    %1692 = vmatpush.msra.mxu0 0.0
    %1693 = vmatpush.msra.mxu0 0.0
    %1694 = vmatpush.msra.mxu0 0.0
    %1695 = vmatpush.msra.mxu0 0.0
    %1696 = vmatpush.msra.mxu0 0.0
    %1697 = vmatpush.msra.mxu0 0.0
    %1698 = vmatpush.msra.mxu0 0.0
    %1699 = vmatpush.msra.mxu0 0.0
    %1700 = vmatpush.msra.mxu0 0.0
    %1701 = vmatpush.msra.mxu0 0.0
    %1702 = vmatpush.msra.mxu0 0.0
    %1703 = vmatpush.msra.mxu0 %v1666
    %1704 = vmatpush.msra.mxu0 %v1662
    %1705 = vmatmul.f32.gmra.mxu0 %v237
    %v1706 = vpop.f32.mrf.mxu0
    %v1707 = vadd.f32 0.0, %v1706
    %1708 = vdwg.mxu0
    %1709 = vmatpush.msra.mxu0 0.0
    %1710 = vmatpush.msra.mxu0 0.0
    %1711 = vmatpush.msra.mxu0 0.0
    %1712 = vmatpush.msra.mxu0 0.0
    %1713 = vmatpush.msra.mxu0 0.0
    %1714 = vmatpush.msra.mxu0 0.0
    %1715 = vmatpush.msra.mxu0 0.0
    %1716 = vmatpush.msra.mxu0 0.0
    %1717 = vmatpush.msra.mxu0 0.0
    %1718 = vmatpush.msra.mxu0 0.0
    %1719 = vmatpush.msra.mxu0 0.0
    %1720 = vmatpush.msra.mxu0 0.0
    %1721 = vmatpush.msra.mxu0 0.0
    %1722 = vmatpush.msra.mxu0 0.0
    %1723 = vmatpush.msra.mxu0 %v1667
    %1724 = vmatpush.msra.mxu0 %v1663
    %1725 = vmatmul.f32.gmra.mxu0 %v237
    %v1726 = vpop.f32.mrf.mxu0
    %v1727 = vadd.f32 0.0, %v1726
    %1728 = vdwg.mxu0
    %1729 = vmatpush.msra.mxu0 0.0
    %1730 = vmatpush.msra.mxu0 0.0
    %1731 = vmatpush.msra.mxu0 0.0
    %1732 = vmatpush.msra.mxu0 0.0
    %1733 = vmatpush.msra.mxu0 0.0
    %1734 = vmatpush.msra.mxu0 0.0
    %1735 = vmatpush.msra.mxu0 0.0
    %1736 = vmatpush.msra.mxu0 0.0
    %1737 = vmatpush.msra.mxu0 0.0
    %1738 = vmatpush.msra.mxu0 0.0
    %1739 = vmatpush.msra.mxu0 0.0
    %1740 = vmatpush.msra.mxu0 0.0
    %1741 = vmatpush.msra.mxu0 0.0
    %1742 = vmatpush.msra.mxu0 0.0
    %1743 = vmatpush.msra.mxu0 %v1668
    %1744 = vmatpush.msra.mxu0 %v1664
    %1745 = vmatmul.f32.gmra.mxu0 %v237
    %v1746 = vpop.f32.mrf.mxu0
    %v1747 = vadd.f32 0.0, %v1746
    %1748 = vdwg.mxu0
    %v1750 = vsel %vm91, %v1652, 0
    %1752 = vmatpush.msra.mxu0 0.0
    %1753 = vmatpush.msra.mxu0 0.0
    %1754 = vmatpush.msra.mxu0 0.0
    %1755 = vmatpush.msra.mxu0 0.0
    %1756 = vmatpush.msra.mxu0 0.0
    %1757 = vmatpush.msra.mxu0 0.0
    %1758 = vmatpush.msra.mxu0 0.0
    %1759 = vmatpush.msra.mxu0 0.0
    %1760 = vmatpush.msra.mxu0 0.0
    %1761 = vmatpush.msra.mxu0 0.0
    %1762 = vmatpush.msra.mxu0 0.0
    %1763 = vmatpush.msra.mxu0 0.0
    %1764 = vmatpush.msra.mxu0 0.0
    %1765 = vmatpush.msra.mxu0 0.0
    %1766 = vmatpush.msra.mxu0 %v1657
    %1767 = vmatpush.msra.mxu0 %v1653
    %1768 = vmatmul.f32.gmra.mxu0 %v1750
    %v1769 = vpop.f32.mrf.mxu0
    %v1770 = vadd.f32 %v1687, %v1769
    %1771 = vdwg.mxu0
    %1772 = vmatpush.msra.mxu0 0.0
    %1773 = vmatpush.msra.mxu0 0.0
    %1774 = vmatpush.msra.mxu0 0.0
    %1775 = vmatpush.msra.mxu0 0.0
    %1776 = vmatpush.msra.mxu0 0.0
    %1777 = vmatpush.msra.mxu0 0.0
    %1778 = vmatpush.msra.mxu0 0.0
    %1779 = vmatpush.msra.mxu0 0.0
    %1780 = vmatpush.msra.mxu0 0.0
    %1781 = vmatpush.msra.mxu0 0.0
    %1782 = vmatpush.msra.mxu0 0.0
    %1783 = vmatpush.msra.mxu0 0.0
    %1784 = vmatpush.msra.mxu0 0.0
    %1785 = vmatpush.msra.mxu0 0.0
    %1786 = vmatpush.msra.mxu0 %v1658
    %1787 = vmatpush.msra.mxu0 %v1654
    %1788 = vmatmul.f32.gmra.mxu0 %v1750
    %v1789 = vpop.f32.mrf.mxu0
    %v1790 = vadd.f32 %v1707, %v1789
    %1791 = vdwg.mxu0
    %1792 = vmatpush.msra.mxu0 0.0
    %1793 = vmatpush.msra.mxu0 0.0
    %1794 = vmatpush.msra.mxu0 0.0
    %1795 = vmatpush.msra.mxu0 0.0
    %1796 = vmatpush.msra.mxu0 0.0
    %1797 = vmatpush.msra.mxu0 0.0
    %1798 = vmatpush.msra.mxu0 0.0
    %1799 = vmatpush.msra.mxu0 0.0
    %1800 = vmatpush.msra.mxu0 0.0
    %1801 = vmatpush.msra.mxu0 0.0
    %1802 = vmatpush.msra.mxu0 0.0
    %1803 = vmatpush.msra.mxu0 0.0
    %1804 = vmatpush.msra.mxu0 0.0
    %1805 = vmatpush.msra.mxu0 0.0
    %1806 = vmatpush.msra.mxu0 %v1659
    %1807 = vmatpush.msra.mxu0 %v1655
    %1808 = vmatmul.f32.gmra.mxu0 %v1750
    %v1809 = vpop.f32.mrf.mxu0
    %v1810 = vadd.f32 %v1727, %v1809
    %1811 = vdwg.mxu0
    %1812 = vmatpush.msra.mxu0 0.0
    %1813 = vmatpush.msra.mxu0 0.0
    %1814 = vmatpush.msra.mxu0 0.0
    %1815 = vmatpush.msra.mxu0 0.0
    %1816 = vmatpush.msra.mxu0 0.0
    %1817 = vmatpush.msra.mxu0 0.0
    %1818 = vmatpush.msra.mxu0 0.0
    %1819 = vmatpush.msra.mxu0 0.0
    %1820 = vmatpush.msra.mxu0 0.0
    %1821 = vmatpush.msra.mxu0 0.0
    %1822 = vmatpush.msra.mxu0 0.0
    %1823 = vmatpush.msra.mxu0 0.0
    %1824 = vmatpush.msra.mxu0 0.0
    %1825 = vmatpush.msra.mxu0 0.0
    %1826 = vmatpush.msra.mxu0 %v1660
    %1827 = vmatpush.msra.mxu0 %v1656
    %1828 = vmatmul.f32.gmra.mxu0 %v1750
    %v1829 = vpop.f32.mrf.mxu0
    %v1830 = vadd.f32 %v1747, %v1829
    %1831 = vdwg.mxu0
    %s1832 = scalar_lea.vmem [#allocation8], 384
    %v1833 = vld [vmem:[%s1832] ss:$8 sm:$0xf]
    %v1835 = vperm.slane %v1833, 0
    %v1836 = vperm.slane %v1833, 1
    %v1837 = vperm.slane %v1833, 2
    %v1838 = vperm.slane %v1833, 3
    %v1843 = vadd.f32 %v1770, %v1835
    %v1844 = vadd.f32 %v1790, %v1836
    %v1845 = vadd.f32 %v1810, %v1837
    %v1846 = vadd.f32 %v1830, %v1838
    %v1847 = vmax.f32 %v1843, 0.0
    %v1848 = vmax.f32 %v1844, 0.0
    %v1849 = vmax.f32 %v1845, 0.0
    %v1850 = vmax.f32 %v1846, 0.0
    %v1851 = vld [vmem:[#allocation7 + $0x5f0] sm:$0xff]
    %v1852 = vld [vmem:[#allocation7 + $0x5f8] sm:$0xff]
    %v1853 = vld [vmem:[#allocation7 + $0x600] sm:$0xff]
    %v1854 = vld [vmem:[#allocation7 + $0x608] sm:$0xff]
    %v1855 = vld [vmem:[#allocation7 + $0x610] sm:$0xff]
    %v1856 = vld [vmem:[#allocation7 + $0x618] sm:$0xff]
    %v1857 = vld [vmem:[#allocation7 + $0x620] sm:$0xff]
    %v1858 = vld [vmem:[#allocation7 + $0x628] sm:$0xff]
    %v1859 = vld [vmem:[#allocation7 + $0x630] sm:$0xff]
    %v1860 = vld [vmem:[#allocation7 + $0x638] sm:$0xff]
    %v1861 = vld [vmem:[#allocation7 + $0x640] sm:$0xff]
    %v1862 = vld [vmem:[#allocation7 + $0x648] sm:$0xff]
    %v1863 = vld [vmem:[#allocation7 + $0x650] sm:$0xff]
    %v1864 = vld [vmem:[#allocation7 + $0x658] sm:$0xff]
    %v1865 = vld [vmem:[#allocation7 + $0x660] sm:$0xff]
    %v1866 = vld [vmem:[#allocation7 + $0x668] sm:$0xff]
    %v1867 = vld [vmem:[#allocation7 + $0x670] sm:$0xff]
    %v1868 = vld [vmem:[#allocation7 + $0x678] sm:$0xff]
    %v1869 = vld [vmem:[#allocation7 + $0x680] sm:$0xff]
    %v1870 = vld [vmem:[#allocation7 + $0x688] sm:$0xff]
    %v1871 = vld [vmem:[#allocation7 + $0x690] sm:$0xff]
    %v1872 = vld [vmem:[#allocation7 + $0x698] sm:$0xff]
    %v1873 = vld [vmem:[#allocation7 + $0x6a0] sm:$0xff]
    %v1874 = vld [vmem:[#allocation7 + $0x6a8] sm:$0xff]
    %v1875 = vld [vmem:[#allocation7 + $0x6b0] sm:$0xff]
    %v1876 = vld [vmem:[#allocation7 + $0x6b8] sm:$0xff]
    %v1877 = vld [vmem:[#allocation7 + $0x6c0] sm:$0xff]
    %v1878 = vld [vmem:[#allocation7 + $0x6c8] sm:$0xff]
    %v1879 = vld [vmem:[#allocation7 + $0x6d0] sm:$0xff]
    %v1880 = vld [vmem:[#allocation7 + $0x6d8] sm:$0xff]
    %v1881 = vld [vmem:[#allocation7 + $0x6e0] sm:$0xff]
    %v1882 = vld [vmem:[#allocation7 + $0x6e8] sm:$0xff]
    %v1883 = vld [vmem:[#allocation7 + $0x6f0] sm:$0xff]
    %v1884 = vld [vmem:[#allocation7 + $0x6f8] sm:$0xff]
    %v1885 = vld [vmem:[#allocation7 + $0x700] sm:$0xff]
    %v1886 = vld [vmem:[#allocation7 + $0x708] sm:$0xff]
    %v1887 = vld [vmem:[#allocation7 + $0x710] sm:$0xff]
    %v1888 = vld [vmem:[#allocation7 + $0x718] sm:$0xff]
    %v1889 = vld [vmem:[#allocation7 + $0x720] sm:$0xff]
    %v1890 = vld [vmem:[#allocation7 + $0x728] sm:$0xff]
    %v1891 = vld [vmem:[#allocation7 + $0x730] sm:$0xff]
    %v1892 = vld [vmem:[#allocation7 + $0x738] sm:$0xff]
    %v1893 = vld [vmem:[#allocation7 + $0x740] sm:$0xff]
    %v1894 = vld [vmem:[#allocation7 + $0x748] sm:$0xff]
    %v1895 = vld [vmem:[#allocation7 + $0x750] sm:$0xff]
    %v1896 = vld [vmem:[#allocation7 + $0x758] sm:$0xff]
    %v1897 = vld [vmem:[#allocation7 + $0x760] sm:$0xff]
    %v1898 = vld [vmem:[#allocation7 + $0x768] sm:$0xff]
    %v1899 = vld [vmem:[#allocation7 + $0x770] sm:$0xff]
    %v1900 = vld [vmem:[#allocation7 + $0x778] sm:$0xff]
    %v1901 = vld [vmem:[#allocation7 + $0x780] sm:$0xff]
    %v1902 = vld [vmem:[#allocation7 + $0x788] sm:$0xff]
    %v1903 = vld [vmem:[#allocation7 + $0x790] sm:$0xff]
    %v1904 = vld [vmem:[#allocation7 + $0x798] sm:$0xff]
    %v1905 = vld [vmem:[#allocation7 + $0x7a0] sm:$0xff]
    %v1906 = vld [vmem:[#allocation7 + $0x7a8] sm:$0xff]
    %v1907 = vld [vmem:[#allocation7 + $0x7b0] sm:$0xff]
    %v1908 = vld [vmem:[#allocation7 + $0x7b8] sm:$0xff]
    %v1909 = vld [vmem:[#allocation7 + $0x7c0] sm:$0xff]
    %v1910 = vld [vmem:[#allocation7 + $0x7c8] sm:$0xff]
    %v1911 = vld [vmem:[#allocation7 + $0x7d0] sm:$0xff]
    %v1912 = vld [vmem:[#allocation7 + $0x7d8] sm:$0xff]
    %v1913 = vld [vmem:[#allocation7 + $0x7e0] sm:$0xf]
    %v1914 = vld [vmem:[#allocation7 + $0x5e0] sm:$0x1]
    %v1915 = vperm.slane %v1914, 0
    %v1917 = vsel %vm643, %v1850, 0
    %v1920 = vsel %vm647, %v1913, 0
    %1922 = vmatpush.msra.mxu0 %v1866
    %1923 = vmatpush.msra.mxu0 %v1865
    %1924 = vmatpush.msra.mxu0 %v1864
    %1925 = vmatpush.msra.mxu0 %v1863
    %1926 = vmatpush.msra.mxu0 %v1862
    %1927 = vmatpush.msra.mxu0 %v1861
    %1928 = vmatpush.msra.mxu0 %v1860
    %1929 = vmatpush.msra.mxu0 %v1859
    %1930 = vmatpush.msra.mxu0 %v1858
    %1931 = vmatpush.msra.mxu0 %v1857
    %1932 = vmatpush.msra.mxu0 %v1856
    %1933 = vmatpush.msra.mxu0 %v1855
    %1934 = vmatpush.msra.mxu0 %v1854
    %1935 = vmatpush.msra.mxu0 %v1853
    %1936 = vmatpush.msra.mxu0 %v1852
    %1937 = vmatpush.msra.mxu0 %v1851
    %1938 = vmatmul.f32.gmra.mxu0 %v1847
    %v1939 = vpop.f32.mrf.mxu0
    %v1940 = vadd.f32 %v1915, %v1939
    %1941 = vdwg.mxu0
    %1942 = vmatpush.msra.mxu0 %v1882
    %1943 = vmatpush.msra.mxu0 %v1881
    %1944 = vmatpush.msra.mxu0 %v1880
    %1945 = vmatpush.msra.mxu0 %v1879
    %1946 = vmatpush.msra.mxu0 %v1878
    %1947 = vmatpush.msra.mxu0 %v1877
    %1948 = vmatpush.msra.mxu0 %v1876
    %1949 = vmatpush.msra.mxu0 %v1875
    %1950 = vmatpush.msra.mxu0 %v1874
    %1951 = vmatpush.msra.mxu0 %v1873
    %1952 = vmatpush.msra.mxu0 %v1872
    %1953 = vmatpush.msra.mxu0 %v1871
    %1954 = vmatpush.msra.mxu0 %v1870
    %1955 = vmatpush.msra.mxu0 %v1869
    %1956 = vmatpush.msra.mxu0 %v1868
    %1957 = vmatpush.msra.mxu0 %v1867
    %1958 = vmatmul.f32.gmra.mxu0 %v1848
    %v1959 = vpop.f32.mrf.mxu0
    %v1960 = vadd.f32 %v1940, %v1959
    %1961 = vdwg.mxu0
    %1962 = vmatpush.msra.mxu0 %v1898
    %1963 = vmatpush.msra.mxu0 %v1897
    %1964 = vmatpush.msra.mxu0 %v1896
    %1965 = vmatpush.msra.mxu0 %v1895
    %1966 = vmatpush.msra.mxu0 %v1894
    %1967 = vmatpush.msra.mxu0 %v1893
    %1968 = vmatpush.msra.mxu0 %v1892
    %1969 = vmatpush.msra.mxu0 %v1891
    %1970 = vmatpush.msra.mxu0 %v1890
    %1971 = vmatpush.msra.mxu0 %v1889
    %1972 = vmatpush.msra.mxu0 %v1888
    %1973 = vmatpush.msra.mxu0 %v1887
    %1974 = vmatpush.msra.mxu0 %v1886
    %1975 = vmatpush.msra.mxu0 %v1885
    %1976 = vmatpush.msra.mxu0 %v1884
    %1977 = vmatpush.msra.mxu0 %v1883
    %1978 = vmatmul.f32.gmra.mxu0 %v1849
    %v1979 = vpop.f32.mrf.mxu0
    %v1980 = vadd.f32 %v1960, %v1979
    %1981 = vdwg.mxu0
    %1982 = vmatpush.msra.mxu0 0.0
    %1983 = vmatpush.msra.mxu0 %v1920
    %1984 = vmatpush.msra.mxu0 %v1912
    %1985 = vmatpush.msra.mxu0 %v1911
    %1986 = vmatpush.msra.mxu0 %v1910
    %1987 = vmatpush.msra.mxu0 %v1909
    %1988 = vmatpush.msra.mxu0 %v1908
    %1989 = vmatpush.msra.mxu0 %v1907
    %1990 = vmatpush.msra.mxu0 %v1906
    %1991 = vmatpush.msra.mxu0 %v1905
    %1992 = vmatpush.msra.mxu0 %v1904
    %1993 = vmatpush.msra.mxu0 %v1903
    %1994 = vmatpush.msra.mxu0 %v1902
    %1995 = vmatpush.msra.mxu0 %v1901
    %1996 = vmatpush.msra.mxu0 %v1900
    %1997 = vmatpush.msra.mxu0 %v1899
    %1998 = vmatmul.f32.gmra.mxu0 %v1917
    %v1999 = vpop.f32.mrf.mxu0
    %v2000 = vadd.f32 %v1980, %v1999
    %2001 = vdwg.mxu0
    %v2002 = vmax.f32 %v2000, 0.0
    %v2003 = vld [vmem:[#allocation7 + $0x7e8] sm:$0xff]
    %v2004 = vld [vmem:[#allocation7 + $0x7f0] sm:$0xff]
    %v2005 = vld [vmem:[#allocation7 + $0x7f8] sm:$0xff]
    %v2006 = vld [vmem:[#allocation7 + $0x800] sm:$0xff]
    %v2007 = vld [vmem:[#allocation7 + $0x808] sm:$0xff]
    %v2008 = vld [vmem:[#allocation7 + $0x810] sm:$0xff]
    %v2009 = vld [vmem:[#allocation7 + $0x818] sm:$0xff]
    %v2010 = vld [vmem:[#allocation7 + $0x820] sm:$0xff]
    %v2011 = vld [vmem:[#allocation7 + $0x828] sm:$0xff]
    %v2012 = vld [vmem:[#allocation7 + $0x830] sm:$0xff]
    %v2013 = vld [vmem:[#allocation7 + $0x838] sm:$0xff]
    %v2014 = vld [vmem:[#allocation7 + $0x840] sm:$0xff]
    %v2015 = vld [vmem:[#allocation7 + $0x848] sm:$0xf]
    %v2016 = vld [vmem:[#allocation7 + $0x5e8] sm:$0x1]
    %v2017 = vperm.slane %v2016, 0
    %v2019 = vsel %vm747, %v2002, 0
    %v2022 = vsel %vm647, %v2015, 0
    %2024 = vmatpush.msra.mxu0 0.0
    %2025 = vmatpush.msra.mxu0 0.0
    %2026 = vmatpush.msra.mxu0 0.0
    %2027 = vmatpush.msra.mxu0 %v2022
    %2028 = vmatpush.msra.mxu0 %v2014
    %2029 = vmatpush.msra.mxu0 %v2013
    %2030 = vmatpush.msra.mxu0 %v2012
    %2031 = vmatpush.msra.mxu0 %v2011
    %2032 = vmatpush.msra.mxu0 %v2010
    %2033 = vmatpush.msra.mxu0 %v2009
    %2034 = vmatpush.msra.mxu0 %v2008
    %2035 = vmatpush.msra.mxu0 %v2007
    %2036 = vmatpush.msra.mxu0 %v2006
    %2037 = vmatpush.msra.mxu0 %v2005
    %2038 = vmatpush.msra.mxu0 %v2004
    %2039 = vmatpush.msra.mxu0 %v2003
    %2040 = vmatmul.f32.gmra.mxu0 %v2019
    %v2041 = vpop.f32.mrf.mxu0
    %v2042 = vadd.f32 %v2017, %v2041
    %2043 = vdwg.mxu0
    %v2044 = vxor.u32 %v2042, 2147483648
    %v2045 = vmul.f32 %v2044, 1.442695
    %v2046 = vpow.pop %v2045
    %v2047 = vadd.f32 %v2046, 1.0
    %v2048 = vrcp.pop %v2047
    %v2049 = vmul.f32 %v2047, %v2048
    %v2050 = vsub.f32 1.0, %v2049
    %v2051 = vmul.f32 %v2048, %v2050
    %v2052 = vadd.f32 %v2048, %v2051
    %vm2053 = vweird.f32 %v2047
    %vm2054 = vweird.f32 %v2048
    %vm2055 = vmor %vm2053, %vm2054
    %v2056 = vsel %vm2055, %v2048, %v2052
    %v2057 = vand.u32 2147483647, %v2047
    %vm2058 = vcmp.eq.f32.partialorder %v2057, 8.507059e+37
    %v2059 = vand.u32 %v2047, 2147483648
    %v2060 = vor.u32 1.1754944e-38, %v2059
    %v2061 = vsel %vm2058, %v2060, %v2056
    %v2062 = vmul.f32 1.0, %v2061
    %2064 = vrot.lane.b32.xlu0 %v2062, 127
    %v2065 = vpop.permute.xlu0 %2064
    %v2067 = vsub.f32 %v2062, %v2065
    %v2068 = vmul.f32 %v2067, 0.1
    %v2069 = vxor.u32 %v2068, 2147483648
    %v2070 = vmul.f32 %v2069, 1.442695
    %v2071 = vpow.pop %v2070
    %v2072 = vadd.f32 %v2071, 1.0
    %v2073 = vrcp.pop %v2072
    %v2074 = vmul.f32 %v2072, %v2073
    %v2075 = vsub.f32 1.0, %v2074
    %v2076 = vmul.f32 %v2073, %v2075
    %v2077 = vadd.f32 %v2073, %v2076
    %vm2078 = vweird.f32 %v2072
    %vm2079 = vweird.f32 %v2073
    %vm2080 = vmor %vm2078, %vm2079
    %v2081 = vsel %vm2080, %v2073, %v2077
    %v2082 = vand.u32 2147483647, %v2072
    %vm2083 = vcmp.eq.f32.partialorder %v2082, 8.507059e+37
    %v2084 = vand.u32 %v2072, 2147483648
    %v2085 = vor.u32 1.1754944e-38, %v2084
    %v2086 = vsel %vm2083, %v2085, %v2081
    %v2087 = vmul.f32 1.0, %v2086
    %v2088 = vsel %vm818, %v2087, 0.0
    %v2089 = vrot.slane %v2088, 4
    %v2090 = vadd.f32 %v2088, %v2089
    %v2091 = vrot.slane %v2090, 2
    %v2092 = vadd.f32 %v2090, %v2091
    %v2093 = vrot.slane %v2092, 1
    %v2094 = vadd.f32 %v2092, %v2093
    %v2095 = vmul.f32 %v2094, %v832
    %2097 = vset.pattern.permute.xlu0 0
    %2098 = vperm.xlu0 %2097, %v2095
    %v2099 = vpop.permute.xlu0 %2098
    %v2101 = vmul.f32 %v2099, %v1652
    %v2102 = vsub.f32 1.0, %v2095
    %2104 = vset.pattern.permute.xlu0 0
    %2105 = vperm.xlu0 %2104, %v2102
    %v2106 = vpop.permute.xlu0 %2105
    %v2108 = vmul.f32 %v2106, %v231
    %v2109 = vadd.f32 %v2101, %v2108
    %v2110 = vld [vmem:[#allocation7 + $0xb00] sm:$0xff]
    %v2111 = vld [vmem:[#allocation7 + $0xb08] sm:$0xff]
    %v2113 = vsel %vm91, %v2109, 0
    %2115 = vmatpush.msra.mxu0 0.0
    %2116 = vmatpush.msra.mxu0 0.0
    %2117 = vmatpush.msra.mxu0 0.0
    %2118 = vmatpush.msra.mxu0 0.0
    %2119 = vmatpush.msra.mxu0 0.0
    %2120 = vmatpush.msra.mxu0 0.0
    %2121 = vmatpush.msra.mxu0 0.0
    %2122 = vmatpush.msra.mxu0 0.0
    %2123 = vmatpush.msra.mxu0 0.0
    %2124 = vmatpush.msra.mxu0 0.0
    %2125 = vmatpush.msra.mxu0 0.0
    %2126 = vmatpush.msra.mxu0 0.0
    %2127 = vmatpush.msra.mxu0 0.0
    %2128 = vmatpush.msra.mxu0 0.0
    %2129 = vmatpush.msra.mxu0 %v2111
    %2130 = vmatpush.msra.mxu0 %v2110
    %2131 = vmatmul.f32.gmra.mxu0 %v2113
    %v2132 = vpop.f32.mrf.mxu0
    %v2133 = vadd.f32 0.0, %v2132
    %2134 = vdwg.mxu0
    %2135 = vmatpush.msra.mxu0 0.0
    %2136 = vmatpush.msra.mxu0 0.0
    %2137 = vmatpush.msra.mxu0 0.0
    %2138 = vmatpush.msra.mxu0 0.0
    %2139 = vmatpush.msra.mxu0 0.0
    %2140 = vmatpush.msra.mxu0 0.0
    %2141 = vmatpush.msra.mxu0 0.0
    %2142 = vmatpush.msra.mxu0 0.0
    %2143 = vmatpush.msra.mxu0 0.0
    %2144 = vmatpush.msra.mxu0 0.0
    %2145 = vmatpush.msra.mxu0 0.0
    %2146 = vmatpush.msra.mxu0 0.0
    %2147 = vmatpush.msra.mxu0 0.0
    %2148 = vmatpush.msra.mxu0 0.0
    %2149 = vmatpush.msra.mxu0 0.0
    %2150 = vmatpush.msra.mxu0 %v2133
    %2151 = vmatmul.f32.gmra.mxu0 %v1558
    %v2152 = vpop.f32.mrf.mxu0
    %v2153 = vadd.f32 0.0, %v2152
    %2154 = vdwg.mxu0
    %v2155 = vmax.f32 %v2153, 0.0
    %v2156 = vld [vmem:[#allocation8 + $0x2c0] sm:$0xff]
    %v2157 = vld [vmem:[#allocation8 + $0x2c8] sm:$0xff]
    %v2158 = vld [vmem:[#allocation8 + $0x2d0] sm:$0xff]
    %v2159 = vld [vmem:[#allocation8 + $0x2d8] sm:$0xff]
    %v2160 = vld [vmem:[#allocation8 + $0x2e0] sm:$0xff]
    %v2161 = vld [vmem:[#allocation8 + $0x2e8] sm:$0xff]
    %v2162 = vld [vmem:[#allocation8 + $0x2f0] sm:$0xff]
    %v2163 = vld [vmem:[#allocation8 + $0x2f8] sm:$0xff]
    %v2164 = vld [vmem:[#allocation8 + $0x300] sm:$0xff]
    %v2165 = vld [vmem:[#allocation8 + $0x308] sm:$0xff]
    %v2166 = vld [vmem:[#allocation8 + $0x310] sm:$0xff]
    %v2167 = vld [vmem:[#allocation8 + $0x318] sm:$0xff]
    %v2168 = vld [vmem:[#allocation8 + $0x320] sm:$0xff]
    %v2169 = vld [vmem:[#allocation8 + $0x328] sm:$0xff]
    %v2170 = vld [vmem:[#allocation8 + $0x330] sm:$0xff]
    %v2171 = vld [vmem:[#allocation8 + $0x338] sm:$0xff]
    %v2172 = vld [vmem:[#allocation8 + $0x240] sm:$0xff]
    %v2173 = vld [vmem:[#allocation8 + $0x248] sm:$0xff]
    %v2174 = vld [vmem:[#allocation8 + $0x250] sm:$0xff]
    %v2175 = vld [vmem:[#allocation8 + $0x258] sm:$0xff]
    %v2176 = vld [vmem:[#allocation8 + $0x260] sm:$0xff]
    %v2177 = vld [vmem:[#allocation8 + $0x268] sm:$0xff]
    %v2178 = vld [vmem:[#allocation8 + $0x270] sm:$0xff]
    %v2179 = vld [vmem:[#allocation8 + $0x278] sm:$0xff]
    %v2180 = vld [vmem:[#allocation8 + $0x280] sm:$0xff]
    %v2181 = vld [vmem:[#allocation8 + $0x288] sm:$0xff]
    %v2182 = vld [vmem:[#allocation8 + $0x290] sm:$0xff]
    %v2183 = vld [vmem:[#allocation8 + $0x298] sm:$0xff]
    %v2184 = vld [vmem:[#allocation8 + $0x2a0] sm:$0xff]
    %v2185 = vld [vmem:[#allocation8 + $0x2a8] sm:$0xff]
    %v2186 = vld [vmem:[#allocation8 + $0x2b0] sm:$0xff]
    %v2187 = vld [vmem:[#allocation8 + $0x2b8] sm:$0xff]
    %2188 = vmatpush.msra.mxu0 0.0
    %2189 = vmatpush.msra.mxu0 0.0
    %2190 = vmatpush.msra.mxu0 0.0
    %2191 = vmatpush.msra.mxu0 0.0
    %2192 = vmatpush.msra.mxu0 0.0
    %2193 = vmatpush.msra.mxu0 0.0
    %2194 = vmatpush.msra.mxu0 0.0
    %2195 = vmatpush.msra.mxu0 0.0
    %2196 = vmatpush.msra.mxu0 0.0
    %2197 = vmatpush.msra.mxu0 0.0
    %2198 = vmatpush.msra.mxu0 0.0
    %2199 = vmatpush.msra.mxu0 0.0
    %2200 = vmatpush.msra.mxu0 %v2184
    %2201 = vmatpush.msra.mxu0 %v2180
    %2202 = vmatpush.msra.mxu0 %v2176
    %2203 = vmatpush.msra.mxu0 %v2172
    %2204 = vmatmul.f32.gmra.mxu0 %v267
    %v2205 = vpop.f32.mrf.mxu0
    %v2206 = vadd.f32 0.0, %v2205
    %2207 = vdwg.mxu0
    %2208 = vmatpush.msra.mxu0 0.0
    %2209 = vmatpush.msra.mxu0 0.0
    %2210 = vmatpush.msra.mxu0 0.0
    %2211 = vmatpush.msra.mxu0 0.0
    %2212 = vmatpush.msra.mxu0 0.0
    %2213 = vmatpush.msra.mxu0 0.0
    %2214 = vmatpush.msra.mxu0 0.0
    %2215 = vmatpush.msra.mxu0 0.0
    %2216 = vmatpush.msra.mxu0 0.0
    %2217 = vmatpush.msra.mxu0 0.0
    %2218 = vmatpush.msra.mxu0 0.0
    %2219 = vmatpush.msra.mxu0 0.0
    %2220 = vmatpush.msra.mxu0 %v2185
    %2221 = vmatpush.msra.mxu0 %v2181
    %2222 = vmatpush.msra.mxu0 %v2177
    %2223 = vmatpush.msra.mxu0 %v2173
    %2224 = vmatmul.f32.gmra.mxu0 %v267
    %v2225 = vpop.f32.mrf.mxu0
    %v2226 = vadd.f32 0.0, %v2225
    %2227 = vdwg.mxu0
    %2228 = vmatpush.msra.mxu0 0.0
    %2229 = vmatpush.msra.mxu0 0.0
    %2230 = vmatpush.msra.mxu0 0.0
    %2231 = vmatpush.msra.mxu0 0.0
    %2232 = vmatpush.msra.mxu0 0.0
    %2233 = vmatpush.msra.mxu0 0.0
    %2234 = vmatpush.msra.mxu0 0.0
    %2235 = vmatpush.msra.mxu0 0.0
    %2236 = vmatpush.msra.mxu0 0.0
    %2237 = vmatpush.msra.mxu0 0.0
    %2238 = vmatpush.msra.mxu0 0.0
    %2239 = vmatpush.msra.mxu0 0.0
    %2240 = vmatpush.msra.mxu0 %v2186
    %2241 = vmatpush.msra.mxu0 %v2182
    %2242 = vmatpush.msra.mxu0 %v2178
    %2243 = vmatpush.msra.mxu0 %v2174
    %2244 = vmatmul.f32.gmra.mxu0 %v267
    %v2245 = vpop.f32.mrf.mxu0
    %v2246 = vadd.f32 0.0, %v2245
    %2247 = vdwg.mxu0
    %2248 = vmatpush.msra.mxu0 0.0
    %2249 = vmatpush.msra.mxu0 0.0
    %2250 = vmatpush.msra.mxu0 0.0
    %2251 = vmatpush.msra.mxu0 0.0
    %2252 = vmatpush.msra.mxu0 0.0
    %2253 = vmatpush.msra.mxu0 0.0
    %2254 = vmatpush.msra.mxu0 0.0
    %2255 = vmatpush.msra.mxu0 0.0
    %2256 = vmatpush.msra.mxu0 0.0
    %2257 = vmatpush.msra.mxu0 0.0
    %2258 = vmatpush.msra.mxu0 0.0
    %2259 = vmatpush.msra.mxu0 0.0
    %2260 = vmatpush.msra.mxu0 %v2187
    %2261 = vmatpush.msra.mxu0 %v2183
    %2262 = vmatpush.msra.mxu0 %v2179
    %2263 = vmatpush.msra.mxu0 %v2175
    %2264 = vmatmul.f32.gmra.mxu0 %v267
    %v2265 = vpop.f32.mrf.mxu0
    %v2266 = vadd.f32 0.0, %v2265
    %2267 = vdwg.mxu0
    %v2269 = vsel %vm122, %v2155, 0
    %2271 = vmatpush.msra.mxu0 0.0
    %2272 = vmatpush.msra.mxu0 0.0
    %2273 = vmatpush.msra.mxu0 0.0
    %2274 = vmatpush.msra.mxu0 0.0
    %2275 = vmatpush.msra.mxu0 0.0
    %2276 = vmatpush.msra.mxu0 0.0
    %2277 = vmatpush.msra.mxu0 0.0
    %2278 = vmatpush.msra.mxu0 0.0
    %2279 = vmatpush.msra.mxu0 0.0
    %2280 = vmatpush.msra.mxu0 0.0
    %2281 = vmatpush.msra.mxu0 0.0
    %2282 = vmatpush.msra.mxu0 0.0
    %2283 = vmatpush.msra.mxu0 %v2168
    %2284 = vmatpush.msra.mxu0 %v2164
    %2285 = vmatpush.msra.mxu0 %v2160
    %2286 = vmatpush.msra.mxu0 %v2156
    %2287 = vmatmul.f32.gmra.mxu0 %v2269
    %v2288 = vpop.f32.mrf.mxu0
    %v2289 = vadd.f32 %v2206, %v2288
    %2290 = vdwg.mxu0
    %2291 = vmatpush.msra.mxu0 0.0
    %2292 = vmatpush.msra.mxu0 0.0
    %2293 = vmatpush.msra.mxu0 0.0
    %2294 = vmatpush.msra.mxu0 0.0
    %2295 = vmatpush.msra.mxu0 0.0
    %2296 = vmatpush.msra.mxu0 0.0
    %2297 = vmatpush.msra.mxu0 0.0
    %2298 = vmatpush.msra.mxu0 0.0
    %2299 = vmatpush.msra.mxu0 0.0
    %2300 = vmatpush.msra.mxu0 0.0
    %2301 = vmatpush.msra.mxu0 0.0
    %2302 = vmatpush.msra.mxu0 0.0
    %2303 = vmatpush.msra.mxu0 %v2169
    %2304 = vmatpush.msra.mxu0 %v2165
    %2305 = vmatpush.msra.mxu0 %v2161
    %2306 = vmatpush.msra.mxu0 %v2157
    %2307 = vmatmul.f32.gmra.mxu0 %v2269
    %v2308 = vpop.f32.mrf.mxu0
    %v2309 = vadd.f32 %v2226, %v2308
    %2310 = vdwg.mxu0
    %2311 = vmatpush.msra.mxu0 0.0
    %2312 = vmatpush.msra.mxu0 0.0
    %2313 = vmatpush.msra.mxu0 0.0
    %2314 = vmatpush.msra.mxu0 0.0
    %2315 = vmatpush.msra.mxu0 0.0
    %2316 = vmatpush.msra.mxu0 0.0
    %2317 = vmatpush.msra.mxu0 0.0
    %2318 = vmatpush.msra.mxu0 0.0
    %2319 = vmatpush.msra.mxu0 0.0
    %2320 = vmatpush.msra.mxu0 0.0
    %2321 = vmatpush.msra.mxu0 0.0
    %2322 = vmatpush.msra.mxu0 0.0
    %2323 = vmatpush.msra.mxu0 %v2170
    %2324 = vmatpush.msra.mxu0 %v2166
    %2325 = vmatpush.msra.mxu0 %v2162
    %2326 = vmatpush.msra.mxu0 %v2158
    %2327 = vmatmul.f32.gmra.mxu0 %v2269
    %v2328 = vpop.f32.mrf.mxu0
    %v2329 = vadd.f32 %v2246, %v2328
    %2330 = vdwg.mxu0
    %2331 = vmatpush.msra.mxu0 0.0
    %2332 = vmatpush.msra.mxu0 0.0
    %2333 = vmatpush.msra.mxu0 0.0
    %2334 = vmatpush.msra.mxu0 0.0
    %2335 = vmatpush.msra.mxu0 0.0
    %2336 = vmatpush.msra.mxu0 0.0
    %2337 = vmatpush.msra.mxu0 0.0
    %2338 = vmatpush.msra.mxu0 0.0
    %2339 = vmatpush.msra.mxu0 0.0
    %2340 = vmatpush.msra.mxu0 0.0
    %2341 = vmatpush.msra.mxu0 0.0
    %2342 = vmatpush.msra.mxu0 0.0
    %2343 = vmatpush.msra.mxu0 %v2171
    %2344 = vmatpush.msra.mxu0 %v2167
    %2345 = vmatpush.msra.mxu0 %v2163
    %2346 = vmatpush.msra.mxu0 %v2159
    %2347 = vmatmul.f32.gmra.mxu0 %v2269
    %v2348 = vpop.f32.mrf.mxu0
    %v2349 = vadd.f32 %v2266, %v2348
    %2350 = vdwg.mxu0
    %s2351 = scalar_lea.vmem [#allocation8], 544
    %v2352 = vld [vmem:[%s2351] ss:$8 sm:$0xf]
    %v2354 = vperm.slane %v2352, 0
    %v2355 = vperm.slane %v2352, 1
    %v2356 = vperm.slane %v2352, 2
    %v2357 = vperm.slane %v2352, 3
    %v2362 = vadd.f32 %v2289, %v2354
    %v2363 = vadd.f32 %v2309, %v2355
    %v2364 = vadd.f32 %v2329, %v2356
    %v2365 = vadd.f32 %v2349, %v2357
    %v2366 = vmax.f32 %v2362, 0.0
    %v2367 = vmax.f32 %v2363, 0.0
    %v2368 = vmax.f32 %v2364, 0.0
    %v2369 = vmax.f32 %v2365, 0.0
    %v2370 = vld [vmem:[#allocation7 + $0x860] sm:$0xff]
    %v2371 = vld [vmem:[#allocation7 + $0x868] sm:$0xff]
    %v2372 = vld [vmem:[#allocation7 + $0x870] sm:$0xff]
    %v2373 = vld [vmem:[#allocation7 + $0x878] sm:$0xff]
    %v2374 = vld [vmem:[#allocation7 + $0x880] sm:$0xff]
    %v2375 = vld [vmem:[#allocation7 + $0x888] sm:$0xff]
    %v2376 = vld [vmem:[#allocation7 + $0x890] sm:$0xff]
    %v2377 = vld [vmem:[#allocation7 + $0x898] sm:$0xff]
    %v2378 = vld [vmem:[#allocation7 + $0x8a0] sm:$0xff]
    %v2379 = vld [vmem:[#allocation7 + $0x8a8] sm:$0xff]
    %v2380 = vld [vmem:[#allocation7 + $0x8b0] sm:$0xff]
    %v2381 = vld [vmem:[#allocation7 + $0x8b8] sm:$0xff]
    %v2382 = vld [vmem:[#allocation7 + $0x8c0] sm:$0xff]
    %v2383 = vld [vmem:[#allocation7 + $0x8c8] sm:$0xff]
    %v2384 = vld [vmem:[#allocation7 + $0x8d0] sm:$0xff]
    %v2385 = vld [vmem:[#allocation7 + $0x8d8] sm:$0xff]
    %v2386 = vld [vmem:[#allocation7 + $0x8e0] sm:$0xff]
    %v2387 = vld [vmem:[#allocation7 + $0x8e8] sm:$0xff]
    %v2388 = vld [vmem:[#allocation7 + $0x8f0] sm:$0xff]
    %v2389 = vld [vmem:[#allocation7 + $0x8f8] sm:$0xff]
    %v2390 = vld [vmem:[#allocation7 + $0x900] sm:$0xff]
    %v2391 = vld [vmem:[#allocation7 + $0x908] sm:$0xff]
    %v2392 = vld [vmem:[#allocation7 + $0x910] sm:$0xff]
    %v2393 = vld [vmem:[#allocation7 + $0x918] sm:$0xff]
    %v2394 = vld [vmem:[#allocation7 + $0x920] sm:$0xff]
    %v2395 = vld [vmem:[#allocation7 + $0x928] sm:$0xff]
    %v2396 = vld [vmem:[#allocation7 + $0x930] sm:$0xff]
    %v2397 = vld [vmem:[#allocation7 + $0x938] sm:$0xff]
    %v2398 = vld [vmem:[#allocation7 + $0x940] sm:$0xff]
    %v2399 = vld [vmem:[#allocation7 + $0x948] sm:$0xff]
    %v2400 = vld [vmem:[#allocation7 + $0x950] sm:$0xff]
    %v2401 = vld [vmem:[#allocation7 + $0x958] sm:$0xff]
    %v2402 = vld [vmem:[#allocation7 + $0x960] sm:$0xff]
    %v2403 = vld [vmem:[#allocation7 + $0x968] sm:$0xff]
    %v2404 = vld [vmem:[#allocation7 + $0x970] sm:$0xff]
    %v2405 = vld [vmem:[#allocation7 + $0x978] sm:$0xff]
    %v2406 = vld [vmem:[#allocation7 + $0x980] sm:$0xff]
    %v2407 = vld [vmem:[#allocation7 + $0x988] sm:$0xff]
    %v2408 = vld [vmem:[#allocation7 + $0x990] sm:$0xff]
    %v2409 = vld [vmem:[#allocation7 + $0x998] sm:$0xff]
    %v2410 = vld [vmem:[#allocation7 + $0x9a0] sm:$0xff]
    %v2411 = vld [vmem:[#allocation7 + $0x9a8] sm:$0xff]
    %v2412 = vld [vmem:[#allocation7 + $0x9b0] sm:$0xff]
    %v2413 = vld [vmem:[#allocation7 + $0x9b8] sm:$0xff]
    %v2414 = vld [vmem:[#allocation7 + $0x9c0] sm:$0xff]
    %v2415 = vld [vmem:[#allocation7 + $0x9c8] sm:$0xff]
    %v2416 = vld [vmem:[#allocation7 + $0x9d0] sm:$0xff]
    %v2417 = vld [vmem:[#allocation7 + $0x9d8] sm:$0xff]
    %v2418 = vld [vmem:[#allocation7 + $0x9e0] sm:$0xff]
    %v2419 = vld [vmem:[#allocation7 + $0x9e8] sm:$0xff]
    %v2420 = vld [vmem:[#allocation7 + $0x9f0] sm:$0xff]
    %v2421 = vld [vmem:[#allocation7 + $0x9f8] sm:$0xff]
    %v2422 = vld [vmem:[#allocation7 + $0xa00] sm:$0xff]
    %v2423 = vld [vmem:[#allocation7 + $0xa08] sm:$0xff]
    %v2424 = vld [vmem:[#allocation7 + $0xa10] sm:$0xff]
    %v2425 = vld [vmem:[#allocation7 + $0xa18] sm:$0xff]
    %v2426 = vld [vmem:[#allocation7 + $0xa20] sm:$0xff]
    %v2427 = vld [vmem:[#allocation7 + $0xa28] sm:$0xff]
    %v2428 = vld [vmem:[#allocation7 + $0xa30] sm:$0xff]
    %v2429 = vld [vmem:[#allocation7 + $0xa38] sm:$0xff]
    %v2430 = vld [vmem:[#allocation7 + $0xa40] sm:$0xff]
    %v2431 = vld [vmem:[#allocation7 + $0xa48] sm:$0xff]
    %v2432 = vld [vmem:[#allocation7 + $0xa50] sm:$0xf]
    %v2433 = vld [vmem:[#allocation7 + $0x850] sm:$0x1]
    %v2434 = vperm.slane %v2433, 0
    %v2436 = vsel %vm643, %v2369, 0
    %v2439 = vsel %vm647, %v2432, 0
    %2441 = vmatpush.msra.mxu0 %v2385
    %2442 = vmatpush.msra.mxu0 %v2384
    %2443 = vmatpush.msra.mxu0 %v2383
    %2444 = vmatpush.msra.mxu0 %v2382
    %2445 = vmatpush.msra.mxu0 %v2381
    %2446 = vmatpush.msra.mxu0 %v2380
    %2447 = vmatpush.msra.mxu0 %v2379
    %2448 = vmatpush.msra.mxu0 %v2378
    %2449 = vmatpush.msra.mxu0 %v2377
    %2450 = vmatpush.msra.mxu0 %v2376
    %2451 = vmatpush.msra.mxu0 %v2375
    %2452 = vmatpush.msra.mxu0 %v2374
    %2453 = vmatpush.msra.mxu0 %v2373
    %2454 = vmatpush.msra.mxu0 %v2372
    %2455 = vmatpush.msra.mxu0 %v2371
    %2456 = vmatpush.msra.mxu0 %v2370
    %2457 = vmatmul.f32.gmra.mxu0 %v2366
    %v2458 = vpop.f32.mrf.mxu0
    %v2459 = vadd.f32 %v2434, %v2458
    %2460 = vdwg.mxu0
    %2461 = vmatpush.msra.mxu0 %v2401
    %2462 = vmatpush.msra.mxu0 %v2400
    %2463 = vmatpush.msra.mxu0 %v2399
    %2464 = vmatpush.msra.mxu0 %v2398
    %2465 = vmatpush.msra.mxu0 %v2397
    %2466 = vmatpush.msra.mxu0 %v2396
    %2467 = vmatpush.msra.mxu0 %v2395
    %2468 = vmatpush.msra.mxu0 %v2394
    %2469 = vmatpush.msra.mxu0 %v2393
    %2470 = vmatpush.msra.mxu0 %v2392
    %2471 = vmatpush.msra.mxu0 %v2391
    %2472 = vmatpush.msra.mxu0 %v2390
    %2473 = vmatpush.msra.mxu0 %v2389
    %2474 = vmatpush.msra.mxu0 %v2388
    %2475 = vmatpush.msra.mxu0 %v2387
    %2476 = vmatpush.msra.mxu0 %v2386
    %2477 = vmatmul.f32.gmra.mxu0 %v2367
    %v2478 = vpop.f32.mrf.mxu0
    %v2479 = vadd.f32 %v2459, %v2478
    %2480 = vdwg.mxu0
    %2481 = vmatpush.msra.mxu0 %v2417
    %2482 = vmatpush.msra.mxu0 %v2416
    %2483 = vmatpush.msra.mxu0 %v2415
    %2484 = vmatpush.msra.mxu0 %v2414
    %2485 = vmatpush.msra.mxu0 %v2413
    %2486 = vmatpush.msra.mxu0 %v2412
    %2487 = vmatpush.msra.mxu0 %v2411
    %2488 = vmatpush.msra.mxu0 %v2410
    %2489 = vmatpush.msra.mxu0 %v2409
    %2490 = vmatpush.msra.mxu0 %v2408
    %2491 = vmatpush.msra.mxu0 %v2407
    %2492 = vmatpush.msra.mxu0 %v2406
    %2493 = vmatpush.msra.mxu0 %v2405
    %2494 = vmatpush.msra.mxu0 %v2404
    %2495 = vmatpush.msra.mxu0 %v2403
    %2496 = vmatpush.msra.mxu0 %v2402
    %2497 = vmatmul.f32.gmra.mxu0 %v2368
    %v2498 = vpop.f32.mrf.mxu0
    %v2499 = vadd.f32 %v2479, %v2498
    %2500 = vdwg.mxu0
    %2501 = vmatpush.msra.mxu0 0.0
    %2502 = vmatpush.msra.mxu0 %v2439
    %2503 = vmatpush.msra.mxu0 %v2431
    %2504 = vmatpush.msra.mxu0 %v2430
    %2505 = vmatpush.msra.mxu0 %v2429
    %2506 = vmatpush.msra.mxu0 %v2428
    %2507 = vmatpush.msra.mxu0 %v2427
    %2508 = vmatpush.msra.mxu0 %v2426
    %2509 = vmatpush.msra.mxu0 %v2425
    %2510 = vmatpush.msra.mxu0 %v2424
    %2511 = vmatpush.msra.mxu0 %v2423
    %2512 = vmatpush.msra.mxu0 %v2422
    %2513 = vmatpush.msra.mxu0 %v2421
    %2514 = vmatpush.msra.mxu0 %v2420
    %2515 = vmatpush.msra.mxu0 %v2419
    %2516 = vmatpush.msra.mxu0 %v2418
    %2517 = vmatmul.f32.gmra.mxu0 %v2436
    %v2518 = vpop.f32.mrf.mxu0
    %v2519 = vadd.f32 %v2499, %v2518
    %2520 = vdwg.mxu0
    %v2521 = vmax.f32 %v2519, 0.0
    %v2522 = vld [vmem:[#allocation7 + $0xa58] sm:$0xff]
    %v2523 = vld [vmem:[#allocation7 + $0xa60] sm:$0xff]
    %v2524 = vld [vmem:[#allocation7 + $0xa68] sm:$0xff]
    %v2525 = vld [vmem:[#allocation7 + $0xa70] sm:$0xff]
    %v2526 = vld [vmem:[#allocation7 + $0xa78] sm:$0xff]
    %v2527 = vld [vmem:[#allocation7 + $0xa80] sm:$0xff]
    %v2528 = vld [vmem:[#allocation7 + $0xa88] sm:$0xff]
    %v2529 = vld [vmem:[#allocation7 + $0xa90] sm:$0xff]
    %v2530 = vld [vmem:[#allocation7 + $0xa98] sm:$0xff]
    %v2531 = vld [vmem:[#allocation7 + $0xaa0] sm:$0xff]
    %v2532 = vld [vmem:[#allocation7 + $0xaa8] sm:$0xff]
    %v2533 = vld [vmem:[#allocation7 + $0xab0] sm:$0xff]
    %v2534 = vld [vmem:[#allocation7 + $0xab8] sm:$0xf]
    %v2535 = vld [vmem:[#allocation7 + $0x858] sm:$0x1]
    %v2536 = vperm.slane %v2535, 0
    %v2538 = vsel %vm747, %v2521, 0
    %v2541 = vsel %vm647, %v2534, 0
    %2543 = vmatpush.msra.mxu0 0.0
    %2544 = vmatpush.msra.mxu0 0.0
    %2545 = vmatpush.msra.mxu0 0.0
    %2546 = vmatpush.msra.mxu0 %v2541
    %2547 = vmatpush.msra.mxu0 %v2533
    %2548 = vmatpush.msra.mxu0 %v2532
    %2549 = vmatpush.msra.mxu0 %v2531
    %2550 = vmatpush.msra.mxu0 %v2530
    %2551 = vmatpush.msra.mxu0 %v2529
    %2552 = vmatpush.msra.mxu0 %v2528
    %2553 = vmatpush.msra.mxu0 %v2527
    %2554 = vmatpush.msra.mxu0 %v2526
    %2555 = vmatpush.msra.mxu0 %v2525
    %2556 = vmatpush.msra.mxu0 %v2524
    %2557 = vmatpush.msra.mxu0 %v2523
    %2558 = vmatpush.msra.mxu0 %v2522
    %2559 = vmatmul.f32.gmra.mxu0 %v2538
    %v2560 = vpop.f32.mrf.mxu0
    %v2561 = vadd.f32 %v2536, %v2560
    %2562 = vdwg.mxu0
    %v2563 = vxor.u32 %v2561, 2147483648
    %v2564 = vmul.f32 %v2563, 1.442695
    %v2565 = vpow.pop %v2564
    %v2566 = vadd.f32 %v2565, 1.0
    %v2567 = vrcp.pop %v2566
    %v2568 = vmul.f32 %v2566, %v2567
    %v2569 = vsub.f32 1.0, %v2568
    %v2570 = vmul.f32 %v2567, %v2569
    %v2571 = vadd.f32 %v2567, %v2570
    %vm2572 = vweird.f32 %v2566
    %vm2573 = vweird.f32 %v2567
    %vm2574 = vmor %vm2572, %vm2573
    %v2575 = vsel %vm2574, %v2567, %v2571
    %v2576 = vand.u32 2147483647, %v2566
    %vm2577 = vcmp.eq.f32.partialorder %v2576, 8.507059e+37
    %v2578 = vand.u32 %v2566, 2147483648
    %v2579 = vor.u32 1.1754944e-38, %v2578
    %v2580 = vsel %vm2577, %v2579, %v2575
    %v2581 = vmul.f32 1.0, %v2580
    %2583 = vrot.lane.b32.xlu0 %v2581, 127
    %v2584 = vpop.permute.xlu0 %2583
    %v2586 = vsub.f32 %v2581, %v2584
    %v2587 = vmul.f32 %v2586, 0.1
    %v2588 = vxor.u32 %v2587, 2147483648
    %v2589 = vmul.f32 %v2588, 1.442695
    %v2590 = vpow.pop %v2589
    %v2591 = vadd.f32 %v2590, 1.0
    %v2592 = vrcp.pop %v2591
    %v2593 = vmul.f32 %v2591, %v2592
    %v2594 = vsub.f32 1.0, %v2593
    %v2595 = vmul.f32 %v2592, %v2594
    %v2596 = vadd.f32 %v2592, %v2595
    %vm2597 = vweird.f32 %v2591
    %vm2598 = vweird.f32 %v2592
    %vm2599 = vmor %vm2597, %vm2598
    %v2600 = vsel %vm2599, %v2592, %v2596
    %v2601 = vand.u32 2147483647, %v2591
    %vm2602 = vcmp.eq.f32.partialorder %v2601, 8.507059e+37
    %v2603 = vand.u32 %v2591, 2147483648
    %v2604 = vor.u32 1.1754944e-38, %v2603
    %v2605 = vsel %vm2602, %v2604, %v2600
    %v2606 = vmul.f32 1.0, %v2605
    %v2607 = vsel %vm818, %v2606, 0.0
    %v2608 = vrot.slane %v2607, 4
    %v2609 = vadd.f32 %v2607, %v2608
    %v2610 = vrot.slane %v2609, 2
    %v2611 = vadd.f32 %v2609, %v2610
    %v2612 = vrot.slane %v2611, 1
    %v2613 = vadd.f32 %v2611, %v2612
    %v2614 = vmul.f32 %v2613, %v832
    %2616 = vset.pattern.permute.xlu0 0
    %2617 = vperm.xlu0 %2616, %v2614
    %v2618 = vpop.permute.xlu0 %2617
    %v2620 = vmul.f32 %v2618, %v2155
    %v2621 = vsub.f32 1.0, %v2614
    %2623 = vset.pattern.permute.xlu0 0
    %2624 = vperm.xlu0 %2623, %v2621
    %v2625 = vpop.permute.xlu0 %2624
    %v2627 = vmul.f32 %v2625, %v259
    %v2628 = vadd.f32 %v2620, %v2627
    %v2629 = vld [vmem:[#allocation7 + $0xb10] sm:$0xff]
    %v2630 = vld [vmem:[#allocation7 + $0xb18] sm:$0xff]
    %v2631 = vld [vmem:[#allocation7 + $0xb20] sm:$0xff]
    %v2632 = vld [vmem:[#allocation7 + $0xb28] sm:$0xff]
    %v2634 = vsel %vm122, %v2628, 0
    %2636 = vmatpush.msra.mxu0 0.0
    %2637 = vmatpush.msra.mxu0 0.0
    %2638 = vmatpush.msra.mxu0 0.0
    %2639 = vmatpush.msra.mxu0 0.0
    %2640 = vmatpush.msra.mxu0 0.0
    %2641 = vmatpush.msra.mxu0 0.0
    %2642 = vmatpush.msra.mxu0 0.0
    %2643 = vmatpush.msra.mxu0 0.0
    %2644 = vmatpush.msra.mxu0 0.0
    %2645 = vmatpush.msra.mxu0 0.0
    %2646 = vmatpush.msra.mxu0 0.0
    %2647 = vmatpush.msra.mxu0 0.0
    %2648 = vmatpush.msra.mxu0 %v2632
    %2649 = vmatpush.msra.mxu0 %v2631
    %2650 = vmatpush.msra.mxu0 %v2630
    %2651 = vmatpush.msra.mxu0 %v2629
    %2652 = vmatmul.f32.gmra.mxu0 %v2634
    %v2653 = vpop.f32.mrf.mxu0
    %v2654 = vadd.f32 0.0, %v2653
    %2655 = vdwg.mxu0
    %2656 = vmatpush.msra.mxu0 0.0
    %2657 = vmatpush.msra.mxu0 0.0
    %2658 = vmatpush.msra.mxu0 0.0
    %2659 = vmatpush.msra.mxu0 0.0
    %2660 = vmatpush.msra.mxu0 0.0
    %2661 = vmatpush.msra.mxu0 0.0
    %2662 = vmatpush.msra.mxu0 0.0
    %2663 = vmatpush.msra.mxu0 0.0
    %2664 = vmatpush.msra.mxu0 0.0
    %2665 = vmatpush.msra.mxu0 0.0
    %2666 = vmatpush.msra.mxu0 0.0
    %2667 = vmatpush.msra.mxu0 0.0
    %2668 = vmatpush.msra.mxu0 0.0
    %2669 = vmatpush.msra.mxu0 0.0
    %2670 = vmatpush.msra.mxu0 0.0
    %2671 = vmatpush.msra.mxu0 %v2654
    %2672 = vmatmul.f32.gmra.mxu0 %v1558
    %v2673 = vpop.f32.mrf.mxu0
    %v2674 = vadd.f32 0.0, %v2673
    %2675 = vdwg.mxu0
    %v2676 = vmax.f32 %v2674, 0.0
    %v2678 = vsel %vm91, %v2676, 0
    %2680 = vmatpush.xpose.msra.mxu0 0.0
    %2681 = vmatpush.xpose.msra.mxu0 0.0
    %2682 = vmatpush.xpose.msra.mxu0 0.0
    %2683 = vmatpush.xpose.msra.mxu0 0.0
    %2684 = vmatpush.xpose.msra.mxu0 0.0
    %2685 = vmatpush.xpose.msra.mxu0 0.0
    %2686 = vmatpush.xpose.msra.mxu0 0.0
    %2687 = vmatpush.xpose.msra.mxu0 0.0
    %2688 = vmatpush.xpose.msra.mxu0 0.0
    %2689 = vmatpush.xpose.msra.mxu0 0.0
    %2690 = vmatpush.xpose.msra.mxu0 0.0
    %2691 = vmatpush.xpose.msra.mxu0 0.0
    %2692 = vmatpush.xpose.msra.mxu0 0.0
    %2693 = vmatpush.xpose.msra.mxu0 0.0
    %2694 = vmatpush.xpose.msra.mxu0 0.0
    %2695 = vmatpush.xpose.msra.mxu0 %v2678
    %2696 = vmatmul.f32.gmra.mxu0 %v2678
    %v2697 = vpop.f32.mrf.mxu0
    %v2698 = vadd.f32 0.0, %v2697
    %2699 = vdwg.mxu0
    %v2700 = vxor.u32 %v2698, 2147483648
    %v2701 = vmul.f32 %v2700, 1.442695
    %v2702 = vpow.pop %v2701
    %v2703 = vadd.f32 %v2702, 1.0
    %v2704 = vrcp.pop %v2703
    %v2705 = vmul.f32 %v2703, %v2704
    %v2706 = vsub.f32 1.0, %v2705
    %v2707 = vmul.f32 %v2704, %v2706
    %v2708 = vadd.f32 %v2704, %v2707
    %vm2709 = vweird.f32 %v2703
    %vm2710 = vweird.f32 %v2704
    %vm2711 = vmor %vm2709, %vm2710
    %v2712 = vsel %vm2711, %v2704, %v2708
    %v2713 = vand.u32 2147483647, %v2703
    %vm2714 = vcmp.eq.f32.partialorder %v2713, 8.507059e+37
    %v2715 = vand.u32 %v2703, 2147483648
    %v2716 = vor.u32 1.1754944e-38, %v2715
    %v2717 = vsel %vm2714, %v2716, %v2712
    %v2718 = vmul.f32 1.0, %v2717
    %v2719 = vadd.f32 %v2718, 1.0
    %v2720 = vsel %vm86, %v2719, %v2718
    %v2721 = vsel %vm207, %v2718, 0.0
    %2722 = vadd.xlane.f32.xlu0 %v2721
    %v2723 = vpop.xlane.xlu0 %2722
    %v2724 = vadd.f32 %v2723, 1.0
    %v2725 = vrsqrt.pop %v2724
    %v2726 = vmul.f32 %v2725, %v2724
    %v2727 = vmul.f32 %v2726, %v2725
    %v2728 = vmul.f32 0.5, %v2727
    %v2729 = vsub.f32 1.5, %v2728
    %v2730 = vmul.f32 %v2725, %v2729
    %vm2731 = vweird.f32 %v2724
    %vm2732 = vweird.f32 %v2725
    %vm2733 = vmor %vm2731, %vm2732
    %v2734 = vsel %vm2733, %v2725, %v2730
    %v2735 = vmul.f32 %v2734, %v2720
    %2736 = vxpose.xlu0.b32.start [1/16] %v2734, 128
    %2737 = vxpose.xlu0.b32.cont [2/16] 0.0, 128
    %2738 = vxpose.xlu0.b32.cont [3/16] 0.0, 128
    %2739 = vxpose.xlu0.b32.cont [4/16] 0.0, 128
    %2740 = vxpose.xlu0.b32.cont [5/16] 0.0, 128
    %2741 = vxpose.xlu0.b32.cont [6/16] 0.0, 128
    %2742 = vxpose.xlu0.b32.cont [7/16] 0.0, 128
    %2743 = vxpose.xlu0.b32.cont [8/16] 0.0, 128
    %2744 = vxpose.xlu0.b32.cont [9/16] 0.0, 128
    %2745 = vxpose.xlu0.b32.cont [10/16] 0.0, 128
    %2746 = vxpose.xlu0.b32.cont [11/16] 0.0, 128
    %2747 = vxpose.xlu0.b32.cont [12/16] 0.0, 128
    %2748 = vxpose.xlu0.b32.cont [13/16] 0.0, 128
    %2749 = vxpose.xlu0.b32.cont [14/16] 0.0, 128
    %2750 = vxpose.xlu0.b32.cont [15/16] 0.0, 128
    %2751 = vxpose.xlu0.b32.end [16/16] 0.0, 128
    %v2752 = vpop.trf.xlu0
    %v2753 = vpop.trf.xlu0
    %v2754 = vpop.trf.xlu0
    %v2755 = vpop.trf.xlu0
    %v2756 = vpop.trf.xlu0
    %v2757 = vpop.trf.xlu0
    %v2758 = vpop.trf.xlu0
    %v2759 = vpop.trf.xlu0
    %v2760 = vpop.trf.xlu0
    %v2761 = vpop.trf.xlu0
    %v2762 = vpop.trf.xlu0
    %v2763 = vpop.trf.xlu0
    %v2764 = vpop.trf.xlu0
    %v2765 = vpop.trf.xlu0
    %v2766 = vpop.trf.xlu0
    %v2767 = vpop.trf.xlu0
    %v2768 = vperm.slane %v2752, 0
    %v2769 = vmul.f32 %v2735, %v2768
    %v2770 = vld [vmem:[#allocation7 + $0xf8] sm:$0xf]
    %v2771 = vmul.f32 %v202, %v202
    %v2772 = vsel %vm207, %v2771, 0.0
    %2773 = vadd.xlane.f32.xlu0 %v2772
    %v2774 = vpop.xlane.xlu0 %2773
    %v2775 = vmul.f32 %v2770, %v2770
    %vm2776 = vcmask 60416
    %v2777 = vsel %vm2776, %v2775, 0.0
    %2778 = vadd.xlane.f32.xlu0 %v2777
    %v2779 = vpop.xlane.xlu0 %2778
    %2780 = vxpose.xlu0.b32.start [1/16] %v2779, 128
    %2781 = vxpose.xlu0.b32.cont [2/16] 0.0, 128
    %2782 = vxpose.xlu0.b32.cont [3/16] 0.0, 128
    %2783 = vxpose.xlu0.b32.cont [4/16] 0.0, 128
    %2784 = vxpose.xlu0.b32.cont [5/16] 0.0, 128
    %2785 = vxpose.xlu0.b32.cont [6/16] 0.0, 128
    %2786 = vxpose.xlu0.b32.cont [7/16] 0.0, 128
    %2787 = vxpose.xlu0.b32.cont [8/16] 0.0, 128
    %2788 = vxpose.xlu0.b32.cont [9/16] 0.0, 128
    %2789 = vxpose.xlu0.b32.cont [10/16] 0.0, 128
    %2790 = vxpose.xlu0.b32.cont [11/16] 0.0, 128
    %2791 = vxpose.xlu0.b32.cont [12/16] 0.0, 128
    %2792 = vxpose.xlu0.b32.cont [13/16] 0.0, 128
    %2793 = vxpose.xlu0.b32.cont [14/16] 0.0, 128
    %2794 = vxpose.xlu0.b32.cont [15/16] 0.0, 128
    %2795 = vxpose.xlu0.b32.end [16/16] 0.0, 128
    %v2796 = vpop.trf.xlu0
    %v2797 = vpop.trf.xlu0
    %v2798 = vpop.trf.xlu0
    %v2799 = vpop.trf.xlu0
    %v2800 = vpop.trf.xlu0
    %v2801 = vpop.trf.xlu0
    %v2802 = vpop.trf.xlu0
    %v2803 = vpop.trf.xlu0
    %v2804 = vpop.trf.xlu0
    %v2805 = vpop.trf.xlu0
    %v2806 = vpop.trf.xlu0
    %v2807 = vpop.trf.xlu0
    %v2808 = vpop.trf.xlu0
    %v2809 = vpop.trf.xlu0
    %v2810 = vpop.trf.xlu0
    %v2811 = vpop.trf.xlu0
    %v2812 = vperm.slane %v2796, 0
    %v2813 = vadd.f32 %v2774, %v2812
    %v2815 = vsel %vm207, %v2770, 0
    %2817 = vmatpush.xpose.msra.mxu0 0.0
    %2818 = vmatpush.xpose.msra.mxu0 0.0
    %2819 = vmatpush.xpose.msra.mxu0 0.0
    %2820 = vmatpush.xpose.msra.mxu0 0.0
    %2821 = vmatpush.xpose.msra.mxu0 0.0
    %2822 = vmatpush.xpose.msra.mxu0 0.0
    %2823 = vmatpush.xpose.msra.mxu0 0.0
    %2824 = vmatpush.xpose.msra.mxu0 0.0
    %2825 = vmatpush.xpose.msra.mxu0 0.0
    %2826 = vmatpush.xpose.msra.mxu0 0.0
    %2827 = vmatpush.xpose.msra.mxu0 0.0
    %2828 = vmatpush.xpose.msra.mxu0 0.0
    %2829 = vmatpush.xpose.msra.mxu0 0.0
    %2830 = vmatpush.xpose.msra.mxu0 0.0
    %2831 = vmatpush.xpose.msra.mxu0 0.0
    %2832 = vmatpush.xpose.msra.mxu0 %v2815
    %2833 = vmatmul.f32.gmra.mxu0 %v209
    %v2834 = vpop.f32.mrf.mxu0
    %v2835 = vadd.f32 0.0, %v2834
    %2836 = vdwg.mxu0
    %v2837 = vmul.f32 %v2835, 2.0
    %v2838 = vsub.f32 %v2813, %v2837
    %v2839 = vmax.f32 %v2838, 0.0
    %v2840 = vadd.f32 %v2839, 1.0
    %v2841 = vrcp.pop %v2840
    %v2842 = vmul.f32 %v2840, %v2841
    %v2843 = vsub.f32 1.0, %v2842
    %v2844 = vmul.f32 %v2841, %v2843
    %v2845 = vadd.f32 %v2841, %v2844
    %vm2846 = vweird.f32 %v2840
    %vm2847 = vweird.f32 %v2841
    %vm2848 = vmor %vm2846, %vm2847
    %v2849 = vsel %vm2848, %v2841, %v2845
    %v2850 = vand.u32 2147483647, %v2840
    %vm2851 = vcmp.eq.f32.partialorder %v2850, 8.507059e+37
    %v2852 = vand.u32 %v2840, 2147483648
    %v2853 = vor.u32 1.1754944e-38, %v2852
    %v2854 = vsel %vm2851, %v2853, %v2849
    %v2855 = vmul.f32 1.0, %v2854
    %v2856 = vsel %vm1580, %v2855, 0.0
    %2857 = vadd.xlane.f32.xlu0 %v2856
    %v2858 = vpop.xlane.xlu0 %2857
    %v2859 = vrcp.pop %v2858
    %v2860 = vmul.f32 %v2858, %v2859
    %v2861 = vsub.f32 1.0, %v2860
    %v2862 = vmul.f32 %v2859, %v2861
    %v2863 = vadd.f32 %v2859, %v2862
    %vm2864 = vweird.f32 %v2858
    %vm2865 = vweird.f32 %v2859
    %vm2866 = vmor %vm2864, %vm2865
    %v2867 = vsel %vm2866, %v2859, %v2863
    %v2868 = vand.u32 2147483647, %v2858
    %vm2869 = vcmp.eq.f32.partialorder %v2868, 8.507059e+37
    %v2870 = vand.u32 %v2858, 2147483648
    %v2871 = vor.u32 1.1754944e-38, %v2870
    %v2872 = vsel %vm2869, %v2871, %v2867
    %v2873 = vmul.f32 %v2855, %v2872
    %2875 = vrot.lane.b32.xlu0 %v2873, 16
    %v2876 = vpop.permute.xlu0 %2875
    %2879 = vrot.lane.b32.xlu0 %v1604, 20
    %v2880 = vpop.permute.xlu0 %2879
    %2882 = vrot.lane.b32.xlu0 %v202, 24
    %v2883 = vpop.permute.xlu0 %2882
    %v2885 = vsel %vm91, %v317, %v2876
    %vm2886 = vcmask 162816
    %v2887 = vsel %vm2886, %v2885, %v2880
    %vm2888 = vcmask 195584
    %v2889 = vsel %vm2888, %v2887, %v2883
    %2890 = vst.msk [vmem:[#allocation10] sm:$0xff] %vm122, %v2889
    %2891 = vst.msk [vmem:[#allocation11] sm:$0xff] %vm207, %v2769
    // Predicated region
    $region34: #{tpu_custom_call.1} parent=1 // pred_check
      _
    $region35: #{tpu_custom_call.1} parent=1 // pred_check_branch
      %2893 = sbr.rel (0) target = $region37
    $region36: #{tpu_custom_call.1} parent=1 // pred_region
      %2895 = vsyncadd [#allocation4], 0
      %s2897 = sshll.u32 [#allocation10], 4
      %s2898 = int_to_ptr.vmem [resolvable:$true] %s2897
      %s2899 = sshll.u32 %s4, 4
      %s2900 = int_to_ptr.hbm [resolvable:$true] %s2899
      %2902 = dma.vmem_to_hbm [thread:$0]  %s2898, 128, %s2900, [#allocation4]
    $region37: #{tpu_custom_call.1} parent=1 // pred_fallthru
      _
    // Predicated region
    $region38: #{tpu_custom_call.1} parent=1 // pred_check
      _
    $region39: #{tpu_custom_call.1} parent=1 // pred_check_branch
      %2904 = sbr.rel (0) target = $region41
    $region40: #{tpu_custom_call.1} parent=1 // pred_region
      %2906 = vsyncadd [#allocation12], 0
      %s2908 = sshll.u32 [#allocation11], 4
      %s2909 = int_to_ptr.vmem [resolvable:$true] %s2908
      %s2910 = sshll.u32 %s5, 4
      %s2911 = int_to_ptr.hbm [resolvable:$true] %s2910
      %2913 = dma.vmem_to_hbm [thread:$0]  %s2909, 128, %s2911, [#allocation12]
    $region41: #{tpu_custom_call.1} parent=1 // pred_fallthru
      _
    // Predicated region
    $region42: #{tpu_custom_call.1} parent=1 // pred_check
      _
    $region43: #{tpu_custom_call.1} parent=1 // pred_check_branch
      %2915 = sbr.rel (0) target = $region45
    $region44: #{tpu_custom_call.1} parent=1 // pred_region
      %2917 = dma.done [#allocation4], 128
    $region45: #{tpu_custom_call.1} parent=1 // pred_fallthru
      _
    // Predicated region
    $region46: #{tpu_custom_call.1} parent=1 // pred_check
      _
    $region47: #{tpu_custom_call.1} parent=1 // pred_check_branch
      %2919 = sbr.rel (0) target = $region49
    $region48: #{tpu_custom_call.1} parent=1 // pred_region
      %2921 = dma.done [#allocation12], 128
    $region49: #{tpu_custom_call.1} parent=1 // pred_fallthru
      _
    %2922 = vsyncpa [#allocation3], 1
    %2923 = vsyncpa [#allocation6], 1
    %2924 = vsyncpa [#allocation9], 1
    %2925 = vsyncpa [#allocation4], 1
    %2926 = vsyncpa [#allocation12], 1

</llo_original>
